<compile_context>
chip_gen: v7x
topology: tpu7x:2x2x1
jax: 0.10.0
libtpu: 0.0.40
codegen_flags: <defaults>
</compile_context>

<pallas_src>
import functools

import jax
import jax.numpy as jnp
from jax.experimental import pallas as pl
from jax.experimental.pallas import tpu as pltpu


def _layer_norm(x, gamma, beta, eps=1e-5):
    # x: (R, D) f32, gamma/beta: (1, D) f32
    mean = jnp.mean(x, axis=-1, keepdims=True)
    c = x - mean
    var = jnp.mean(c * c, axis=-1, keepdims=True)
    return c * jax.lax.rsqrt(var + eps) * gamma + beta


def _transformer_kernel(
    x_ref,       # (R, D)  f32 input rows (read only at layer 0)
    ln1_g_ref,   # (1, D)  f32
    ln1_b_ref,   # (1, D)  f32
    w_qkv_ref,   # (D, 3*ID) bf16 (softmax scale pre-folded into the Q columns)
    w_out_ref,   # (ID, D)   bf16
    b_out_ref,   # (1, D)  f32
    ln2_g_ref,   # (1, D)  f32
    ln2_b_ref,   # (1, D)  f32
    w1_ref,      # (D, M)  bf16
    b1_ref,      # (1, M)  f32
    w2_ref,      # (M, D)  bf16
    b2_ref,      # (1, D)  f32
    o_ref,       # (R, D)  f32 output block, VMEM-resident across the depth axis
    ctx_scr,     # (R, ID) bf16 scratch: concatenated per-head attention outputs
    *,
    tokens,
    heads,
    dim_head,
    ew_dtype,    # jnp.bfloat16 on v6e/v7x, jnp.float32 on v5e/older
):
    layer = pl.program_id(1)

    # Seed the resident residual-stream carry from the input at the first layer.
    @pl.when(layer == 0)
    def _():
        o_ref[...] = x_ref[...]

    R = o_ref.shape[0]
    N = tokens
    T = R // N
    H = heads
    dh = dim_head
    ID = H * dh

    x = o_ref[...]                                                      # (R, D) f32

    # ---------------- PreNorm + Attention ----------------
    xn = _layer_norm(x, ln1_g_ref[...], ln1_b_ref[...])                 # (R, D) f32
    qkv = jnp.dot(xn.astype(jnp.bfloat16), w_qkv_ref[...],
                  preferred_element_type=jnp.float32)                   # (R, 3*ID) f32

    # Static unroll over heads; each head's contraction is batched over the T
    # sequences (single-batch-dim einsum -> one MXU op per stage per head).
    for h in range(H):
        qh = qkv[:, h * dh:(h + 1) * dh].reshape(T, N, dh)              # scale already folded
        kh = qkv[:, ID + h * dh: ID + (h + 1) * dh].reshape(T, N, dh)
        vh = qkv[:, 2 * ID + h * dh: 2 * ID + (h + 1) * dh].reshape(T, N, dh)

        dots = jnp.einsum('tqd,tkd->tqk',
                          qh.astype(jnp.bfloat16), kh.astype(jnp.bfloat16),
                          preferred_element_type=jnp.float32)           # (T, N, N) f32
        dots = dots - jnp.max(dots, axis=-1, keepdims=True)
        e = jnp.exp(dots.astype(ew_dtype))                              # EUP (bf16 on v6e/v7x)
        denom = jnp.sum(e.astype(jnp.float32), axis=-1, keepdims=True)  # f32 softmax sum
        # approx reciprocal: ~1e-3 rel error, fine for inference tolerances.
        p = (e * pl.reciprocal(denom, approx=True).astype(ew_dtype)
             ).astype(jnp.bfloat16)

        ctx = jnp.einsum('tqk,tkd->tqd',
                         p, vh.astype(jnp.bfloat16),
                         preferred_element_type=jnp.float32)            # (T, N, dh) f32
        ctx_scr[:, h * dh:(h + 1) * dh] = ctx.reshape(R, dh).astype(jnp.bfloat16)

    attn_out = jnp.dot(ctx_scr[...], w_out_ref[...],
                       preferred_element_type=jnp.float32) + b_out_ref[...]
    x1 = x + attn_out                                                   # residual (f32)

    # ---------------- PreNorm + FeedForward (SiLU) ----------------
    xn2 = _layer_norm(x1, ln2_g_ref[...], ln2_b_ref[...])
    h1 = (jnp.dot(xn2.astype(jnp.bfloat16), w1_ref[...],
                  preferred_element_type=jnp.float32) + b1_ref[...]).astype(ew_dtype)
    h1 = h1 * jax.nn.sigmoid(h1)                                        # SiLU (bf16 on v6e/v7x)
    ff = jnp.dot(h1.astype(jnp.bfloat16), w2_ref[...],
                 preferred_element_type=jnp.float32) + b2_ref[...]

    o_ref[...] = (x1 + ff).astype(o_ref.dtype)                          # residual, carry


def _device_kind():
    try:
        return jax.devices()[0].device_kind.lower()
    except Exception:
        return ""


def _physical_vmem_bytes(kind):
    try:
        cap = int(getattr(pltpu.get_tpu_info(), "vmem_capacity_bytes"))
        if cap > 0:
            return cap
    except Exception:
        pass
    return (64 if "v7" in kind else 128) * 1024 * 1024


def transformer_forward(x, params, *, heads, dim_head, seq_block=None):
    """x: (B, P, N, D) f32.  params: depth-stacked weights (PyTorch-equivalent layout)."""
    B, P, N, D = x.shape
    BP = B * P
    rows = BP * N
    depth = params["w_qkv"].shape[0]
    ID = heads * dim_head
    M = params["w1"].shape[-1]

    kind = _device_kind()
    # bf16 VPU/EUP exists on v6e/v7x; keep f32 elementwise on v5e and older chips.
    ew_dtype = jnp.bfloat16 if ("v6" in kind or "v7" in kind) else jnp.float32
    phys_vmem = _physical_vmem_bytes(kind)
    vmem_budget = int(0.75 * phys_vmem)        # lift the old 32 MiB cap, chip-aware

    # One-time weight transform (fold at param-init time in production): fold the
    # 1/sqrt(dh) softmax scale into the Q columns of w_qkv so the kernel never
    # multiplies the (R, ID) activation by the scale.
    w_qkv = params["w_qkv"].at[..., :ID].multiply(dim_head ** -0.5)

    weight_bytes = 2 * (D * 3 * ID + ID * D + D * M + M * D)            # bf16 / layer
    bias_bytes = 4 * (6 * D + M)                                        # f32 / layer

    def vmem_need(R):
        # double-buffered in/out activation blocks + double-buffered layer weights
        # + bf16 ctx scratch + rough live intermediates (qkv, h1, xn/x1) + slack.
        return (2 * (2 * R * D * 4)
                + 2 * (weight_bytes + bias_bytes)
                + R * ID * 2
                + R * (3 * ID * 4 + 4 * M + 8 * D)
                + (4 << 20))

    # Pick sequences-per-block t: largest divisor of BP whose row count R = t*N is
    # sublane aligned, stays under the per-generation row target, and fits VMEM.
    row_target = 512 if "v5" in kind else 2048
    if seq_block is not None:
        t = max(1, min(int(seq_block), BP))
        while BP % t:
            t -= 1
        if (t * N) % 8 and t != BP:
            t = BP
    else:
        cands = [c for c in range(1, BP + 1)
                 if BP % c == 0 and ((c * N) % 8 == 0 or c == BP)]
        if not cands:
            cands = [BP]
        t = cands[0]
        for c in cands:
            if c * N <= row_target and vmem_need(c * N) <= vmem_budget:
                t = c
    R = t * N
    num_row_tiles = BP // t

    x2 = x.reshape(rows, D)        # lane-dense 2-D activation slab

    def wspec(shape):
        # Depth-stacked parameter: leading depth dim selected by the layer grid
        # index and squeezed out of the kernel ref.
        return pl.BlockSpec((None,) + shape,
                            lambda i, l: (l,) + (0,) * len(shape))

    kernel = functools.partial(_transformer_kernel, tokens=N, heads=heads,
                               dim_head=dim_head, ew_dtype=ew_dtype)

    # Advisory cost estimate (weights are re-streamed once per row tile per layer).
    flops = (2 * depth * rows * (D * 3 * ID + ID * D + 2 * D * M)
             + 2 * depth * BP * heads * (2 * N * N * dim_head))
    transcendentals = depth * (BP * heads * N * N + rows * M)
    bytes_accessed = (2 * 4 * rows * D
                      + num_row_tiles * depth * (weight_bytes + bias_bytes))

    vmem_limit = int(min(phys_vmem - (8 << 20),
                         max(vmem_budget, vmem_need(R))))

    out2 = pl.pallas_call(
        kernel,
        out_shape=jax.ShapeDtypeStruct((rows, D), x.dtype),
        grid_spec=pltpu.PrefetchScalarGridSpec(
            num_scalar_prefetch=0,
            grid=(num_row_tiles, depth),
            in_specs=[
                pl.BlockSpec((R, D), lambda i, l: (i, 0)),   # x (fetched once per row tile)
                wspec((1, D)),                               # ln1 gamma
                wspec((1, D)),                               # ln1 beta
                wspec((D, 3 * ID)),                          # w_qkv (scale folded)
                wspec((ID, D)),                              # w_out
                wspec((1, D)),                               # b_out
                wspec((1, D)),                               # ln2 gamma
                wspec((1, D)),                               # ln2 beta
                wspec((D, M)),                               # w1
                wspec((1, M)),                               # b1
                wspec((M, D)),                               # w2
                wspec((1, D)),                               # b2
            ],
            # Same block index for every layer step -> block stays resident in VMEM
            # across the depth axis (residual carry), written back to HBM only when
            # the row-tile index changes / grid ends.
            out_specs=pl.BlockSpec((R, D), lambda i, l: (i, 0)),
            scratch_shapes=[pltpu.VMEM((R, ID), jnp.bfloat16)],
        ),
        compiler_params=pltpu.CompilerParams(
            # NOTE(v7x): sharding the row-tile axis across the two TensorCores makes
            # each core re-stream the full weight stack; acceptable while MXU-bound.
            dimension_semantics=("parallel", "arbitrary"),
            vmem_limit_bytes=vmem_limit),
        cost_estimate=pl.CostEstimate(
            flops=int(flops),
            transcendentals=int(transcendentals),
            bytes_accessed=int(bytes_accessed)),
        input_output_aliases={0: 0},   # reuse the activation slab's HBM buffer
    )(
        x2,
        params["ln1_g"], params["ln1_b"],
        w_qkv, params["w_out"], params["b_out"],
        params["ln2_g"], params["ln2_b"],
        params["w1"], params["b1"], params["w2"], params["b2"],
    )
    return out2.reshape(B, P, N, D)


def init_transformer_params(key, dim, depth, heads, dim_head, mlp_dim):
    """Depth-stacked parameters; matmul weights stored bf16, LN/bias in f32."""
    inner = heads * dim_head
    k1, k2, k3, k4, k5 = jax.random.split(key, 5)

    def w(k, shape, scale=0.05):
        return (scale * jax.random.normal(k, (depth,) + shape, jnp.float32)
                ).astype(jnp.bfloat16)

    return {
        "ln1_g": jnp.ones((depth, 1, dim), jnp.float32),
        "ln1_b": jnp.zeros((depth, 1, dim), jnp.float32),
        "w_qkv": w(k1, (dim, 3 * inner)),
        "w_out": w(k2, (inner, dim)),
        "b_out": 0.01 * jax.random.normal(k3, (depth, 1, dim), jnp.float32),
        "ln2_g": jnp.ones((depth, 1, dim), jnp.float32),
        "ln2_b": jnp.zeros((depth, 1, dim), jnp.float32),
        "w1": w(k4, (dim, mlp_dim)),
        "b1": jnp.zeros((depth, 1, mlp_dim), jnp.float32),
        "w2": w(k5, (mlp_dim, dim)),
        "b2": jnp.zeros((depth, 1, dim), jnp.float32),
    }


def transformer_reference(x, params, *, heads, dim_head):
    """Pure-JAX f32 reference matching the PyTorch module's forward."""
    B, P, N, D = x.shape
    depth = params["w_qkv"].shape[0]
    ID = heads * dim_head
    h = x.reshape(B * P, N, D).astype(jnp.float32)

    def ln(v, g, b, eps=1e-5):
        m = v.mean(-1, keepdims=True)
        var = ((v - m) ** 2).mean(-1, keepdims=True)
        return (v - m) * jax.lax.rsqrt(var + eps) * g + b

    for l in range(depth):
        xn = ln(h, params["ln1_g"][l], params["ln1_b"][l])
        qkv = xn @ params["w_qkv"][l].astype(jnp.float32)               # (S, N, 3*ID)
        q, k, v = jnp.split(qkv, 3, axis=-1)

        def to_heads(t):
            return t.reshape(t.shape[0], N, heads, dim_head).transpose(0, 2, 1, 3)

        q, k, v = map(to_heads, (q, k, v))
        dots = jnp.einsum('shnd,shmd->shnm', q, k) * (dim_head ** -0.5)
        attn = jax.nn.softmax(dots, axis=-1)
        ctx = jnp.einsum('shnm,shmd->shnd', attn, v)
        ctx = ctx.transpose(0, 2, 1, 3).reshape(-1, N, ID)
        h = h + (ctx @ params["w_out"][l].astype(jnp.float32) + params["b_out"][l])

        xn2 = ln(h, params["ln2_g"][l], params["ln2_b"][l])
        a = xn2 @ params["w1"][l].astype(jnp.float32) + params["b1"][l]
        a = a * jax.nn.sigmoid(a)
        h = h + (a @ params["w2"][l].astype(jnp.float32) + params["b2"][l])
    return h.reshape(B, P, N, D)


if __name__ == "__main__":
    # Small ViT-ish shapes: x is [batch, patches, tokens, dim]
    B, P, N, dim = 2, 4, 8, 128
    depth, heads, dim_head, mlp_dim = 2, 4, 32, 256

    key = jax.random.PRNGKey(0)
    kx, kp = jax.random.split(key)
    x = jax.random.normal(kx, (B, P, N, dim), jnp.float32)
    params = init_transformer_params(kp, dim, depth, heads, dim_head, mlp_dim)

    # Auto tile selection (single large row tile at these shapes) ...
    out = jax.block_until_ready(
        transformer_forward(x, params, heads=heads, dim_head=dim_head))
    # ... and a forced multi-row-tile run to exercise the carry/reset path.
    out_tiled = jax.block_until_ready(
        transformer_forward(x, params, heads=heads, dim_head=dim_head, seq_block=2))

    ref = transformer_reference(x, params, heads=heads, dim_head=dim_head)
    for o in (out, out_tiled):
        assert o.shape == (B, P, N, dim)
        assert bool(jnp.all(jnp.isfinite(o)))
        rel = float(jnp.linalg.norm(o - ref) / (jnp.linalg.norm(ref) + 1e-8))
        assert rel < 5e-2, f"relative error too high: {rel}"

    print("KERNEL_OK")
</pallas_src>

<mosaic_0001>
module attributes {stable_mosaic.version = 11 : i64} {
  func.func @_transformer_kernel(%arg0: i32, %arg1: i32, %arg2: memref<64x128xf32, #tpu.memory_space<vmem>>, %arg3: memref<1x1x128xf32, #tpu.memory_space<vmem>>, %arg4: memref<1x1x128xf32, #tpu.memory_space<vmem>>, %arg5: memref<1x128x384xbf16, #tpu.memory_space<vmem>>, %arg6: memref<1x128x128xbf16, #tpu.memory_space<vmem>>, %arg7: memref<1x1x128xf32, #tpu.memory_space<vmem>>, %arg8: memref<1x1x128xf32, #tpu.memory_space<vmem>>, %arg9: memref<1x1x128xf32, #tpu.memory_space<vmem>>, %arg10: memref<1x128x256xbf16, #tpu.memory_space<vmem>>, %arg11: memref<1x1x256xf32, #tpu.memory_space<vmem>>, %arg12: memref<1x256x128xbf16, #tpu.memory_space<vmem>>, %arg13: memref<1x1x128xf32, #tpu.memory_space<vmem>>, %arg14: memref<64x128xf32, #tpu.memory_space<vmem>>, %arg15: memref<64x128xbf16, #tpu.memory_space<vmem>>) attributes {dimension_semantics = [#tpu.dimension_semantics<parallel>, #tpu.dimension_semantics<arbitrary>], iteration_bounds = array<i64: 1, 2>, scalar_prefetch = 0 : i64, scratch_operands = 1 : i64, tpu.core_type = #tpu.core_type<tc>, window_params = [{transform_indices = @transform_0, window_bounds = array<i64: 64, 128>}, {transform_indices = @transform_1, window_bounds = array<i64: 1, 1, 128>}, {transform_indices = @transform_2, window_bounds = array<i64: 1, 1, 128>}, {transform_indices = @transform_3, window_bounds = array<i64: 1, 128, 384>}, {transform_indices = @transform_4, window_bounds = array<i64: 1, 128, 128>}, {transform_indices = @transform_5, window_bounds = array<i64: 1, 1, 128>}, {transform_indices = @transform_6, window_bounds = array<i64: 1, 1, 128>}, {transform_indices = @transform_7, window_bounds = array<i64: 1, 1, 128>}, {transform_indices = @transform_8, window_bounds = array<i64: 1, 128, 256>}, {transform_indices = @transform_9, window_bounds = array<i64: 1, 1, 256>}, {transform_indices = @transform_10, window_bounds = array<i64: 1, 256, 128>}, {transform_indices = @transform_11, window_bounds = array<i64: 1, 1, 128>}, {transform_indices = @transform_12, window_bounds = array<i64: 64, 128>}]} {
    %c0_i32 = arith.constant 0 : i32
    %0 = arith.cmpi eq, %arg1, %c0_i32 : i32
    %1 = arith.extui %0 : i1 to i32
    %c0_i32_0 = arith.constant 0 : i32
    %2 = arith.cmpi ne, %1, %c0_i32_0 : i32
    scf.if %2 {
      %c0_74 = arith.constant 0 : index
      %c0_75 = arith.constant 0 : index
      %189 = vector.load %arg2[%c0_74, %c0_75] : memref<64x128xf32, #tpu.memory_space<vmem>>, vector<64x128xf32>
      %c0_76 = arith.constant 0 : index
      %c0_77 = arith.constant 0 : index
      %190 = vector.load %arg14[%c0_76, %c0_77] : memref<64x128xf32, #tpu.memory_space<vmem>>, vector<64x128xf32>
      tpu.vector_store %arg14[%c0_76, %c0_77], %189 {strides = array<i32>} : memref<64x128xf32, #tpu.memory_space<vmem>>, vector<64x128xf32>,
    } else {
    }
    %c0 = arith.constant 0 : index
    %c0_1 = arith.constant 0 : index
    %3 = vector.load %arg14[%c0, %c0_1] : memref<64x128xf32, #tpu.memory_space<vmem>>, vector<64x128xf32>
    %c0_2 = arith.constant 0 : index
    %c0_3 = arith.constant 0 : index
    %c0_4 = arith.constant 0 : index
    %4 = vector.load %arg3[%c0_2, %c0_3, %c0_4] : memref<1x1x128xf32, #tpu.memory_space<vmem>>, vector<1x1x128xf32>
    %5 = vector.shape_cast %4 : vector<1x1x128xf32> to vector<1x128xf32>
    %c0_5 = arith.constant 0 : index
    %c0_6 = arith.constant 0 : index
    %c0_7 = arith.constant 0 : index
    %6 = vector.load %arg4[%c0_5, %c0_6, %c0_7] : memref<1x1x128xf32, #tpu.memory_space<vmem>>, vector<1x1x128xf32>
    %7 = vector.shape_cast %6 : vector<1x1x128xf32> to vector<1x128xf32>
    %cst = arith.constant dense<0.000000e+00> : vector<64xf32>
    %8 = vector.multi_reduction <add>, %3, %cst [1] : vector<64x128xf32> to vector<64xf32>
    %9 = vector.shape_cast %8 : vector<64xf32> to vector<64x1xf32>
    %cst_8 = arith.constant 1.280000e+02 : f32
    %10 = vector.broadcast %cst_8 : f32 to vector<64x1xf32>
    %11 = arith.divf %9, %10 : vector<64x1xf32>
    %12 = vector.broadcast %11 : vector<64x1xf32> to vector<64x128xf32>
    %13 = arith.subf %3, %12 : vector<64x128xf32>
    %14 = arith.mulf %13, %13 : vector<64x128xf32>
    %cst_9 = arith.constant dense<0.000000e+00> : vector<64xf32>
    %15 = vector.multi_reduction <add>, %14, %cst_9 [1] : vector<64x128xf32> to vector<64xf32>
    %16 = vector.shape_cast %15 : vector<64xf32> to vector<64x1xf32>
    %cst_10 = arith.constant 1.280000e+02 : f32
    %17 = vector.broadcast %cst_10 : f32 to vector<64x1xf32>
    %18 = arith.divf %16, %17 : vector<64x1xf32>
    %cst_11 = arith.constant 9.99999974E-6 : f32
    %19 = vector.broadcast %cst_11 : f32 to vector<64x1xf32>
    %20 = arith.addf %18, %19 : vector<64x1xf32>
    %21 = math.rsqrt %20 : vector<64x1xf32>
    %22 = vector.broadcast %21 : vector<64x1xf32> to vector<64x128xf32>
    %23 = arith.mulf %13, %22 : vector<64x128xf32>
    %24 = vector.broadcast %5 : vector<1x128xf32> to vector<64x128xf32>
    %25 = arith.mulf %23, %24 : vector<64x128xf32>
    %26 = vector.broadcast %7 : vector<1x128xf32> to vector<64x128xf32>
    %27 = arith.addf %25, %26 : vector<64x128xf32>
    %28 = arith.truncf %27 : vector<64x128xf32> to vector<64x128xbf16>
    %c0_12 = arith.constant 0 : index
    %c0_13 = arith.constant 0 : index
    %c0_14 = arith.constant 0 : index
    %29 = vector.load %arg5[%c0_12, %c0_13, %c0_14] : memref<1x128x384xbf16, #tpu.memory_space<vmem>>, vector<1x128x384xbf16>
    %30 = vector.shape_cast %29 : vector<1x128x384xbf16> to vector<128x384xbf16>
    %cst_15 = arith.constant dense<0.000000e+00> : vector<64x384xf32>
    %31 = tpu.matmul %28, %30, %cst_15 {dimension_numbers = #tpu.dot_dimension_numbers<[1], [0], [0], [1], [0, 0, 1, 1], [], []>} : vector<64x128xbf16>, vector<128x384xbf16>, vector<64x384xf32> -> vector<64x384xf32>
    %32 = vector.extract_strided_slice %31 {offsets = [0, 0], sizes = [64, 32], strides = [1, 1]} : vector<64x384xf32> to vector<64x32xf32>
    %33 = vector.shape_cast %32 : vector<64x32xf32> to vector<8x8x32xf32>
    %34 = vector.extract_strided_slice %31 {offsets = [0, 128], sizes = [64, 32], strides = [1, 1]} : vector<64x384xf32> to vector<64x32xf32>
    %35 = vector.shape_cast %34 : vector<64x32xf32> to vector<8x8x32xf32>
    %36 = vector.extract_strided_slice %31 {offsets = [0, 256], sizes = [64, 32], strides = [1, 1]} : vector<64x384xf32> to vector<64x32xf32>
    %37 = vector.shape_cast %36 : vector<64x32xf32> to vector<8x8x32xf32>
    %38 = arith.truncf %33 : vector<8x8x32xf32> to vector<8x8x32xbf16>
    %39 = arith.truncf %35 : vector<8x8x32xf32> to vector<8x8x32xbf16>
    "tpu.trace_start"() <{level = 10 : i32, message = "tqd,tkd->tqk"}> : () -> ()
    %cst_16 = arith.constant dense<0.000000e+00> : vector<8x8x8xf32>
    %40 = tpu.matmul %38, %39, %cst_16 {dimension_numbers = #tpu.dot_dimension_numbers<[2], [2], [1], [1], [0, 0, 0, 1, 1, 1], [0], [0]>} : vector<8x8x32xbf16>, vector<8x8x32xbf16>, vector<8x8x8xf32> -> vector<8x8x8xf32>
    "tpu.trace_stop"() : () -> ()
    %cst_17 = arith.constant dense<0xFF800000> : vector<8x8xf32>
    %41 = vector.multi_reduction <maximumf>, %40, %cst_17 [2] : vector<8x8x8xf32> to vector<8x8xf32>
    %42 = vector.shape_cast %41 : vector<8x8xf32> to vector<8x8x1xf32>
    %43 = vector.broadcast %42 : vector<8x8x1xf32> to vector<8x8x8xf32>
    %44 = arith.subf %40, %43 : vector<8x8x8xf32>
    %45 = math.exp %44 : vector<8x8x8xf32>
    %cst_18 = arith.constant dense<0.000000e+00> : vector<8x8xf32>
    %46 = vector.multi_reduction <add>, %45, %cst_18 [2] : vector<8x8x8xf32> to vector<8x8xf32>
    %47 = vector.shape_cast %46 : vector<8x8xf32> to vector<8x8x1xf32>
    %48 = tpu.reciprocal %47 {approx = true} : vector<8x8x1xf32> -> vector<8x8x1xf32>
    %49 = vector.broadcast %48 : vector<8x8x1xf32> to vector<8x8x8xf32>
    %50 = arith.mulf %45, %49 : vector<8x8x8xf32>
    %51 = arith.truncf %50 : vector<8x8x8xf32> to vector<8x8x8xbf16>
    %52 = arith.truncf %37 : vector<8x8x32xf32> to vector<8x8x32xbf16>
    "tpu.trace_start"() <{level = 10 : i32, message = "tqk,tkd->tqd"}> : () -> ()
    %cst_19 = arith.constant dense<0.000000e+00> : vector<8x8x32xf32>
    %53 = tpu.matmul %51, %52, %cst_19 {dimension_numbers = #tpu.dot_dimension_numbers<[2], [1], [1], [2], [0, 0, 0, 1, 1, 2], [0], [0]>} : vector<8x8x8xbf16>, vector<8x8x32xbf16>, vector<8x8x32xf32> -> vector<8x8x32xf32>
    "tpu.trace_stop"() : () -> ()
    %54 = vector.shape_cast %53 : vector<8x8x32xf32> to vector<64x32xf32>
    %55 = arith.truncf %54 : vector<64x32xf32> to vector<64x32xbf16>
    %c0_20 = arith.constant 0 : index
    %c0_21 = arith.constant 0 : index
    %56 = vector.load %arg15[%c0_20, %c0_21] : memref<64x128xbf16, #tpu.memory_space<vmem>>, vector<64x32xbf16>
    tpu.vector_store %arg15[%c0_20, %c0_21], %55 {strides = array<i32>} : memref<64x128xbf16, #tpu.memory_space<vmem>>, vector<64x32xbf16>,
    %57 = vector.extract_strided_slice %31 {offsets = [0, 32], sizes = [64, 32], strides = [1, 1]} : vector<64x384xf32> to vector<64x32xf32>
    %58 = vector.shape_cast %57 : vector<64x32xf32> to vector<8x8x32xf32>
    %59 = vector.extract_strided_slice %31 {offsets = [0, 160], sizes = [64, 32], strides = [1, 1]} : vector<64x384xf32> to vector<64x32xf32>
    %60 = vector.shape_cast %59 : vector<64x32xf32> to vector<8x8x32xf32>
    %61 = vector.extract_strided_slice %31 {offsets = [0, 288], sizes = [64, 32], strides = [1, 1]} : vector<64x384xf32> to vector<64x32xf32>
    %62 = vector.shape_cast %61 : vector<64x32xf32> to vector<8x8x32xf32>
    %63 = arith.truncf %58 : vector<8x8x32xf32> to vector<8x8x32xbf16>
    %64 = arith.truncf %60 : vector<8x8x32xf32> to vector<8x8x32xbf16>
    "tpu.trace_start"() <{level = 10 : i32, message = "tqd,tkd->tqk"}> : () -> ()
    %cst_22 = arith.constant dense<0.000000e+00> : vector<8x8x8xf32>
    %65 = tpu.matmul %63, %64, %cst_22 {dimension_numbers = #tpu.dot_dimension_numbers<[2], [2], [1], [1], [0, 0, 0, 1, 1, 1], [0], [0]>} : vector<8x8x32xbf16>, vector<8x8x32xbf16>, vector<8x8x8xf32> -> vector<8x8x8xf32>
    "tpu.trace_stop"() : () -> ()
    %cst_23 = arith.constant dense<0xFF800000> : vector<8x8xf32>
    %66 = vector.multi_reduction <maximumf>, %65, %cst_23 [2] : vector<8x8x8xf32> to vector<8x8xf32>
    %67 = vector.shape_cast %66 : vector<8x8xf32> to vector<8x8x1xf32>
    %68 = vector.broadcast %67 : vector<8x8x1xf32> to vector<8x8x8xf32>
    %69 = arith.subf %65, %68 : vector<8x8x8xf32>
    %70 = math.exp %69 : vector<8x8x8xf32>
    %cst_24 = arith.constant dense<0.000000e+00> : vector<8x8xf32>
    %71 = vector.multi_reduction <add>, %70, %cst_24 [2] : vector<8x8x8xf32> to vector<8x8xf32>
    %72 = vector.shape_cast %71 : vector<8x8xf32> to vector<8x8x1xf32>
    %73 = tpu.reciprocal %72 {approx = true} : vector<8x8x1xf32> -> vector<8x8x1xf32>
    %74 = vector.broadcast %73 : vector<8x8x1xf32> to vector<8x8x8xf32>
    %75 = arith.mulf %70, %74 : vector<8x8x8xf32>
    %76 = arith.truncf %75 : vector<8x8x8xf32> to vector<8x8x8xbf16>
    %77 = arith.truncf %62 : vector<8x8x32xf32> to vector<8x8x32xbf16>
    "tpu.trace_start"() <{level = 10 : i32, message = "tqk,tkd->tqd"}> : () -> ()
    %cst_25 = arith.constant dense<0.000000e+00> : vector<8x8x32xf32>
    %78 = tpu.matmul %76, %77, %cst_25 {dimension_numbers = #tpu.dot_dimension_numbers<[2], [1], [1], [2], [0, 0, 0, 1, 1, 2], [0], [0]>} : vector<8x8x8xbf16>, vector<8x8x32xbf16>, vector<8x8x32xf32> -> vector<8x8x32xf32>
    "tpu.trace_stop"() : () -> ()
    %79 = vector.shape_cast %78 : vector<8x8x32xf32> to vector<64x32xf32>
    %80 = arith.truncf %79 : vector<64x32xf32> to vector<64x32xbf16>
    %c0_26 = arith.constant 0 : index
    %c32 = arith.constant 32 : index
    %81 = vector.load %arg15[%c0_26, %c32] : memref<64x128xbf16, #tpu.memory_space<vmem>>, vector<64x32xbf16>
    tpu.vector_store %arg15[%c0_26, %c32], %80 {strides = array<i32>} : memref<64x128xbf16, #tpu.memory_space<vmem>>, vector<64x32xbf16>,
    %82 = vector.extract_strided_slice %31 {offsets = [0, 64], sizes = [64, 32], strides = [1, 1]} : vector<64x384xf32> to vector<64x32xf32>
    %83 = vector.shape_cast %82 : vector<64x32xf32> to vector<8x8x32xf32>
    %84 = vector.extract_strided_slice %31 {offsets = [0, 192], sizes = [64, 32], strides = [1, 1]} : vector<64x384xf32> to vector<64x32xf32>
    %85 = vector.shape_cast %84 : vector<64x32xf32> to vector<8x8x32xf32>
    %86 = vector.extract_strided_slice %31 {offsets = [0, 320], sizes = [64, 32], strides = [1, 1]} : vector<64x384xf32> to vector<64x32xf32>
    %87 = vector.shape_cast %86 : vector<64x32xf32> to vector<8x8x32xf32>
    %88 = arith.truncf %83 : vector<8x8x32xf32> to vector<8x8x32xbf16>
    %89 = arith.truncf %85 : vector<8x8x32xf32> to vector<8x8x32xbf16>
    "tpu.trace_start"() <{level = 10 : i32, message = "tqd,tkd->tqk"}> : () -> ()
    %cst_27 = arith.constant dense<0.000000e+00> : vector<8x8x8xf32>
    %90 = tpu.matmul %88, %89, %cst_27 {dimension_numbers = #tpu.dot_dimension_numbers<[2], [2], [1], [1], [0, 0, 0, 1, 1, 1], [0], [0]>} : vector<8x8x32xbf16>, vector<8x8x32xbf16>, vector<8x8x8xf32> -> vector<8x8x8xf32>
    "tpu.trace_stop"() : () -> ()
    %cst_28 = arith.constant dense<0xFF800000> : vector<8x8xf32>
    %91 = vector.multi_reduction <maximumf>, %90, %cst_28 [2] : vector<8x8x8xf32> to vector<8x8xf32>
    %92 = vector.shape_cast %91 : vector<8x8xf32> to vector<8x8x1xf32>
    %93 = vector.broadcast %92 : vector<8x8x1xf32> to vector<8x8x8xf32>
    %94 = arith.subf %90, %93 : vector<8x8x8xf32>
    %95 = math.exp %94 : vector<8x8x8xf32>
    %cst_29 = arith.constant dense<0.000000e+00> : vector<8x8xf32>
    %96 = vector.multi_reduction <add>, %95, %cst_29 [2] : vector<8x8x8xf32> to vector<8x8xf32>
    %97 = vector.shape_cast %96 : vector<8x8xf32> to vector<8x8x1xf32>
    %98 = tpu.reciprocal %97 {approx = true} : vector<8x8x1xf32> -> vector<8x8x1xf32>
    %99 = vector.broadcast %98 : vector<8x8x1xf32> to vector<8x8x8xf32>
    %100 = arith.mulf %95, %99 : vector<8x8x8xf32>
    %101 = arith.truncf %100 : vector<8x8x8xf32> to vector<8x8x8xbf16>
    %102 = arith.truncf %87 : vector<8x8x32xf32> to vector<8x8x32xbf16>
    "tpu.trace_start"() <{level = 10 : i32, message = "tqk,tkd->tqd"}> : () -> ()
    %cst_30 = arith.constant dense<0.000000e+00> : vector<8x8x32xf32>
    %103 = tpu.matmul %101, %102, %cst_30 {dimension_numbers = #tpu.dot_dimension_numbers<[2], [1], [1], [2], [0, 0, 0, 1, 1, 2], [0], [0]>} : vector<8x8x8xbf16>, vector<8x8x32xbf16>, vector<8x8x32xf32> -> vector<8x8x32xf32>
    "tpu.trace_stop"() : () -> ()
    %104 = vector.shape_cast %103 : vector<8x8x32xf32> to vector<64x32xf32>
    %105 = arith.truncf %104 : vector<64x32xf32> to vector<64x32xbf16>
    %c0_31 = arith.constant 0 : index
    %c64 = arith.constant 64 : index
    %106 = vector.load %arg15[%c0_31, %c64] : memref<64x128xbf16, #tpu.memory_space<vmem>>, vector<64x32xbf16>
    tpu.vector_store %arg15[%c0_31, %c64], %105 {strides = array<i32>} : memref<64x128xbf16, #tpu.memory_space<vmem>>, vector<64x32xbf16>,
    %107 = vector.extract_strided_slice %31 {offsets = [0, 96], sizes = [64, 32], strides = [1, 1]} : vector<64x384xf32> to vector<64x32xf32>
    %108 = vector.shape_cast %107 : vector<64x32xf32> to vector<8x8x32xf32>
    %109 = vector.extract_strided_slice %31 {offsets = [0, 224], sizes = [64, 32], strides = [1, 1]} : vector<64x384xf32> to vector<64x32xf32>
    %110 = vector.shape_cast %109 : vector<64x32xf32> to vector<8x8x32xf32>
    %111 = vector.extract_strided_slice %31 {offsets = [0, 352], sizes = [64, 32], strides = [1, 1]} : vector<64x384xf32> to vector<64x32xf32>
    %112 = vector.shape_cast %111 : vector<64x32xf32> to vector<8x8x32xf32>
    %113 = arith.truncf %108 : vector<8x8x32xf32> to vector<8x8x32xbf16>
    %114 = arith.truncf %110 : vector<8x8x32xf32> to vector<8x8x32xbf16>
    "tpu.trace_start"() <{level = 10 : i32, message = "tqd,tkd->tqk"}> : () -> ()
    %cst_32 = arith.constant dense<0.000000e+00> : vector<8x8x8xf32>
    %115 = tpu.matmul %113, %114, %cst_32 {dimension_numbers = #tpu.dot_dimension_numbers<[2], [2], [1], [1], [0, 0, 0, 1, 1, 1], [0], [0]>} : vector<8x8x32xbf16>, vector<8x8x32xbf16>, vector<8x8x8xf32> -> vector<8x8x8xf32>
    "tpu.trace_stop"() : () -> ()
    %cst_33 = arith.constant dense<0xFF800000> : vector<8x8xf32>
    %116 = vector.multi_reduction <maximumf>, %115, %cst_33 [2] : vector<8x8x8xf32> to vector<8x8xf32>
    %117 = vector.shape_cast %116 : vector<8x8xf32> to vector<8x8x1xf32>
    %118 = vector.broadcast %117 : vector<8x8x1xf32> to vector<8x8x8xf32>
    %119 = arith.subf %115, %118 : vector<8x8x8xf32>
    %120 = math.exp %119 : vector<8x8x8xf32>
    %cst_34 = arith.constant dense<0.000000e+00> : vector<8x8xf32>
    %121 = vector.multi_reduction <add>, %120, %cst_34 [2] : vector<8x8x8xf32> to vector<8x8xf32>
    %122 = vector.shape_cast %121 : vector<8x8xf32> to vector<8x8x1xf32>
    %123 = tpu.reciprocal %122 {approx = true} : vector<8x8x1xf32> -> vector<8x8x1xf32>
    %124 = vector.broadcast %123 : vector<8x8x1xf32> to vector<8x8x8xf32>
    %125 = arith.mulf %120, %124 : vector<8x8x8xf32>
    %126 = arith.truncf %125 : vector<8x8x8xf32> to vector<8x8x8xbf16>
    %127 = arith.truncf %112 : vector<8x8x32xf32> to vector<8x8x32xbf16>
    "tpu.trace_start"() <{level = 10 : i32, message = "tqk,tkd->tqd"}> : () -> ()
    %cst_35 = arith.constant dense<0.000000e+00> : vector<8x8x32xf32>
    %128 = tpu.matmul %126, %127, %cst_35 {dimension_numbers = #tpu.dot_dimension_numbers<[2], [1], [1], [2], [0, 0, 0, 1, 1, 2], [0], [0]>} : vector<8x8x8xbf16>, vector<8x8x32xbf16>, vector<8x8x32xf32> -> vector<8x8x32xf32>
    "tpu.trace_stop"() : () -> ()
    %129 = vector.shape_cast %128 : vector<8x8x32xf32> to vector<64x32xf32>
    %130 = arith.truncf %129 : vector<64x32xf32> to vector<64x32xbf16>
    %c0_36 = arith.constant 0 : index
    %c96 = arith.constant 96 : index
    %131 = vector.load %arg15[%c0_36, %c96] : memref<64x128xbf16, #tpu.memory_space<vmem>>, vector<64x32xbf16>
    tpu.vector_store %arg15[%c0_36, %c96], %130 {strides = array<i32>} : memref<64x128xbf16, #tpu.memory_space<vmem>>, vector<64x32xbf16>,
    %c0_37 = arith.constant 0 : index
    %c0_38 = arith.constant 0 : index
    %132 = vector.load %arg15[%c0_37, %c0_38] : memref<64x128xbf16, #tpu.memory_space<vmem>>, vector<64x128xbf16>
    %c0_39 = arith.constant 0 : index
    %c0_40 = arith.constant 0 : index
    %c0_41 = arith.constant 0 : index
    %133 = vector.load %arg6[%c0_39, %c0_40, %c0_41] : memref<1x128x128xbf16, #tpu.memory_space<vmem>>, vector<1x128x128xbf16>
    %134 = vector.shape_cast %133 : vector<1x128x128xbf16> to vector<128x128xbf16>
    %cst_42 = arith.constant dense<0.000000e+00> : vector<64x128xf32>
    %135 = tpu.matmul %132, %134, %cst_42 {dimension_numbers = #tpu.dot_dimension_numbers<[1], [0], [0], [1], [0, 0, 1, 1], [], []>} : vector<64x128xbf16>, vector<128x128xbf16>, vector<64x128xf32> -> vector<64x128xf32>
    %c0_43 = arith.constant 0 : index
    %c0_44 = arith.constant 0 : index
    %c0_45 = arith.constant 0 : index
    %136 = vector.load %arg7[%c0_43, %c0_44, %c0_45] : memref<1x1x128xf32, #tpu.memory_space<vmem>>, vector<1x1x128xf32>
    %137 = vector.shape_cast %136 : vector<1x1x128xf32> to vector<1x128xf32>
    %138 = vector.broadcast %137 : vector<1x128xf32> to vector<64x128xf32>
    %139 = arith.addf %135, %138 : vector<64x128xf32>
    %140 = arith.addf %3, %139 : vector<64x128xf32>
    %c0_46 = arith.constant 0 : index
    %c0_47 = arith.constant 0 : index
    %c0_48 = arith.constant 0 : index
    %141 = vector.load %arg8[%c0_46, %c0_47, %c0_48] : memref<1x1x128xf32, #tpu.memory_space<vmem>>, vector<1x1x128xf32>
    %142 = vector.shape_cast %141 : vector<1x1x128xf32> to vector<1x128xf32>
    %c0_49 = arith.constant 0 : index
    %c0_50 = arith.constant 0 : index
    %c0_51 = arith.constant 0 : index
    %143 = vector.load %arg9[%c0_49, %c0_50, %c0_51] : memref<1x1x128xf32, #tpu.memory_space<vmem>>, vector<1x1x128xf32>
    %144 = vector.shape_cast %143 : vector<1x1x128xf32> to vector<1x128xf32>
    %cst_52 = arith.constant dense<0.000000e+00> : vector<64xf32>
    %145 = vector.multi_reduction <add>, %140, %cst_52 [1] : vector<64x128xf32> to vector<64xf32>
    %146 = vector.shape_cast %145 : vector<64xf32> to vector<64x1xf32>
    %cst_53 = arith.constant 1.280000e+02 : f32
    %147 = vector.broadcast %cst_53 : f32 to vector<64x1xf32>
    %148 = arith.divf %146, %147 : vector<64x1xf32>
    %149 = vector.broadcast %148 : vector<64x1xf32> to vector<64x128xf32>
    %150 = arith.subf %140, %149 : vector<64x128xf32>
    %151 = arith.mulf %150, %150 : vector<64x128xf32>
    %cst_54 = arith.constant dense<0.000000e+00> : vector<64xf32>
    %152 = vector.multi_reduction <add>, %151, %cst_54 [1] : vector<64x128xf32> to vector<64xf32>
    %153 = vector.shape_cast %152 : vector<64xf32> to vector<64x1xf32>
    %cst_55 = arith.constant 1.280000e+02 : f32
    %154 = vector.broadcast %cst_55 : f32 to vector<64x1xf32>
    %155 = arith.divf %153, %154 : vector<64x1xf32>
    %cst_56 = arith.constant 9.99999974E-6 : f32
    %156 = vector.broadcast %cst_56 : f32 to vector<64x1xf32>
    %157 = arith.addf %155, %156 : vector<64x1xf32>
    %158 = math.rsqrt %157 : vector<64x1xf32>
    %159 = vector.broadcast %158 : vector<64x1xf32> to vector<64x128xf32>
    %160 = arith.mulf %150, %159 : vector<64x128xf32>
    %161 = vector.broadcast %142 : vector<1x128xf32> to vector<64x128xf32>
    %162 = arith.mulf %160, %161 : vector<64x128xf32>
    %163 = vector.broadcast %144 : vector<1x128xf32> to vector<64x128xf32>
    %164 = arith.addf %162, %163 : vector<64x128xf32>
    %165 = arith.truncf %164 : vector<64x128xf32> to vector<64x128xbf16>
    %c0_57 = arith.constant 0 : index
    %c0_58 = arith.constant 0 : index
    %c0_59 = arith.constant 0 : index
    %166 = vector.load %arg10[%c0_57, %c0_58, %c0_59] : memref<1x128x256xbf16, #tpu.memory_space<vmem>>, vector<1x128x256xbf16>
    %167 = vector.shape_cast %166 : vector<1x128x256xbf16> to vector<128x256xbf16>
    %cst_60 = arith.constant dense<0.000000e+00> : vector<64x256xf32>
    %168 = tpu.matmul %165, %167, %cst_60 {dimension_numbers = #tpu.dot_dimension_numbers<[1], [0], [0], [1], [0, 0, 1, 1], [], []>} : vector<64x128xbf16>, vector<128x256xbf16>, vector<64x256xf32> -> vector<64x256xf32>
    %c0_61 = arith.constant 0 : index
    %c0_62 = arith.constant 0 : index
    %c0_63 = arith.constant 0 : index
    %169 = vector.load %arg11[%c0_61, %c0_62, %c0_63] : memref<1x1x256xf32, #tpu.memory_space<vmem>>, vector<1x1x256xf32>
    %170 = vector.shape_cast %169 : vector<1x1x256xf32> to vector<1x256xf32>
    %171 = vector.broadcast %170 : vector<1x256xf32> to vector<64x256xf32>
    %172 = arith.addf %168, %171 : vector<64x256xf32>
    %173 = arith.negf %172 : vector<64x256xf32>
    %174 = math.exp %173 : vector<64x256xf32>
    %cst_64 = arith.constant 1.000000e+00 : f32
    %175 = vector.broadcast %cst_64 : f32 to vector<64x256xf32>
    %176 = arith.addf %175, %174 : vector<64x256xf32>
    %177 = arith.divf %175, %176 : vector<64x256xf32>
    %178 = arith.mulf %172, %177 : vector<64x256xf32>
    %179 = arith.truncf %178 : vector<64x256xf32> to vector<64x256xbf16>
    %c0_65 = arith.constant 0 : index
    %c0_66 = arith.constant 0 : index
    %c0_67 = arith.constant 0 : index
    %180 = vector.load %arg12[%c0_65, %c0_66, %c0_67] : memref<1x256x128xbf16, #tpu.memory_space<vmem>>, vector<1x256x128xbf16>
    %181 = vector.shape_cast %180 : vector<1x256x128xbf16> to vector<256x128xbf16>
    %cst_68 = arith.constant dense<0.000000e+00> : vector<64x128xf32>
    %182 = tpu.matmul %179, %181, %cst_68 {dimension_numbers = #tpu.dot_dimension_numbers<[1], [0], [0], [1], [0, 0, 1, 1], [], []>} : vector<64x256xbf16>, vector<256x128xbf16>, vector<64x128xf32> -> vector<64x128xf32>
    %c0_69 = arith.constant 0 : index
    %c0_70 = arith.constant 0 : index
    %c0_71 = arith.constant 0 : index
    %183 = vector.load %arg13[%c0_69, %c0_70, %c0_71] : memref<1x1x128xf32, #tpu.memory_space<vmem>>, vector<1x1x128xf32>
    %184 = vector.shape_cast %183 : vector<1x1x128xf32> to vector<1x128xf32>
    %185 = vector.broadcast %184 : vector<1x128xf32> to vector<64x128xf32>
    %186 = arith.addf %182, %185 : vector<64x128xf32>
    %187 = arith.addf %140, %186 : vector<64x128xf32>
    %c0_72 = arith.constant 0 : index
    %c0_73 = arith.constant 0 : index
    %188 = vector.load %arg14[%c0_72, %c0_73] : memref<64x128xf32, #tpu.memory_space<vmem>>, vector<64x128xf32>
    tpu.vector_store %arg14[%c0_72, %c0_73], %187 {strides = array<i32>} : memref<64x128xf32, #tpu.memory_space<vmem>>, vector<64x128xf32>,
    return
  }
  func.func @transform_0(%arg0: i32, %arg1: i32) -> (i32, i32) {
    %c0_i32 = arith.constant 0 : i32
    %c0_i32_0 = arith.constant 0 : i32
    return %arg0, %c0_i32 : i32, i32
  }
  func.func @transform_1(%arg0: i32, %arg1: i32) -> (i32, i32, i32) {
    %c0_i32 = arith.constant 0 : i32
    %c0_i32_0 = arith.constant 0 : i32
    %c0_i32_1 = arith.constant 0 : i32
    return %arg1, %c0_i32, %c0_i32_0 : i32, i32, i32
  }
  func.func @transform_2(%arg0: i32, %arg1: i32) -> (i32, i32, i32) {
    %c0_i32 = arith.constant 0 : i32
    %c0_i32_0 = arith.constant 0 : i32
    %c0_i32_1 = arith.constant 0 : i32
    return %arg1, %c0_i32, %c0_i32_0 : i32, i32, i32
  }
  func.func @transform_3(%arg0: i32, %arg1: i32) -> (i32, i32, i32) {
    %c0_i32 = arith.constant 0 : i32
    %c0_i32_0 = arith.constant 0 : i32
    %c0_i32_1 = arith.constant 0 : i32
    return %arg1, %c0_i32, %c0_i32_0 : i32, i32, i32
  }
  func.func @transform_4(%arg0: i32, %arg1: i32) -> (i32, i32, i32) {
    %c0_i32 = arith.constant 0 : i32
    %c0_i32_0 = arith.constant 0 : i32
    %c0_i32_1 = arith.constant 0 : i32
    return %arg1, %c0_i32, %c0_i32_0 : i32, i32, i32
  }
  func.func @transform_5(%arg0: i32, %arg1: i32) -> (i32, i32, i32) {
    %c0_i32 = arith.constant 0 : i32
    %c0_i32_0 = arith.constant 0 : i32
    %c0_i32_1 = arith.constant 0 : i32
    return %arg1, %c0_i32, %c0_i32_0 : i32, i32, i32
  }
  func.func @transform_6(%arg0: i32, %arg1: i32) -> (i32, i32, i32) {
    %c0_i32 = arith.constant 0 : i32
    %c0_i32_0 = arith.constant 0 : i32
    %c0_i32_1 = arith.constant 0 : i32
    return %arg1, %c0_i32, %c0_i32_0 : i32, i32, i32
  }
  func.func @transform_7(%arg0: i32, %arg1: i32) -> (i32, i32, i32) {
    %c0_i32 = arith.constant 0 : i32
    %c0_i32_0 = arith.constant 0 : i32
    %c0_i32_1 = arith.constant 0 : i32
    return %arg1, %c0_i32, %c0_i32_0 : i32, i32, i32
  }
  func.func @transform_8(%arg0: i32, %arg1: i32) -> (i32, i32, i32) {
    %c0_i32 = arith.constant 0 : i32
    %c0_i32_0 = arith.constant 0 : i32
    %c0_i32_1 = arith.constant 0 : i32
    return %arg1, %c0_i32, %c0_i32_0 : i32, i32, i32
  }
  func.func @transform_9(%arg0: i32, %arg1: i32) -> (i32, i32, i32) {
    %c0_i32 = arith.constant 0 : i32
    %c0_i32_0 = arith.constant 0 : i32
    %c0_i32_1 = arith.constant 0 : i32
    return %arg1, %c0_i32, %c0_i32_0 : i32, i32, i32
  }
  func.func @transform_10(%arg0: i32, %arg1: i32) -> (i32, i32, i32) {
    %c0_i32 = arith.constant 0 : i32
    %c0_i32_0 = arith.constant 0 : i32
    %c0_i32_1 = arith.constant 0 : i32
    return %arg1, %c0_i32, %c0_i32_0 : i32, i32, i32
  }
  func.func @transform_11(%arg0: i32, %arg1: i32) -> (i32, i32, i32) {
    %c0_i32 = arith.constant 0 : i32
    %c0_i32_0 = arith.constant 0 : i32
    %c0_i32_1 = arith.constant 0 : i32
    return %arg1, %c0_i32, %c0_i32_0 : i32, i32, i32
  }
  func.func @transform_12(%arg0: i32, %arg1: i32) -> (i32, i32) {
    %c0_i32 = arith.constant 0 : i32
    %c0_i32_0 = arith.constant 0 : i32
    return %arg0, %c0_i32 : i32, i32
  }
}

</mosaic_0001>

<llo_original>
// kernel: tpu_custom_call.1
$region0: #{tpu_custom_call.1}
  #allocation0 [shape = 'u32[]', space=smem, size = 0x4, offset = 0x4, fixed_abs, tag = 'smem constant byte address 0x4 - core index']
  #allocation1 [shape = 'u32[144,128]{1,0:T(1,128)}', space=vmem, size = 0x12000, scoped, tag = 'internal scratch']
  #allocation2 [shape = 'bf16[64,128]{1,0:T(16,128)(2,1)}', space=vmem, size = 0x4000, scoped, tag = 'scratch operand']
  %s0 = inlined_call_operand.hbm [shape: f32[64,128], index: 0, kind: input, shape index: {}, may-alias: {0,12}]
  %s1 = inlined_call_operand.hbm [shape: f32[2,1,128], index: 1, kind: input, shape index: {}]
  %s2 = inlined_call_operand.hbm [shape: f32[2,1,128], index: 2, kind: input, shape index: {}]
  %s3 = inlined_call_operand.hbm [shape: bf16[2,128,384], index: 3, kind: input, shape index: {}]
  %s4 = inlined_call_operand.hbm [shape: bf16[2,128,128], index: 4, kind: input, shape index: {}]
  %s5 = inlined_call_operand.hbm [shape: f32[2,1,128], index: 5, kind: input, shape index: {}]
  %s6 = inlined_call_operand.hbm [shape: f32[2,1,128], index: 6, kind: input, shape index: {}]
  %s7 = inlined_call_operand.hbm [shape: f32[2,1,128], index: 7, kind: input, shape index: {}]
  %s8 = inlined_call_operand.hbm [shape: bf16[2,128,256], index: 8, kind: input, shape index: {}]
  %s9 = inlined_call_operand.hbm [shape: f32[2,1,256], index: 9, kind: input, shape index: {}]
  %s10 = inlined_call_operand.hbm [shape: bf16[2,256,128], index: 10, kind: input, shape index: {}]
  %s11 = inlined_call_operand.hbm [shape: f32[2,1,128], index: 11, kind: input, shape index: {}]
  %s12 = inlined_call_operand.hbm [shape: f32[64,128], index: 12, kind: output, shape index: {}, may-alias: {0,12}]
  %s13 = sld [smem:[#allocation0]]
  $region133: #{tpu_custom_call.1} parent=0
    _
  %s15 = ssub.s32 1, %s13
  %s16 = scalar_select 0, %s15, %s13
  $region1: #{tpu_custom_call.1} parent=0
    #allocation3 [shape = 'u8[32768]{0}', space=vmem, size = 0x8000, scoped, tag = 'input window, operand 0, single buffered']
    #allocation4 [shape = 's32[2]{0}', space=sflag, size = 0x8, scoped, tag = 'scoped memory for tpu_custom_call.1']
    #allocation5 [shape = 's32[2]{0}', space=sflag, size = 0x8, scoped, tag = 'scoped memory for tpu_custom_call.1']
    #allocation6 [shape = 'u8[1024]{0}', space=vmem, size = 0x400, scoped, tag = 'input window, operand 1']
    #allocation7 [shape = 's32[2]{0}', space=sflag, size = 0x8, scoped, tag = 'scoped memory for tpu_custom_call.1']
    #allocation8 [shape = 'u8[1024]{0}', space=vmem, size = 0x400, scoped, tag = 'input window, operand 2']
    #allocation9 [shape = 'u8[196608]{0}', space=vmem, size = 0x30000, scoped, tag = 'input window, operand 3']
    #allocation10 [shape = 's32[2]{0}', space=sflag, size = 0x8, scoped, tag = 'scoped memory for tpu_custom_call.1']
    #allocation11 [shape = 'u8[65536]{0}', space=vmem, size = 0x10000, scoped, tag = 'input window, operand 4']
    #allocation12 [shape = 'u8[1024]{0}', space=vmem, size = 0x400, scoped, tag = 'input window, operand 5']
    #allocation13 [shape = 's32[2]{0}', space=sflag, size = 0x8, scoped, tag = 'scoped memory for tpu_custom_call.1']
    #allocation14 [shape = 'u8[1024]{0}', space=vmem, size = 0x400, scoped, tag = 'input window, operand 6']
    #allocation15 [shape = 'u8[1024]{0}', space=vmem, size = 0x400, scoped, tag = 'input window, operand 7']
    #allocation16 [shape = 's32[2]{0}', space=sflag, size = 0x8, scoped, tag = 'scoped memory for tpu_custom_call.1']
    #allocation17 [shape = 'u8[131072]{0}', space=vmem, size = 0x20000, scoped, tag = 'input window, operand 8']
    #allocation18 [shape = 'u8[2048]{0}', space=vmem, size = 0x800, scoped, tag = 'input window, operand 9']
    #allocation19 [shape = 's32[2]{0}', space=sflag, size = 0x8, scoped, tag = 'scoped memory for tpu_custom_call.1']
    #allocation20 [shape = 'u8[131072]{0}', space=vmem, size = 0x20000, scoped, tag = 'input window, operand 10']
    #allocation21 [shape = 'u8[1024]{0}', space=vmem, size = 0x400, scoped, tag = 'input window, operand 11']
    #allocation22 [shape = 's32[2]{0}', space=sflag, size = 0x8, scoped, tag = 'scoped memory for tpu_custom_call.1']
    #allocation23 [shape = 'u8[32768]{0}', space=vmem, size = 0x8000, scoped, tag = 'output window, operand 0, single buffered']
    %17 = vsyncpa [#allocation4], 0
    %18 = vsyncpa [#allocation7], 0
    %s19 = scalar_lea.sflag [#allocation7], 1
    %20 = vsyncpa %s19, 0
    %21 = vsyncpa [#allocation10], 0
    %s22 = scalar_lea.sflag [#allocation10], 1
    %23 = vsyncpa %s22, 0
    %24 = vsyncpa [#allocation13], 0
    %s25 = scalar_lea.sflag [#allocation13], 1
    %26 = vsyncpa %s25, 0
    %27 = vsyncpa [#allocation16], 0
    %s28 = scalar_lea.sflag [#allocation16], 1
    %29 = vsyncpa %s28, 0
    %30 = vsyncpa [#allocation19], 0
    %s31 = scalar_lea.sflag [#allocation19], 1
    %32 = vsyncpa %s31, 0
    %33 = vsyncpa [#allocation22], 0
    %s34 = scalar_lea.sflag [#allocation22], 1
    %35 = vsyncpa %s34, 0
    %36 = vsyncpa [#allocation5], 0
    loop: start=0, step=1, limit=4
    $region2: #{tpu_custom_call.1} parent=1 // loop_pre_header
      _
    $region3: #{tpu_custom_call.1} parent=1 // loop_header
      %s38 = sphi 0, %s42
      %p39 = scmp.ge.s32.totalorder %s38, 4
      %s45 = sphi 0, %s57
      %s46 = sphi 0, %s53
      %s47 = sphi 0, %s45
      %s48 = sphi 0, %s46
      %s49 = sphi 0, %s47
      %s50 = sphi 0, %s48
      %s60 = sphi 0, %s62
      %s63 = sphi 0, %s60
      %s64 = sphi 0, %s63
      %s80 = sphi 0, %s64
      %s86 = sphi 0, %s88
      %s89 = sphi 0, %s86
      %s90 = sphi 0, %s89
      %s106 = sphi 0, %s90
      %s112 = sphi 0, %s114
      %s115 = sphi 0, %s112
      %s116 = sphi 0, %s115
      %s132 = sphi 0, %s116
      %s138 = sphi 0, %s140
      %s141 = sphi 0, %s138
      %s142 = sphi 0, %s141
      %s158 = sphi 0, %s142
      %s164 = sphi 0, %s166
      %s167 = sphi 0, %s164
      %s168 = sphi 0, %s167
      %s184 = sphi 0, %s168
      %s190 = sphi 0, %s192
      %s193 = sphi 0, %s190
      %s194 = sphi 0, %s193
      %s210 = sphi 0, %s194
      %s216 = sphi 0, %s218
      %s219 = sphi 0, %s216
      %s220 = sphi 0, %s219
      %s236 = sphi 0, %s220
      %s242 = sphi 0, %s244
      %s245 = sphi 0, %s242
      %s246 = sphi 0, %s245
      %s262 = sphi 0, %s246
      %s268 = sphi 0, %s270
      %s271 = sphi 0, %s268
      %s272 = sphi 0, %s271
      %s288 = sphi 0, %s272
      %s294 = sphi 0, %s296
      %s297 = sphi 0, %s294
      %s298 = sphi 0, %s297
      %s314 = sphi 0, %s298
      %s320 = sphi 0, %s322
      %s323 = sphi 0, %s320
      %s324 = sphi 0, %s323
      %s340 = sphi 0, %s324
      %s346 = sphi 0, %s348
      %s349 = sphi 0, %s346
      %s350 = sphi 0, %s349
      %s366 = sphi 0, %s350
      %s372 = sphi 0, %s374
      %s375 = sphi 0, %s372
      %s376 = sphi 0, %s375
      %s392 = sphi 0, %s376
    $region4: #{tpu_custom_call.1} parent=1 // loop_header_branch
      %41 = sbr.rel (%p39) target = $region8
    $region5: #{tpu_custom_call.1} parent=1 // loop_body
      %s43 = ssub.s32 %s38, 1
      %s44 = ssub.s32 %s38, 2
      %s51 = sadd.s32 1, %s46
      %p52 = scmp.ge.s32.totalorder %s51, 2
      %s53 = scalar_select %p52, 0, %s51
      %s54 = sadd.s32 1, %s45
      %s55 = scalar_select %p52, %s54, %s45
      %p56 = scmp.ge.s32.totalorder %s55, 1
      %s57 = scalar_select %p56, 0, %s55
      %s58 = ssub.s32 %s45, %s57
      %p59 = scmp.eq.s32.totalorder %s58, 0
      %s61 = sadd.s32 %s60, 1
      %s62 = scalar_select %p59, %s60, %s61
      %p65 = pneg %p59
      %p66 = scmp.eq.s32.totalorder %s38, 1
      %p67 = por %p65, %p66
      %p68 = scmp.ne.s32.totalorder %s60, %s63
      %p69 = scmp.eq.s32.totalorder %s38, 0
      %p70 = por %p68, %p69
      %p71 = scmp.ne.s32.totalorder %s60, %s63
      %p72 = scmp.eq.s32.totalorder %s43, 1
      %p73 = por %p71, %p72
      %p74 = scmp.ne.s32.totalorder %s63, %s64
      %p75 = scmp.eq.s32.totalorder %s43, 0
      %p76 = por %p74, %p75
      %p77 = scmp.ne.s32.totalorder %s63, %s64
      %p78 = scmp.eq.s32.totalorder %s44, 1
      %p79 = por %p77, %p78
      %p81 = scmp.ne.s32.totalorder %s64, %s80
      %p82 = scmp.eq.s32.totalorder %s44, 0
      %p83 = por %p81, %p82
      %s84 = ssub.s32 %s46, %s53
      %p85 = scmp.eq.s32.totalorder %s84, 0
      %s87 = sadd.s32 %s86, 1
      %s88 = scalar_select %p85, %s86, %s87
      %p91 = pneg %p85
      %p92 = scmp.eq.s32.totalorder %s38, 1
      %p93 = por %p91, %p92
      %p94 = scmp.ne.s32.totalorder %s86, %s89
      %p95 = scmp.eq.s32.totalorder %s38, 0
      %p96 = por %p94, %p95
      %p97 = scmp.ne.s32.totalorder %s86, %s89
      %p98 = scmp.eq.s32.totalorder %s43, 1
      %p99 = por %p97, %p98
      %p100 = scmp.ne.s32.totalorder %s89, %s90
      %p101 = scmp.eq.s32.totalorder %s43, 0
      %p102 = por %p100, %p101
      %p103 = scmp.ne.s32.totalorder %s89, %s90
      %p104 = scmp.eq.s32.totalorder %s44, 1
      %p105 = por %p103, %p104
      %p107 = scmp.ne.s32.totalorder %s90, %s106
      %p108 = scmp.eq.s32.totalorder %s44, 0
      %p109 = por %p107, %p108
      %s110 = ssub.s32 %s46, %s53
      %p111 = scmp.eq.s32.totalorder %s110, 0
      %s113 = sadd.s32 %s112, 1
      %s114 = scalar_select %p111, %s112, %s113
      %p117 = pneg %p111
      %p118 = scmp.eq.s32.totalorder %s38, 1
      %p119 = por %p117, %p118
      %p120 = scmp.ne.s32.totalorder %s112, %s115
      %p121 = scmp.eq.s32.totalorder %s38, 0
      %p122 = por %p120, %p121
      %p123 = scmp.ne.s32.totalorder %s112, %s115
      %p124 = scmp.eq.s32.totalorder %s43, 1
      %p125 = por %p123, %p124
      %p126 = scmp.ne.s32.totalorder %s115, %s116
      %p127 = scmp.eq.s32.totalorder %s43, 0
      %p128 = por %p126, %p127
      %p129 = scmp.ne.s32.totalorder %s115, %s116
      %p130 = scmp.eq.s32.totalorder %s44, 1
      %p131 = por %p129, %p130
      %p133 = scmp.ne.s32.totalorder %s116, %s132
      %p134 = scmp.eq.s32.totalorder %s44, 0
      %p135 = por %p133, %p134
      %s136 = ssub.s32 %s46, %s53
      %p137 = scmp.eq.s32.totalorder %s136, 0
      %s139 = sadd.s32 %s138, 1
      %s140 = scalar_select %p137, %s138, %s139
      %p143 = pneg %p137
      %p144 = scmp.eq.s32.totalorder %s38, 1
      %p145 = por %p143, %p144
      %p146 = scmp.ne.s32.totalorder %s138, %s141
      %p147 = scmp.eq.s32.totalorder %s38, 0
      %p148 = por %p146, %p147
      %p149 = scmp.ne.s32.totalorder %s138, %s141
      %p150 = scmp.eq.s32.totalorder %s43, 1
      %p151 = por %p149, %p150
      %p152 = scmp.ne.s32.totalorder %s141, %s142
      %p153 = scmp.eq.s32.totalorder %s43, 0
      %p154 = por %p152, %p153
      %p155 = scmp.ne.s32.totalorder %s141, %s142
      %p156 = scmp.eq.s32.totalorder %s44, 1
      %p157 = por %p155, %p156
      %p159 = scmp.ne.s32.totalorder %s142, %s158
      %p160 = scmp.eq.s32.totalorder %s44, 0
      %p161 = por %p159, %p160
      %s162 = ssub.s32 %s46, %s53
      %p163 = scmp.eq.s32.totalorder %s162, 0
      %s165 = sadd.s32 %s164, 1
      %s166 = scalar_select %p163, %s164, %s165
      %p169 = pneg %p163
      %p170 = scmp.eq.s32.totalorder %s38, 1
      %p171 = por %p169, %p170
      %p172 = scmp.ne.s32.totalorder %s164, %s167
      %p173 = scmp.eq.s32.totalorder %s38, 0
      %p174 = por %p172, %p173
      %p175 = scmp.ne.s32.totalorder %s164, %s167
      %p176 = scmp.eq.s32.totalorder %s43, 1
      %p177 = por %p175, %p176
      %p178 = scmp.ne.s32.totalorder %s167, %s168
      %p179 = scmp.eq.s32.totalorder %s43, 0
      %p180 = por %p178, %p179
      %p181 = scmp.ne.s32.totalorder %s167, %s168
      %p182 = scmp.eq.s32.totalorder %s44, 1
      %p183 = por %p181, %p182
      %p185 = scmp.ne.s32.totalorder %s168, %s184
      %p186 = scmp.eq.s32.totalorder %s44, 0
      %p187 = por %p185, %p186
      %s188 = ssub.s32 %s46, %s53
      %p189 = scmp.eq.s32.totalorder %s188, 0
      %s191 = sadd.s32 %s190, 1
      %s192 = scalar_select %p189, %s190, %s191
      %p195 = pneg %p189
      %p196 = scmp.eq.s32.totalorder %s38, 1
      %p197 = por %p195, %p196
      %p198 = scmp.ne.s32.totalorder %s190, %s193
      %p199 = scmp.eq.s32.totalorder %s38, 0
      %p200 = por %p198, %p199
      %p201 = scmp.ne.s32.totalorder %s190, %s193
      %p202 = scmp.eq.s32.totalorder %s43, 1
      %p203 = por %p201, %p202
      %p204 = scmp.ne.s32.totalorder %s193, %s194
      %p205 = scmp.eq.s32.totalorder %s43, 0
      %p206 = por %p204, %p205
      %p207 = scmp.ne.s32.totalorder %s193, %s194
      %p208 = scmp.eq.s32.totalorder %s44, 1
      %p209 = por %p207, %p208
      %p211 = scmp.ne.s32.totalorder %s194, %s210
      %p212 = scmp.eq.s32.totalorder %s44, 0
      %p213 = por %p211, %p212
      %s214 = ssub.s32 %s46, %s53
      %p215 = scmp.eq.s32.totalorder %s214, 0
      %s217 = sadd.s32 %s216, 1
      %s218 = scalar_select %p215, %s216, %s217
      %p221 = pneg %p215
      %p222 = scmp.eq.s32.totalorder %s38, 1
      %p223 = por %p221, %p222
      %p224 = scmp.ne.s32.totalorder %s216, %s219
      %p225 = scmp.eq.s32.totalorder %s38, 0
      %p226 = por %p224, %p225
      %p227 = scmp.ne.s32.totalorder %s216, %s219
      %p228 = scmp.eq.s32.totalorder %s43, 1
      %p229 = por %p227, %p228
      %p230 = scmp.ne.s32.totalorder %s219, %s220
      %p231 = scmp.eq.s32.totalorder %s43, 0
      %p232 = por %p230, %p231
      %p233 = scmp.ne.s32.totalorder %s219, %s220
      %p234 = scmp.eq.s32.totalorder %s44, 1
      %p235 = por %p233, %p234
      %p237 = scmp.ne.s32.totalorder %s220, %s236
      %p238 = scmp.eq.s32.totalorder %s44, 0
      %p239 = por %p237, %p238
      %s240 = ssub.s32 %s46, %s53
      %p241 = scmp.eq.s32.totalorder %s240, 0
      %s243 = sadd.s32 %s242, 1
      %s244 = scalar_select %p241, %s242, %s243
      %p247 = pneg %p241
      %p248 = scmp.eq.s32.totalorder %s38, 1
      %p249 = por %p247, %p248
      %p250 = scmp.ne.s32.totalorder %s242, %s245
      %p251 = scmp.eq.s32.totalorder %s38, 0
      %p252 = por %p250, %p251
      %p253 = scmp.ne.s32.totalorder %s242, %s245
      %p254 = scmp.eq.s32.totalorder %s43, 1
      %p255 = por %p253, %p254
      %p256 = scmp.ne.s32.totalorder %s245, %s246
      %p257 = scmp.eq.s32.totalorder %s43, 0
      %p258 = por %p256, %p257
      %p259 = scmp.ne.s32.totalorder %s245, %s246
      %p260 = scmp.eq.s32.totalorder %s44, 1
      %p261 = por %p259, %p260
      %p263 = scmp.ne.s32.totalorder %s246, %s262
      %p264 = scmp.eq.s32.totalorder %s44, 0
      %p265 = por %p263, %p264
      %s266 = ssub.s32 %s46, %s53
      %p267 = scmp.eq.s32.totalorder %s266, 0
      %s269 = sadd.s32 %s268, 1
      %s270 = scalar_select %p267, %s268, %s269
      %p273 = pneg %p267
      %p274 = scmp.eq.s32.totalorder %s38, 1
      %p275 = por %p273, %p274
      %p276 = scmp.ne.s32.totalorder %s268, %s271
      %p277 = scmp.eq.s32.totalorder %s38, 0
      %p278 = por %p276, %p277
      %p279 = scmp.ne.s32.totalorder %s268, %s271
      %p280 = scmp.eq.s32.totalorder %s43, 1
      %p281 = por %p279, %p280
      %p282 = scmp.ne.s32.totalorder %s271, %s272
      %p283 = scmp.eq.s32.totalorder %s43, 0
      %p284 = por %p282, %p283
      %p285 = scmp.ne.s32.totalorder %s271, %s272
      %p286 = scmp.eq.s32.totalorder %s44, 1
      %p287 = por %p285, %p286
      %p289 = scmp.ne.s32.totalorder %s272, %s288
      %p290 = scmp.eq.s32.totalorder %s44, 0
      %p291 = por %p289, %p290
      %s292 = ssub.s32 %s46, %s53
      %p293 = scmp.eq.s32.totalorder %s292, 0
      %s295 = sadd.s32 %s294, 1
      %s296 = scalar_select %p293, %s294, %s295
      %p299 = pneg %p293
      %p300 = scmp.eq.s32.totalorder %s38, 1
      %p301 = por %p299, %p300
      %p302 = scmp.ne.s32.totalorder %s294, %s297
      %p303 = scmp.eq.s32.totalorder %s38, 0
      %p304 = por %p302, %p303
      %p305 = scmp.ne.s32.totalorder %s294, %s297
      %p306 = scmp.eq.s32.totalorder %s43, 1
      %p307 = por %p305, %p306
      %p308 = scmp.ne.s32.totalorder %s297, %s298
      %p309 = scmp.eq.s32.totalorder %s43, 0
      %p310 = por %p308, %p309
      %p311 = scmp.ne.s32.totalorder %s297, %s298
      %p312 = scmp.eq.s32.totalorder %s44, 1
      %p313 = por %p311, %p312
      %p315 = scmp.ne.s32.totalorder %s298, %s314
      %p316 = scmp.eq.s32.totalorder %s44, 0
      %p317 = por %p315, %p316
      %s318 = ssub.s32 %s46, %s53
      %p319 = scmp.eq.s32.totalorder %s318, 0
      %s321 = sadd.s32 %s320, 1
      %s322 = scalar_select %p319, %s320, %s321
      %p325 = pneg %p319
      %p326 = scmp.eq.s32.totalorder %s38, 1
      %p327 = por %p325, %p326
      %p328 = scmp.ne.s32.totalorder %s320, %s323
      %p329 = scmp.eq.s32.totalorder %s38, 0
      %p330 = por %p328, %p329
      %p331 = scmp.ne.s32.totalorder %s320, %s323
      %p332 = scmp.eq.s32.totalorder %s43, 1
      %p333 = por %p331, %p332
      %p334 = scmp.ne.s32.totalorder %s323, %s324
      %p335 = scmp.eq.s32.totalorder %s43, 0
      %p336 = por %p334, %p335
      %p337 = scmp.ne.s32.totalorder %s323, %s324
      %p338 = scmp.eq.s32.totalorder %s44, 1
      %p339 = por %p337, %p338
      %p341 = scmp.ne.s32.totalorder %s324, %s340
      %p342 = scmp.eq.s32.totalorder %s44, 0
      %p343 = por %p341, %p342
      %s344 = ssub.s32 %s46, %s53
      %p345 = scmp.eq.s32.totalorder %s344, 0
      %s347 = sadd.s32 %s346, 1
      %s348 = scalar_select %p345, %s346, %s347
      %p351 = pneg %p345
      %p352 = scmp.eq.s32.totalorder %s38, 1
      %p353 = por %p351, %p352
      %p354 = scmp.ne.s32.totalorder %s346, %s349
      %p355 = scmp.eq.s32.totalorder %s38, 0
      %p356 = por %p354, %p355
      %p357 = scmp.ne.s32.totalorder %s346, %s349
      %p358 = scmp.eq.s32.totalorder %s43, 1
      %p359 = por %p357, %p358
      %p360 = scmp.ne.s32.totalorder %s349, %s350
      %p361 = scmp.eq.s32.totalorder %s43, 0
      %p362 = por %p360, %p361
      %p363 = scmp.ne.s32.totalorder %s349, %s350
      %p364 = scmp.eq.s32.totalorder %s44, 1
      %p365 = por %p363, %p364
      %p367 = scmp.ne.s32.totalorder %s350, %s366
      %p368 = scmp.eq.s32.totalorder %s44, 0
      %p369 = por %p367, %p368
      %s370 = ssub.s32 %s45, %s57
      %p371 = scmp.eq.s32.totalorder %s370, 0
      %s373 = sadd.s32 %s372, 1
      %s374 = scalar_select %p371, %s372, %s373
      %p377 = pneg %p371
      %p378 = scmp.eq.s32.totalorder %s38, 1
      %p379 = por %p377, %p378
      %p380 = scmp.ne.s32.totalorder %s372, %s375
      %p381 = scmp.eq.s32.totalorder %s38, 0
      %p382 = por %p380, %p381
      %p383 = scmp.ne.s32.totalorder %s372, %s375
      %p384 = scmp.eq.s32.totalorder %s43, 1
      %p385 = por %p383, %p384
      %p386 = scmp.ne.s32.totalorder %s375, %s376
      %p387 = scmp.eq.s32.totalorder %s43, 0
      %p388 = por %p386, %p387
      %p389 = scmp.ne.s32.totalorder %s375, %s376
      %p390 = scmp.eq.s32.totalorder %s44, 1
      %p391 = por %p389, %p390
      %p393 = scmp.ne.s32.totalorder %s376, %s392
      %p394 = scmp.eq.s32.totalorder %s44, 0
      %p395 = por %p393, %p394
      %p396 = scmp.le.s32.totalorder 1, %s38
      %p397 = scmp.lt.s32.totalorder %s38, 3
      %p398 = pnand %p396, %p397
      %p399 = pneg %p398
      // Predicated region
      $region9: #{tpu_custom_call.1} parent=5 // pred_check
        _
      $region10: #{tpu_custom_call.1} parent=5 // pred_check_branch
        %401 = sbr.rel (%p398) target = $region12
      $region11: #{tpu_custom_call.1} parent=5 // pred_region
        %s402 = ssub.s32 %s38, 1
        // Predicated region
        $region13: #{tpu_custom_call.1} parent=11 // pred_check
          %p403 = pneg %p76
        $region14: #{tpu_custom_call.1} parent=11 // pred_check_branch
          %405 = sbr.rel (%p403) target = $region16
        $region15: #{tpu_custom_call.1} parent=11 // pred_region
          %s406 = smul.u32 8, %s47
          %s408 = ssub.s32 1024, 1024
          %409 = vsyncadd [#allocation4], %s408
          %s410 = smul.addr %s406, 128
          %s411 = scalar_lea.hbm %s0, %s410
          %s412 = sshll.u32 [#allocation3], 4
          %s413 = int_to_ptr.vmem [resolvable:$true] %s412
          %418 = dma.hbm_to_vmem [thread:$0]  %s411, 1024, %s413, [#allocation4], 128, 128, 8
        $region16: #{tpu_custom_call.1} parent=11 // pred_fallthru
          _
      $region12: #{tpu_custom_call.1} parent=5 // pred_fallthru
        _
      %p419 = scmp.lt.s32.totalorder %s38, 2
      // Predicated region
      $region17: #{tpu_custom_call.1} parent=5 // pred_check
        %p420 = pneg %p419
      $region18: #{tpu_custom_call.1} parent=5 // pred_check_branch
        %422 = sbr.rel (%p420) target = $region20
      $region19: #{tpu_custom_call.1} parent=5 // pred_region
        // Predicated region
        $region21: #{tpu_custom_call.1} parent=19 // pred_check
          %p423 = pneg %p96
        $region22: #{tpu_custom_call.1} parent=19 // pred_check_branch
          %425 = sbr.rel (%p423) target = $region24
        $region23: #{tpu_custom_call.1} parent=19 // pred_region
          %s426 = sand.u32 %s38, 1
          %s427 = scalar_lea.sflag [#allocation7], %s426
          %s428 = sand.u32 %s86, 1
          %s429 = scalar_lea.vmem [#allocation6], %s428
          %s431 = ssub.s32 16, 16
          %432 = vsyncadd %s427, %s431
          %s433 = smul.addr %s46, 16
          %s434 = scalar_lea.hbm %s1, %s433
          %s436 = sshll.u32 %s429, 4
          %s437 = int_to_ptr.vmem [resolvable:$true] %s436
          %439 = dma.hbm_to_vmem [thread:$0]  %s434, 16, %s437, %s427
        $region24: #{tpu_custom_call.1} parent=19 // pred_fallthru
          _
        // Predicated region
        $region25: #{tpu_custom_call.1} parent=19 // pred_check
          %p440 = pneg %p122
        $region26: #{tpu_custom_call.1} parent=19 // pred_check_branch
          %442 = sbr.rel (%p440) target = $region28
        $region27: #{tpu_custom_call.1} parent=19 // pred_region
          %s443 = sand.u32 %s38, 1
          %s444 = scalar_lea.sflag [#allocation7], %s443
          %s445 = sand.u32 %s112, 1
          %s446 = scalar_lea.vmem [#allocation8], %s445
          %s448 = ssub.s32 16, 16
          %449 = vsyncadd %s444, %s448
          %s450 = smul.addr %s46, 16
          %s451 = scalar_lea.hbm %s2, %s450
          %s453 = sshll.u32 %s446, 4
          %s454 = int_to_ptr.vmem [resolvable:$true] %s453
          %456 = dma.hbm_to_vmem [thread:$0]  %s451, 16, %s454, %s444
        $region28: #{tpu_custom_call.1} parent=19 // pred_fallthru
          _
        // Predicated region
        $region29: #{tpu_custom_call.1} parent=19 // pred_check
          %p457 = pneg %p148
        $region30: #{tpu_custom_call.1} parent=19 // pred_check_branch
          %459 = sbr.rel (%p457) target = $region32
        $region31: #{tpu_custom_call.1} parent=19 // pred_region
          %s460 = sand.u32 %s38, 1
          %s461 = scalar_lea.sflag [#allocation10], %s460
          %s462 = sand.u32 %s138, 1
          %s463 = smul.addr %s462, 192
          %s464 = scalar_lea.vmem [#allocation9], %s463
          %s466 = ssub.s32 3072, 3072
          %467 = vsyncadd %s461, %s466
          %s468 = smul.addr %s46, 48
          %s469 = smul.addr %s468, 64
          %s470 = scalar_lea.hbm %s3, %s469
          %s471 = sshll.u32 %s464, 4
          %s472 = int_to_ptr.vmem [resolvable:$true] %s471
          %477 = dma.hbm_to_vmem [thread:$0]  %s470, 3072, %s472, %s461, 192, 192, 12
        $region32: #{tpu_custom_call.1} parent=19 // pred_fallthru
          _
        // Predicated region
        $region33: #{tpu_custom_call.1} parent=19 // pred_check
          %p478 = pneg %p174
        $region34: #{tpu_custom_call.1} parent=19 // pred_check_branch
          %480 = sbr.rel (%p478) target = $region36
        $region35: #{tpu_custom_call.1} parent=19 // pred_region
          %s481 = sand.u32 %s38, 1
          %s482 = scalar_lea.sflag [#allocation10], %s481
          %s483 = sand.u32 %s164, 1
          %s484 = smul.addr %s483, 64
          %s485 = scalar_lea.vmem [#allocation11], %s484
          %s487 = ssub.s32 1024, 1024
          %488 = vsyncadd %s482, %s487
          %s489 = smul.addr %s46, 16
          %s490 = smul.addr %s489, 64
          %s491 = scalar_lea.hbm %s4, %s490
          %s492 = sshll.u32 %s485, 4
          %s493 = int_to_ptr.vmem [resolvable:$true] %s492
          %498 = dma.hbm_to_vmem [thread:$0]  %s491, 1024, %s493, %s482, 64, 64, 4
        $region36: #{tpu_custom_call.1} parent=19 // pred_fallthru
          _
        // Predicated region
        $region37: #{tpu_custom_call.1} parent=19 // pred_check
          %p499 = pneg %p200
        $region38: #{tpu_custom_call.1} parent=19 // pred_check_branch
          %501 = sbr.rel (%p499) target = $region40
        $region39: #{tpu_custom_call.1} parent=19 // pred_region
          %s502 = sand.u32 %s38, 1
          %s503 = scalar_lea.sflag [#allocation13], %s502
          %s504 = sand.u32 %s190, 1
          %s505 = scalar_lea.vmem [#allocation12], %s504
          %s507 = ssub.s32 16, 16
          %508 = vsyncadd %s503, %s507
          %s509 = smul.addr %s46, 16
          %s510 = scalar_lea.hbm %s5, %s509
          %s512 = sshll.u32 %s505, 4
          %s513 = int_to_ptr.vmem [resolvable:$true] %s512
          %515 = dma.hbm_to_vmem [thread:$0]  %s510, 16, %s513, %s503
        $region40: #{tpu_custom_call.1} parent=19 // pred_fallthru
          _
        // Predicated region
        $region41: #{tpu_custom_call.1} parent=19 // pred_check
          %p516 = pneg %p226
        $region42: #{tpu_custom_call.1} parent=19 // pred_check_branch
          %518 = sbr.rel (%p516) target = $region44
        $region43: #{tpu_custom_call.1} parent=19 // pred_region
          %s519 = sand.u32 %s38, 1
          %s520 = scalar_lea.sflag [#allocation13], %s519
          %s521 = sand.u32 %s216, 1
          %s522 = scalar_lea.vmem [#allocation14], %s521
          %s524 = ssub.s32 16, 16
          %525 = vsyncadd %s520, %s524
          %s526 = smul.addr %s46, 16
          %s527 = scalar_lea.hbm %s6, %s526
          %s529 = sshll.u32 %s522, 4
          %s530 = int_to_ptr.vmem [resolvable:$true] %s529
          %532 = dma.hbm_to_vmem [thread:$0]  %s527, 16, %s530, %s520
        $region44: #{tpu_custom_call.1} parent=19 // pred_fallthru
          _
        // Predicated region
        $region45: #{tpu_custom_call.1} parent=19 // pred_check
          %p533 = pneg %p252
        $region46: #{tpu_custom_call.1} parent=19 // pred_check_branch
          %535 = sbr.rel (%p533) target = $region48
        $region47: #{tpu_custom_call.1} parent=19 // pred_region
          %s536 = sand.u32 %s38, 1
          %s537 = scalar_lea.sflag [#allocation16], %s536
          %s538 = sand.u32 %s242, 1
          %s539 = scalar_lea.vmem [#allocation15], %s538
          %s541 = ssub.s32 16, 16
          %542 = vsyncadd %s537, %s541
          %s543 = smul.addr %s46, 16
          %s544 = scalar_lea.hbm %s7, %s543
          %s546 = sshll.u32 %s539, 4
          %s547 = int_to_ptr.vmem [resolvable:$true] %s546
          %549 = dma.hbm_to_vmem [thread:$0]  %s544, 16, %s547, %s537
        $region48: #{tpu_custom_call.1} parent=19 // pred_fallthru
          _
        // Predicated region
        $region49: #{tpu_custom_call.1} parent=19 // pred_check
          %p550 = pneg %p278
        $region50: #{tpu_custom_call.1} parent=19 // pred_check_branch
          %552 = sbr.rel (%p550) target = $region52
        $region51: #{tpu_custom_call.1} parent=19 // pred_region
          %s553 = sand.u32 %s38, 1
          %s554 = scalar_lea.sflag [#allocation16], %s553
          %s555 = sand.u32 %s268, 1
          %s556 = smul.addr %s555, 128
          %s557 = scalar_lea.vmem [#allocation17], %s556
          %s559 = ssub.s32 2048, 2048
          %560 = vsyncadd %s554, %s559
          %s561 = smul.addr %s46, 32
          %s562 = smul.addr %s561, 64
          %s563 = scalar_lea.hbm %s8, %s562
          %s564 = sshll.u32 %s557, 4
          %s565 = int_to_ptr.vmem [resolvable:$true] %s564
          %570 = dma.hbm_to_vmem [thread:$0]  %s563, 2048, %s565, %s554, 128, 128, 8
        $region52: #{tpu_custom_call.1} parent=19 // pred_fallthru
          _
        // Predicated region
        $region53: #{tpu_custom_call.1} parent=19 // pred_check
          %p571 = pneg %p304
        $region54: #{tpu_custom_call.1} parent=19 // pred_check_branch
          %573 = sbr.rel (%p571) target = $region56
        $region55: #{tpu_custom_call.1} parent=19 // pred_region
          %s574 = sand.u32 %s38, 1
          %s575 = scalar_lea.sflag [#allocation19], %s574
          %s576 = sand.u32 %s294, 1
          %s577 = smul.addr %s576, 2
          %s578 = scalar_lea.vmem [#allocation18], %s577
          %s580 = ssub.s32 32, 32
          %581 = vsyncadd %s575, %s580
          %s582 = smul.addr %s46, 2
          %s583 = smul.addr %s582, 16
          %s584 = scalar_lea.hbm %s9, %s583
          %s586 = sshll.u32 %s578, 4
          %s587 = int_to_ptr.vmem [resolvable:$true] %s586
          %589 = dma.hbm_to_vmem [thread:$0]  %s584, 32, %s587, %s575
        $region56: #{tpu_custom_call.1} parent=19 // pred_fallthru
          _
        // Predicated region
        $region57: #{tpu_custom_call.1} parent=19 // pred_check
          %p590 = pneg %p330
        $region58: #{tpu_custom_call.1} parent=19 // pred_check_branch
          %592 = sbr.rel (%p590) target = $region60
        $region59: #{tpu_custom_call.1} parent=19 // pred_region
          %s593 = sand.u32 %s38, 1
          %s594 = scalar_lea.sflag [#allocation19], %s593
          %s595 = sand.u32 %s320, 1
          %s596 = smul.addr %s595, 128
          %s597 = scalar_lea.vmem [#allocation20], %s596
          %s599 = ssub.s32 2048, 2048
          %600 = vsyncadd %s594, %s599
          %s601 = smul.addr %s46, 32
          %s602 = smul.addr %s601, 64
          %s603 = scalar_lea.hbm %s10, %s602
          %s604 = sshll.u32 %s597, 4
          %s605 = int_to_ptr.vmem [resolvable:$true] %s604
          %610 = dma.hbm_to_vmem [thread:$0]  %s603, 2048, %s605, %s594, 64, 64, 4
        $region60: #{tpu_custom_call.1} parent=19 // pred_fallthru
          _
        // Predicated region
        $region61: #{tpu_custom_call.1} parent=19 // pred_check
          %p611 = pneg %p356
        $region62: #{tpu_custom_call.1} parent=19 // pred_check_branch
          %613 = sbr.rel (%p611) target = $region64
        $region63: #{tpu_custom_call.1} parent=19 // pred_region
          %s614 = sand.u32 %s346, 1
          %s615 = scalar_lea.sflag [#allocation22], %s614
          %s616 = sand.u32 %s346, 1
          %s617 = scalar_lea.vmem [#allocation21], %s616
          %s619 = ssub.s32 16, 16
          %620 = vsyncadd %s615, %s619
          %s621 = smul.addr %s46, 16
          %s622 = scalar_lea.hbm %s11, %s621
          %s624 = sshll.u32 %s617, 4
          %s625 = int_to_ptr.vmem [resolvable:$true] %s624
          %627 = dma.hbm_to_vmem [thread:$0]  %s622, 16, %s625, %s615
        $region64: #{tpu_custom_call.1} parent=19 // pred_fallthru
          _
      $region20: #{tpu_custom_call.1} parent=5 // pred_fallthru
        _
      %p628 = scmp.le.s32.totalorder 1, %s38
      %p629 = scmp.lt.s32.totalorder %s38, 3
      %p630 = pnand %p628, %p629
      %p631 = pneg %p630
      // Predicated region
      $region65: #{tpu_custom_call.1} parent=5 // pred_check
        _
      $region66: #{tpu_custom_call.1} parent=5 // pred_check_branch
        %633 = sbr.rel (%p630) target = $region68
      $region67: #{tpu_custom_call.1} parent=5 // pred_region
        %s634 = ssub.s32 %s38, 1
        // Predicated region
        $region69: #{tpu_custom_call.1} parent=67 // pred_check
          %p635 = pneg %p76
        $region70: #{tpu_custom_call.1} parent=67 // pred_check_branch
          %637 = sbr.rel (%p635) target = $region72
        $region71: #{tpu_custom_call.1} parent=67 // pred_region
          %638 = dma.done [#allocation4], 1024
        $region72: #{tpu_custom_call.1} parent=67 // pred_fallthru
          _
        %s639 = sand.u32 %s43, 1
        %s640 = scalar_lea.sflag [#allocation7], %s639
        %s641 = sand.u32 %s89, 1
        %s642 = scalar_lea.vmem [#allocation6], %s641
        // Predicated region
        $region73: #{tpu_custom_call.1} parent=67 // pred_check
          %p643 = pneg %p102
        $region74: #{tpu_custom_call.1} parent=67 // pred_check_branch
          %645 = sbr.rel (%p643) target = $region76
        $region75: #{tpu_custom_call.1} parent=67 // pred_region
          %646 = dma.done %s640, 16
        $region76: #{tpu_custom_call.1} parent=67 // pred_fallthru
          _
        %s647 = sand.u32 %s43, 1
        %s648 = scalar_lea.sflag [#allocation7], %s647
        %s649 = sand.u32 %s115, 1
        %s650 = scalar_lea.vmem [#allocation8], %s649
        // Predicated region
        $region77: #{tpu_custom_call.1} parent=67 // pred_check
          %p651 = pneg %p128
        $region78: #{tpu_custom_call.1} parent=67 // pred_check_branch
          %653 = sbr.rel (%p651) target = $region80
        $region79: #{tpu_custom_call.1} parent=67 // pred_region
          %654 = dma.done %s648, 16
        $region80: #{tpu_custom_call.1} parent=67 // pred_fallthru
          _
        %s655 = sand.u32 %s43, 1
        %s656 = scalar_lea.sflag [#allocation10], %s655
        %s657 = sand.u32 %s141, 1
        %s658 = smul.addr %s657, 192
        %s659 = scalar_lea.vmem [#allocation9], %s658
        // Predicated region
        $region81: #{tpu_custom_call.1} parent=67 // pred_check
          %p660 = pneg %p154
        $region82: #{tpu_custom_call.1} parent=67 // pred_check_branch
          %662 = sbr.rel (%p660) target = $region84
        $region83: #{tpu_custom_call.1} parent=67 // pred_region
          %663 = dma.done %s656, 3072
        $region84: #{tpu_custom_call.1} parent=67 // pred_fallthru
          _
        %s664 = sand.u32 %s43, 1
        %s665 = scalar_lea.sflag [#allocation10], %s664
        %s666 = sand.u32 %s167, 1
        %s667 = smul.addr %s666, 64
        %s668 = scalar_lea.vmem [#allocation11], %s667
        // Predicated region
        $region85: #{tpu_custom_call.1} parent=67 // pred_check
          %p669 = pneg %p180
        $region86: #{tpu_custom_call.1} parent=67 // pred_check_branch
          %671 = sbr.rel (%p669) target = $region88
        $region87: #{tpu_custom_call.1} parent=67 // pred_region
          %672 = dma.done %s665, 1024
        $region88: #{tpu_custom_call.1} parent=67 // pred_fallthru
          _
        %s673 = sand.u32 %s43, 1
        %s674 = scalar_lea.sflag [#allocation13], %s673
        %s675 = sand.u32 %s193, 1
        %s676 = scalar_lea.vmem [#allocation12], %s675
        // Predicated region
        $region89: #{tpu_custom_call.1} parent=67 // pred_check
          %p677 = pneg %p206
        $region90: #{tpu_custom_call.1} parent=67 // pred_check_branch
          %679 = sbr.rel (%p677) target = $region92
        $region91: #{tpu_custom_call.1} parent=67 // pred_region
          %680 = dma.done %s674, 16
        $region92: #{tpu_custom_call.1} parent=67 // pred_fallthru
          _
        %s681 = sand.u32 %s43, 1
        %s682 = scalar_lea.sflag [#allocation13], %s681
        %s683 = sand.u32 %s219, 1
        %s684 = scalar_lea.vmem [#allocation14], %s683
        // Predicated region
        $region93: #{tpu_custom_call.1} parent=67 // pred_check
          %p685 = pneg %p232
        $region94: #{tpu_custom_call.1} parent=67 // pred_check_branch
          %687 = sbr.rel (%p685) target = $region96
        $region95: #{tpu_custom_call.1} parent=67 // pred_region
          %688 = dma.done %s682, 16
        $region96: #{tpu_custom_call.1} parent=67 // pred_fallthru
          _
        %s689 = sand.u32 %s43, 1
        %s690 = scalar_lea.sflag [#allocation16], %s689
        %s691 = sand.u32 %s245, 1
        %s692 = scalar_lea.vmem [#allocation15], %s691
        // Predicated region
        $region97: #{tpu_custom_call.1} parent=67 // pred_check
          %p693 = pneg %p258
        $region98: #{tpu_custom_call.1} parent=67 // pred_check_branch
          %695 = sbr.rel (%p693) target = $region100
        $region99: #{tpu_custom_call.1} parent=67 // pred_region
          %696 = dma.done %s690, 16
        $region100: #{tpu_custom_call.1} parent=67 // pred_fallthru
          _
        %s697 = sand.u32 %s43, 1
        %s698 = scalar_lea.sflag [#allocation16], %s697
        %s699 = sand.u32 %s271, 1
        %s700 = smul.addr %s699, 128
        %s701 = scalar_lea.vmem [#allocation17], %s700
        // Predicated region
        $region101: #{tpu_custom_call.1} parent=67 // pred_check
          %p702 = pneg %p284
        $region102: #{tpu_custom_call.1} parent=67 // pred_check_branch
          %704 = sbr.rel (%p702) target = $region104
        $region103: #{tpu_custom_call.1} parent=67 // pred_region
          %705 = dma.done %s698, 2048
        $region104: #{tpu_custom_call.1} parent=67 // pred_fallthru
          _
        %s706 = sand.u32 %s43, 1
        %s707 = scalar_lea.sflag [#allocation19], %s706
        %s708 = sand.u32 %s297, 1
        %s709 = smul.addr %s708, 2
        %s710 = scalar_lea.vmem [#allocation18], %s709
        // Predicated region
        $region105: #{tpu_custom_call.1} parent=67 // pred_check
          %p711 = pneg %p310
        $region106: #{tpu_custom_call.1} parent=67 // pred_check_branch
          %713 = sbr.rel (%p711) target = $region108
        $region107: #{tpu_custom_call.1} parent=67 // pred_region
          %714 = dma.done %s707, 32
        $region108: #{tpu_custom_call.1} parent=67 // pred_fallthru
          _
        %s715 = sand.u32 %s43, 1
        %s716 = scalar_lea.sflag [#allocation19], %s715
        %s717 = sand.u32 %s323, 1
        %s718 = smul.addr %s717, 128
        %s719 = scalar_lea.vmem [#allocation20], %s718
        // Predicated region
        $region109: #{tpu_custom_call.1} parent=67 // pred_check
          %p720 = pneg %p336
        $region110: #{tpu_custom_call.1} parent=67 // pred_check_branch
          %722 = sbr.rel (%p720) target = $region112
        $region111: #{tpu_custom_call.1} parent=67 // pred_region
          %723 = dma.done %s716, 2048
        $region112: #{tpu_custom_call.1} parent=67 // pred_fallthru
          _
        %s724 = sand.u32 %s349, 1
        %s725 = scalar_lea.sflag [#allocation22], %s724
        %s726 = sand.u32 %s349, 1
        %s727 = scalar_lea.vmem [#allocation21], %s726
        // Predicated region
        $region113: #{tpu_custom_call.1} parent=67 // pred_check
          %p728 = pneg %p362
        $region114: #{tpu_custom_call.1} parent=67 // pred_check_branch
          %730 = sbr.rel (%p728) target = $region116
        $region115: #{tpu_custom_call.1} parent=67 // pred_region
          %731 = dma.done %s725, 16
        $region116: #{tpu_custom_call.1} parent=67 // pred_fallthru
          _
        %p732 = pneg %p76
        %p733 = pneg %p73
        %s734 = sand.u32 %s43, 1
        %s735 = scalar_lea.sflag [#allocation7], %s734
        %s736 = sand.u32 %s89, 1
        %s737 = scalar_lea.vmem [#allocation6], %s736
        %p738 = pneg %p102
        %p739 = pneg %p99
        %s740 = sand.u32 %s43, 1
        %s741 = scalar_lea.sflag [#allocation7], %s740
        %s742 = sand.u32 %s115, 1
        %s743 = scalar_lea.vmem [#allocation8], %s742
        %p744 = pneg %p128
        %p745 = pneg %p125
        %s746 = sand.u32 %s43, 1
        %s747 = scalar_lea.sflag [#allocation10], %s746
        %s748 = sand.u32 %s141, 1
        %s749 = smul.addr %s748, 192
        %s750 = scalar_lea.vmem [#allocation9], %s749
        %p751 = pneg %p154
        %p752 = pneg %p151
        %s753 = sand.u32 %s43, 1
        %s754 = scalar_lea.sflag [#allocation10], %s753
        %s755 = sand.u32 %s167, 1
        %s756 = smul.addr %s755, 64
        %s757 = scalar_lea.vmem [#allocation11], %s756
        %p758 = pneg %p180
        %p759 = pneg %p177
        %s760 = sand.u32 %s43, 1
        %s761 = scalar_lea.sflag [#allocation13], %s760
        %s762 = sand.u32 %s193, 1
        %s763 = scalar_lea.vmem [#allocation12], %s762
        %p764 = pneg %p206
        %p765 = pneg %p203
        %s766 = sand.u32 %s43, 1
        %s767 = scalar_lea.sflag [#allocation13], %s766
        %s768 = sand.u32 %s219, 1
        %s769 = scalar_lea.vmem [#allocation14], %s768
        %p770 = pneg %p232
        %p771 = pneg %p229
        %s772 = sand.u32 %s43, 1
        %s773 = scalar_lea.sflag [#allocation16], %s772
        %s774 = sand.u32 %s245, 1
        %s775 = scalar_lea.vmem [#allocation15], %s774
        %p776 = pneg %p258
        %p777 = pneg %p255
        %s778 = sand.u32 %s43, 1
        %s779 = scalar_lea.sflag [#allocation16], %s778
        %s780 = sand.u32 %s271, 1
        %s781 = smul.addr %s780, 128
        %s782 = scalar_lea.vmem [#allocation17], %s781
        %p783 = pneg %p284
        %p784 = pneg %p281
        %s785 = sand.u32 %s43, 1
        %s786 = scalar_lea.sflag [#allocation19], %s785
        %s787 = sand.u32 %s297, 1
        %s788 = smul.addr %s787, 2
        %s789 = scalar_lea.vmem [#allocation18], %s788
        %p790 = pneg %p310
        %p791 = pneg %p307
        %s792 = sand.u32 %s43, 1
        %s793 = scalar_lea.sflag [#allocation19], %s792
        %s794 = sand.u32 %s323, 1
        %s795 = smul.addr %s794, 128
        %s796 = scalar_lea.vmem [#allocation20], %s795
        %p797 = pneg %p336
        %p798 = pneg %p333
        %s799 = sand.u32 %s349, 1
        %s800 = scalar_lea.sflag [#allocation22], %s799
        %s801 = sand.u32 %s349, 1
        %s802 = scalar_lea.vmem [#allocation21], %s801
        %p803 = pneg %p362
        %p804 = pneg %p359
        %p805 = pneg %p388
        %p806 = pneg %p385
        %s807 = smul.u32 8, %s47
        %s808 = smul.u32 8, %s47
        %p810 = scmp.eq.s32.totalorder %s48, 0
        // Predicated region
        $region117: #{tpu_custom_call.1} parent=67 // pred_check
          %p811 = pneg %p810
        $region118: #{tpu_custom_call.1} parent=67 // pred_check_branch
          %813 = sbr.rel (%p811) target = $region120
        $region119: #{tpu_custom_call.1} parent=67 // pred_region
          %v814 = vld [vmem:[#allocation3] sm:$0xff]
          %v815 = vld [vmem:[#allocation3 + $0x8] sm:$0xff]
          %v816 = vld [vmem:[#allocation3 + $0x10] sm:$0xff]
          %v817 = vld [vmem:[#allocation3 + $0x18] sm:$0xff]
          %v818 = vld [vmem:[#allocation3 + $0x20] sm:$0xff]
          %v819 = vld [vmem:[#allocation3 + $0x28] sm:$0xff]
          %v820 = vld [vmem:[#allocation3 + $0x30] sm:$0xff]
          %v821 = vld [vmem:[#allocation3 + $0x38] sm:$0xff]
          %822 = vst [vmem:[#allocation23] sm:$0xff] %v814
          %823 = vst [vmem:[#allocation23 + $0x8] sm:$0xff] %v815
          %824 = vst [vmem:[#allocation23 + $0x10] sm:$0xff] %v816
          %825 = vst [vmem:[#allocation23 + $0x18] sm:$0xff] %v817
          %826 = vst [vmem:[#allocation23 + $0x20] sm:$0xff] %v818
          %827 = vst [vmem:[#allocation23 + $0x28] sm:$0xff] %v819
          %828 = vst [vmem:[#allocation23 + $0x30] sm:$0xff] %v820
          %829 = vst [vmem:[#allocation23 + $0x38] sm:$0xff] %v821
        $region120: #{tpu_custom_call.1} parent=67 // pred_fallthru
          _
        %v830 = vld [vmem:[#allocation23] sm:$0xff]
        %v831 = vld [vmem:[#allocation23 + $0x8] sm:$0xff]
        %v832 = vld [vmem:[#allocation23 + $0x10] sm:$0xff]
        %v833 = vld [vmem:[#allocation23 + $0x18] sm:$0xff]
        %v834 = vld [vmem:[#allocation23 + $0x20] sm:$0xff]
        %v835 = vld [vmem:[#allocation23 + $0x28] sm:$0xff]
        %v836 = vld [vmem:[#allocation23 + $0x30] sm:$0xff]
        %v837 = vld [vmem:[#allocation23 + $0x38] sm:$0xff]
        %v838 = vld [vmem:[%s642] sm:$0x1]
        %v839 = vld [vmem:[%s650] sm:$0x1]
        %840 = vadd.xlane.f32.xlu0 %v830
        %v841 = vpop.xlane.xlu0 %840
        %842 = vadd.xlane.f32.xlu0 %v831
        %v843 = vpop.xlane.xlu0 %842
        %844 = vadd.xlane.f32.xlu0 %v832
        %v845 = vpop.xlane.xlu0 %844
        %846 = vadd.xlane.f32.xlu0 %v833
        %v847 = vpop.xlane.xlu0 %846
        %848 = vadd.xlane.f32.xlu0 %v834
        %v849 = vpop.xlane.xlu0 %848
        %850 = vadd.xlane.f32.xlu0 %v835
        %v851 = vpop.xlane.xlu0 %850
        %852 = vadd.xlane.f32.xlu0 %v836
        %v853 = vpop.xlane.xlu0 %852
        %854 = vadd.xlane.f32.xlu0 %v837
        %v855 = vpop.xlane.xlu0 %854
        %v856 = vrcp.pop 128.0
        %v857 = vmul.f32 %v841, %v856
        %v858 = vmul.f32 %v843, %v856
        %v859 = vmul.f32 %v845, %v856
        %v860 = vmul.f32 %v847, %v856
        %v861 = vmul.f32 %v849, %v856
        %v862 = vmul.f32 %v851, %v856
        %v863 = vmul.f32 %v853, %v856
        %v864 = vmul.f32 %v855, %v856
        %v865 = vsub.f32 %v830, %v857
        %v866 = vsub.f32 %v831, %v858
        %v867 = vsub.f32 %v832, %v859
        %v868 = vsub.f32 %v833, %v860
        %v869 = vsub.f32 %v834, %v861
        %v870 = vsub.f32 %v835, %v862
        %v871 = vsub.f32 %v836, %v863
        %v872 = vsub.f32 %v837, %v864
        %v873 = vmul.f32 %v865, %v865
        %v874 = vmul.f32 %v866, %v866
        %v875 = vmul.f32 %v867, %v867
        %v876 = vmul.f32 %v868, %v868
        %v877 = vmul.f32 %v869, %v869
        %v878 = vmul.f32 %v870, %v870
        %v879 = vmul.f32 %v871, %v871
        %v880 = vmul.f32 %v872, %v872
        %881 = vadd.xlane.f32.xlu0 %v873
        %v882 = vpop.xlane.xlu0 %881
        %883 = vadd.xlane.f32.xlu0 %v874
        %v884 = vpop.xlane.xlu0 %883
        %885 = vadd.xlane.f32.xlu0 %v875
        %v886 = vpop.xlane.xlu0 %885
        %887 = vadd.xlane.f32.xlu0 %v876
        %v888 = vpop.xlane.xlu0 %887
        %889 = vadd.xlane.f32.xlu0 %v877
        %v890 = vpop.xlane.xlu0 %889
        %891 = vadd.xlane.f32.xlu0 %v878
        %v892 = vpop.xlane.xlu0 %891
        %893 = vadd.xlane.f32.xlu0 %v879
        %v894 = vpop.xlane.xlu0 %893
        %895 = vadd.xlane.f32.xlu0 %v880
        %v896 = vpop.xlane.xlu0 %895
        %v897 = vmul.f32 %v882, %v856
        %v898 = vmul.f32 %v884, %v856
        %v899 = vmul.f32 %v886, %v856
        %v900 = vmul.f32 %v888, %v856
        %v901 = vmul.f32 %v890, %v856
        %v902 = vmul.f32 %v892, %v856
        %v903 = vmul.f32 %v894, %v856
        %v904 = vmul.f32 %v896, %v856
        %v905 = vadd.f32 %v897, 1e-05
        %v906 = vadd.f32 %v898, 1e-05
        %v907 = vadd.f32 %v899, 1e-05
        %v908 = vadd.f32 %v900, 1e-05
        %v909 = vadd.f32 %v901, 1e-05
        %v910 = vadd.f32 %v902, 1e-05
        %v911 = vadd.f32 %v903, 1e-05
        %v912 = vadd.f32 %v904, 1e-05
        %v913 = vrsqrt.pop %v905
        %v914 = vrsqrt.pop %v906
        %v915 = vrsqrt.pop %v907
        %v916 = vrsqrt.pop %v908
        %v917 = vrsqrt.pop %v909
        %v918 = vrsqrt.pop %v910
        %v919 = vrsqrt.pop %v911
        %v920 = vrsqrt.pop %v912
        %v921 = vmul.f32 %v865, %v913
        %v922 = vmul.f32 %v866, %v914
        %v923 = vmul.f32 %v867, %v915
        %v924 = vmul.f32 %v868, %v916
        %v925 = vmul.f32 %v869, %v917
        %v926 = vmul.f32 %v870, %v918
        %v927 = vmul.f32 %v871, %v919
        %v928 = vmul.f32 %v872, %v920
        %v930 = vlaneseq
        %v931 = vshrl.u32 %v930, 7
        %v932 = vsub.s32 0, %v931
        %v933 = vrot.slane %v838, %v932
        %v935 = vmul.f32 %v921, %v933
        %v936 = vmul.f32 %v922, %v933
        %v937 = vmul.f32 %v923, %v933
        %v938 = vmul.f32 %v924, %v933
        %v939 = vmul.f32 %v925, %v933
        %v940 = vmul.f32 %v926, %v933
        %v941 = vmul.f32 %v927, %v933
        %v942 = vmul.f32 %v928, %v933
        %v944 = vlaneseq
        %v945 = vshrl.u32 %v944, 7
        %v946 = vsub.s32 0, %v945
        %v947 = vrot.slane %v839, %v946
        %v949 = vadd.f32 %v935, %v947
        %v950 = vadd.f32 %v936, %v947
        %v951 = vadd.f32 %v937, %v947
        %v952 = vadd.f32 %v938, %v947
        %v953 = vadd.f32 %v939, %v947
        %v954 = vadd.f32 %v940, %v947
        %v955 = vadd.f32 %v941, %v947
        %v956 = vadd.f32 %v942, %v947
        %v957 = vpack.c.bf16 %v950, %v949
        %v958 = vpack.c.bf16 %v952, %v951
        %v959 = vpack.c.bf16 %v954, %v953
        %v960 = vpack.c.bf16 %v956, %v955
        %v961 = vld [vmem:[%s659] sm:$0xff]
        %v962 = vld [vmem:[%s659 + $0x8] sm:$0xf]
        %v963 = vld [vmem:[%s659 + $0xc] sm:$0xff]
        %v964 = vld [vmem:[%s659 + $0x14] sm:$0xf]
        %v965 = vld [vmem:[%s659 + $0x18] sm:$0xff]
        %v966 = vld [vmem:[%s659 + $0x20] sm:$0xf]
        %v967 = vld [vmem:[%s659 + $0x24] sm:$0xff]
        %v968 = vld [vmem:[%s659 + $0x2c] sm:$0xf]
        %v969 = vld [vmem:[%s659 + $0x30] sm:$0xff]
        %v970 = vld [vmem:[%s659 + $0x38] sm:$0xf]
        %v971 = vld [vmem:[%s659 + $0x3c] sm:$0xff]
        %v972 = vld [vmem:[%s659 + $0x44] sm:$0xf]
        %v973 = vld [vmem:[%s659 + $0x48] sm:$0xff]
        %v974 = vld [vmem:[%s659 + $0x50] sm:$0xf]
        %v975 = vld [vmem:[%s659 + $0x54] sm:$0xff]
        %v976 = vld [vmem:[%s659 + $0x5c] sm:$0xf]
        %v977 = vld [vmem:[%s659 + $0x60] sm:$0xff]
        %v978 = vld [vmem:[%s659 + $0x68] sm:$0xf]
        %v979 = vld [vmem:[%s659 + $0x6c] sm:$0xff]
        %v980 = vld [vmem:[%s659 + $0x74] sm:$0xf]
        %v981 = vld [vmem:[%s659 + $0x78] sm:$0xff]
        %v982 = vld [vmem:[%s659 + $0x80] sm:$0xf]
        %v983 = vld [vmem:[%s659 + $0x84] sm:$0xff]
        %v984 = vld [vmem:[%s659 + $0x8c] sm:$0xf]
        %v985 = vld [vmem:[%s659 + $0x90] sm:$0xff]
        %v986 = vld [vmem:[%s659 + $0x98] sm:$0xf]
        %v987 = vld [vmem:[%s659 + $0x9c] sm:$0xff]
        %v988 = vld [vmem:[%s659 + $0xa4] sm:$0xf]
        %v989 = vld [vmem:[%s659 + $0xa8] sm:$0xff]
        %v990 = vld [vmem:[%s659 + $0xb0] sm:$0xf]
        %v991 = vld [vmem:[%s659 + $0xb4] sm:$0xff]
        %v992 = vld [vmem:[%s659 + $0xbc] sm:$0xf]
        %v1025 = vunpack.c.l.b16 %v961
        %v1026 = vunpack.c.h.b16 %v961
        %v1027 = vunpack.c.l.b16 %v962
        %v1028 = vunpack.c.l.b16 %v963
        %v1029 = vunpack.c.h.b16 %v963
        %v1030 = vunpack.c.l.b16 %v964
        %v1031 = vunpack.c.l.b16 %v965
        %v1032 = vunpack.c.h.b16 %v965
        %v1033 = vunpack.c.l.b16 %v966
        %v1034 = vunpack.c.l.b16 %v967
        %v1035 = vunpack.c.h.b16 %v967
        %v1036 = vunpack.c.l.b16 %v968
        %v1037 = vunpack.c.l.b16 %v969
        %v1038 = vunpack.c.h.b16 %v969
        %v1039 = vunpack.c.l.b16 %v970
        %v1040 = vunpack.c.l.b16 %v971
        %v1041 = vunpack.c.h.b16 %v971
        %v1042 = vunpack.c.l.b16 %v972
        %v1043 = vunpack.c.l.b16 %v973
        %v1044 = vunpack.c.h.b16 %v973
        %v1045 = vunpack.c.l.b16 %v974
        %v1046 = vunpack.c.l.b16 %v975
        %v1047 = vunpack.c.h.b16 %v975
        %v1048 = vunpack.c.l.b16 %v976
        %v1049 = vunpack.c.l.b16 %v977
        %v1050 = vunpack.c.h.b16 %v977
        %v1051 = vunpack.c.l.b16 %v978
        %v1052 = vunpack.c.l.b16 %v979
        %v1053 = vunpack.c.h.b16 %v979
        %v1054 = vunpack.c.l.b16 %v980
        %v1055 = vunpack.c.l.b16 %v981
        %v1056 = vunpack.c.h.b16 %v981
        %v1057 = vunpack.c.l.b16 %v982
        %v1058 = vunpack.c.l.b16 %v983
        %v1059 = vunpack.c.h.b16 %v983
        %v1060 = vunpack.c.l.b16 %v984
        %v1061 = vunpack.c.l.b16 %v985
        %v1062 = vunpack.c.h.b16 %v985
        %v1063 = vunpack.c.l.b16 %v986
        %v1064 = vunpack.c.l.b16 %v987
        %v1065 = vunpack.c.h.b16 %v987
        %v1066 = vunpack.c.l.b16 %v988
        %v1067 = vunpack.c.l.b16 %v989
        %v1068 = vunpack.c.h.b16 %v989
        %v1069 = vunpack.c.l.b16 %v990
        %v1070 = vunpack.c.l.b16 %v991
        %v1071 = vunpack.c.h.b16 %v991
        %v1072 = vunpack.c.l.b16 %v992
        %v1073 = vpack.c.b16 %v1028, %v1025
        %v1074 = vpack.c.b16 %v1029, %v1026
        %v1075 = vpack.c.b16 %v1030, %v1027
        %v1076 = vpack.c.b16 %v1034, %v1031
        %v1077 = vpack.c.b16 %v1035, %v1032
        %v1078 = vpack.c.b16 %v1036, %v1033
        %v1079 = vpack.c.b16 %v1040, %v1037
        %v1080 = vpack.c.b16 %v1041, %v1038
        %v1081 = vpack.c.b16 %v1042, %v1039
        %v1082 = vpack.c.b16 %v1046, %v1043
        %v1083 = vpack.c.b16 %v1047, %v1044
        %v1084 = vpack.c.b16 %v1048, %v1045
        %v1085 = vpack.c.b16 %v1052, %v1049
        %v1086 = vpack.c.b16 %v1053, %v1050
        %v1087 = vpack.c.b16 %v1054, %v1051
        %v1088 = vpack.c.b16 %v1058, %v1055
        %v1089 = vpack.c.b16 %v1059, %v1056
        %v1090 = vpack.c.b16 %v1060, %v1057
        %v1091 = vpack.c.b16 %v1064, %v1061
        %v1092 = vpack.c.b16 %v1065, %v1062
        %v1093 = vpack.c.b16 %v1066, %v1063
        %v1094 = vpack.c.b16 %v1070, %v1067
        %v1095 = vpack.c.b16 %v1071, %v1068
        %v1096 = vpack.c.b16 %v1072, %v1069
        %1121 = vmatprep.subr.bf16.mxu0 %v1074
        %1122 = vmatpush1.bf16.msra.mxu0 %v1073
        %1123 = vmatprep.subr.bf16.mxu0 %v1077
        %1124 = vmatpush1.bf16.msra.mxu0 %v1076
        %1125 = vmatprep.subr.bf16.mxu0 %v1080
        %1126 = vmatpush1.bf16.msra.mxu0 %v1079
        %1127 = vmatprep.subr.bf16.mxu0 %v1083
        %1128 = vmatpush1.bf16.msra.mxu0 %v1082
        %1129 = vmatprep.subr.bf16.mxu0 %v1086
        %1130 = vmatpush1.bf16.msra.mxu0 %v1085
        %1131 = vmatprep.subr.bf16.mxu0 %v1089
        %1132 = vmatpush1.bf16.msra.mxu0 %v1088
        %1133 = vmatprep.subr.bf16.mxu0 %v1092
        %1134 = vmatpush1.bf16.msra.mxu0 %v1091
        %1135 = vmatprep.subr.bf16.mxu0 %v1095
        %1136 = vmatpush1.bf16.msra.mxu0 %v1094
        %1137 = vmatprep.subr.bf16.mxu0 0
        %1138 = vmatpush1.bf16.msra.mxu0 0
        %1139 = vmatprep.subr.bf16.mxu0 0
        %1140 = vmatpush1.bf16.msra.mxu0 0
        %1141 = vmatprep.subr.bf16.mxu0 0
        %1142 = vmatpush1.bf16.msra.mxu0 0
        %1143 = vmatprep.subr.bf16.mxu0 0
        %1144 = vmatpush1.bf16.msra.mxu0 0
        %1145 = vmatprep.subr.bf16.mxu0 0
        %1146 = vmatpush1.bf16.msra.mxu0 0
        %1147 = vmatprep.subr.bf16.mxu0 0
        %1148 = vmatpush1.bf16.msra.mxu0 0
        %1149 = vmatprep.subr.bf16.mxu0 0
        %1150 = vmatpush1.bf16.msra.mxu0 0
        %1151 = vmatprep.subr.bf16.mxu0 0
        %1152 = vmatpush1.bf16.msra.mxu0 0
        %1153 = vmatprep.mubr.bf16.mxu0 0
        %1154 = vmatmul.mubr.bf16.gmra.mrb[0].mxu0 %v957
        %v1155 = vpop.f32.mrb[0].mxu0
        %v1156 = vadd.f32 0.0, %v1155
        %v1157 = vpop.f32.mrb[0].mxu0
        %v1158 = vadd.f32 0.0, %v1157
        %v1159 = vpop.f32.mrb[0].mxu0
        %v1160 = vadd.f32 0.0, %v1159
        %v1161 = vpop.f32.mrb[0].mxu0
        %v1162 = vadd.f32 0.0, %v1161
        %1163 = vmatprep.mubr.bf16.mxu0 0
        %1164 = vmatmul.mubr.bf16.gmra.mrb[0].mxu0 %v958
        %v1165 = vpop.f32.mrb[0].mxu0
        %v1166 = vadd.f32 0.0, %v1165
        %v1167 = vpop.f32.mrb[0].mxu0
        %v1168 = vadd.f32 0.0, %v1167
        %v1169 = vpop.f32.mrb[0].mxu0
        %v1170 = vadd.f32 0.0, %v1169
        %v1171 = vpop.f32.mrb[0].mxu0
        %v1172 = vadd.f32 0.0, %v1171
        %1173 = vmatprep.mubr.bf16.mxu0 0
        %1174 = vmatmul.mubr.bf16.gmra.mrb[0].mxu0 %v959
        %v1175 = vpop.f32.mrb[0].mxu0
        %v1176 = vadd.f32 0.0, %v1175
        %v1177 = vpop.f32.mrb[0].mxu0
        %v1178 = vadd.f32 0.0, %v1177
        %v1179 = vpop.f32.mrb[0].mxu0
        %v1180 = vadd.f32 0.0, %v1179
        %v1181 = vpop.f32.mrb[0].mxu0
        %v1182 = vadd.f32 0.0, %v1181
        %1183 = vmatprep.mubr.bf16.mxu0 0
        %1184 = vmatmul.mubr.bf16.gmra.mrb[0].mxu0 %v960
        %v1185 = vpop.f32.mrb[0].mxu0
        %v1186 = vadd.f32 0.0, %v1185
        %v1187 = vpop.f32.mrb[0].mxu0
        %v1188 = vadd.f32 0.0, %v1187
        %v1189 = vpop.f32.mrb[0].mxu0
        %v1190 = vadd.f32 0.0, %v1189
        %v1191 = vpop.f32.mrb[0].mxu0
        %v1192 = vadd.f32 0.0, %v1191
        %1193 = vdwg.mxu0
        %1194 = vmatprep.subr.bf16.mxu0 0
        %1195 = vmatpush1.bf16.msra.mxu0 %v1075
        %1196 = vmatprep.subr.bf16.mxu0 0
        %1197 = vmatpush1.bf16.msra.mxu0 %v1078
        %1198 = vmatprep.subr.bf16.mxu0 0
        %1199 = vmatpush1.bf16.msra.mxu0 %v1081
        %1200 = vmatprep.subr.bf16.mxu0 0
        %1201 = vmatpush1.bf16.msra.mxu0 %v1084
        %1202 = vmatprep.subr.bf16.mxu0 0
        %1203 = vmatpush1.bf16.msra.mxu0 %v1087
        %1204 = vmatprep.subr.bf16.mxu0 0
        %1205 = vmatpush1.bf16.msra.mxu0 %v1090
        %1206 = vmatprep.subr.bf16.mxu0 0
        %1207 = vmatpush1.bf16.msra.mxu0 %v1093
        %1208 = vmatprep.subr.bf16.mxu0 0
        %1209 = vmatpush1.bf16.msra.mxu0 %v1096
        %1210 = vmatprep.subr.bf16.mxu0 0
        %1211 = vmatpush1.bf16.msra.mxu0 0
        %1212 = vmatprep.subr.bf16.mxu0 0
        %1213 = vmatpush1.bf16.msra.mxu0 0
        %1214 = vmatprep.subr.bf16.mxu0 0
        %1215 = vmatpush1.bf16.msra.mxu0 0
        %1216 = vmatprep.subr.bf16.mxu0 0
        %1217 = vmatpush1.bf16.msra.mxu0 0
        %1218 = vmatprep.subr.bf16.mxu0 0
        %1219 = vmatpush1.bf16.msra.mxu0 0
        %1220 = vmatprep.subr.bf16.mxu0 0
        %1221 = vmatpush1.bf16.msra.mxu0 0
        %1222 = vmatprep.subr.bf16.mxu0 0
        %1223 = vmatpush1.bf16.msra.mxu0 0
        %1224 = vmatprep.subr.bf16.mxu0 0
        %1225 = vmatpush1.bf16.msra.mxu0 0
        %1226 = vmatprep.mubr.bf16.mxu0 0
        %1227 = vmatmul.mubr.bf16.gmra.mrb[0].mxu0 %v957
        %v1228 = vpop.f32.mrb[0].mxu0
        %v1229 = vadd.f32 0.0, %v1228
        %v1230 = vpop.f32.mrb[0].mxu0
        %v1231 = vpop.f32.mrb[0].mxu0
        %v1232 = vadd.f32 0.0, %v1231
        %v1233 = vpop.f32.mrb[0].mxu0
        %1234 = vmatprep.mubr.bf16.mxu0 0
        %1235 = vmatmul.mubr.bf16.gmra.mrb[0].mxu0 %v958
        %v1236 = vpop.f32.mrb[0].mxu0
        %v1237 = vadd.f32 0.0, %v1236
        %v1238 = vpop.f32.mrb[0].mxu0
        %v1239 = vpop.f32.mrb[0].mxu0
        %v1240 = vadd.f32 0.0, %v1239
        %v1241 = vpop.f32.mrb[0].mxu0
        %1242 = vmatprep.mubr.bf16.mxu0 0
        %1243 = vmatmul.mubr.bf16.gmra.mrb[0].mxu0 %v959
        %v1244 = vpop.f32.mrb[0].mxu0
        %v1245 = vadd.f32 0.0, %v1244
        %v1246 = vpop.f32.mrb[0].mxu0
        %v1247 = vpop.f32.mrb[0].mxu0
        %v1248 = vadd.f32 0.0, %v1247
        %v1249 = vpop.f32.mrb[0].mxu0
        %1250 = vmatprep.mubr.bf16.mxu0 0
        %1251 = vmatmul.mubr.bf16.gmra.mrb[0].mxu0 %v960
        %v1252 = vpop.f32.mrb[0].mxu0
        %v1253 = vadd.f32 0.0, %v1252
        %v1254 = vpop.f32.mrb[0].mxu0
        %v1255 = vpop.f32.mrb[0].mxu0
        %v1256 = vadd.f32 0.0, %v1255
        %v1257 = vpop.f32.mrb[0].mxu0
        %1258 = vdwg.mxu0
        %v1259 = vpack.c.bf16 %v1156, %v1156
        %v1260 = vpack.c.bf16 %v1160, %v1160
        %v1261 = vpack.c.bf16 %v1166, %v1166
        %v1262 = vpack.c.bf16 %v1170, %v1170
        %v1263 = vpack.c.bf16 %v1176, %v1176
        %v1264 = vpack.c.bf16 %v1180, %v1180
        %v1265 = vpack.c.bf16 %v1186, %v1186
        %v1266 = vpack.c.bf16 %v1190, %v1190
        %v1267 = vpack.c.bf16 %v1158, %v1158
        %v1268 = vpack.c.bf16 %v1162, %v1162
        %v1269 = vpack.c.bf16 %v1168, %v1168
        %v1270 = vpack.c.bf16 %v1172, %v1172
        %v1271 = vpack.c.bf16 %v1178, %v1178
        %v1272 = vpack.c.bf16 %v1182, %v1182
        %v1273 = vpack.c.bf16 %v1188, %v1188
        %v1274 = vpack.c.bf16 %v1192, %v1192
        %vm1275 = vcmask 261120
        %v1277 = vsel %vm1275, %v1259, 0
        %v1280 = vsel %vm1275, %v1267, 0
        %1282 = vmatprep.subr.bf16.mxu0 0
        %1283 = vmatpush1.bf16.xpose.msra.mxu0 %v1280
        %1284 = vmatprep.subr.bf16.mxu0 0
        %1285 = vmatpush1.bf16.xpose.msra.mxu0 0
        %1286 = vmatprep.subr.bf16.mxu0 0
        %1287 = vmatpush1.bf16.xpose.msra.mxu0 0
        %1288 = vmatprep.subr.bf16.mxu0 0
        %1289 = vmatpush1.bf16.xpose.msra.mxu0 0
        %1290 = vmatprep.subr.bf16.mxu0 0
        %1291 = vmatpush1.bf16.xpose.msra.mxu0 0
        %1292 = vmatprep.subr.bf16.mxu0 0
        %1293 = vmatpush1.bf16.xpose.msra.mxu0 0
        %1294 = vmatprep.subr.bf16.mxu0 0
        %1295 = vmatpush1.bf16.xpose.msra.mxu0 0
        %1296 = vmatprep.subr.bf16.mxu0 0
        %1297 = vmatpush1.bf16.xpose.msra.mxu0 0
        %1298 = vmatprep.subr.bf16.mxu0 0
        %1299 = vmatpush1.bf16.xpose.msra.mxu0 0
        %1300 = vmatprep.subr.bf16.mxu0 0
        %1301 = vmatpush1.bf16.xpose.msra.mxu0 0
        %1302 = vmatprep.subr.bf16.mxu0 0
        %1303 = vmatpush1.bf16.xpose.msra.mxu0 0
        %1304 = vmatprep.subr.bf16.mxu0 0
        %1305 = vmatpush1.bf16.xpose.msra.mxu0 0
        %1306 = vmatprep.subr.bf16.mxu0 0
        %1307 = vmatpush1.bf16.xpose.msra.mxu0 0
        %1308 = vmatprep.subr.bf16.mxu0 0
        %1309 = vmatpush1.bf16.xpose.msra.mxu0 0
        %1310 = vmatprep.subr.bf16.mxu0 0
        %1311 = vmatpush1.bf16.xpose.msra.mxu0 0
        %1312 = vmatprep.subr.bf16.mxu0 0
        %1313 = vmatpush1.bf16.xpose.msra.mxu0 0
        %1314 = vmatprep.mubr.bf16.mxu0 0
        %1315 = vmatmul.mubr.bf16.gmra.mrb[0].mxu0 %v1277
        %v1316 = vpop.f32.mrb[0].mxu0
        %v1317 = vadd.f32 0.0, %v1316
        %v1318 = vpop.f32.mrb[0].mxu0
        %v1319 = vpop.f32.mrb[0].mxu0
        %v1320 = vpop.f32.mrb[0].mxu0
        %1321 = vdwg.mxu0
        %v1323 = vsel %vm1275, %v1260, 0
        %v1326 = vsel %vm1275, %v1268, 0
        %1328 = vmatprep.subr.bf16.mxu0 0
        %1329 = vmatpush1.bf16.xpose.msra.mxu0 %v1326
        %1330 = vmatprep.subr.bf16.mxu0 0
        %1331 = vmatpush1.bf16.xpose.msra.mxu0 0
        %1332 = vmatprep.subr.bf16.mxu0 0
        %1333 = vmatpush1.bf16.xpose.msra.mxu0 0
        %1334 = vmatprep.subr.bf16.mxu0 0
        %1335 = vmatpush1.bf16.xpose.msra.mxu0 0
        %1336 = vmatprep.subr.bf16.mxu0 0
        %1337 = vmatpush1.bf16.xpose.msra.mxu0 0
        %1338 = vmatprep.subr.bf16.mxu0 0
        %1339 = vmatpush1.bf16.xpose.msra.mxu0 0
        %1340 = vmatprep.subr.bf16.mxu0 0
        %1341 = vmatpush1.bf16.xpose.msra.mxu0 0
        %1342 = vmatprep.subr.bf16.mxu0 0
        %1343 = vmatpush1.bf16.xpose.msra.mxu0 0
        %1344 = vmatprep.subr.bf16.mxu0 0
        %1345 = vmatpush1.bf16.xpose.msra.mxu0 0
        %1346 = vmatprep.subr.bf16.mxu0 0
        %1347 = vmatpush1.bf16.xpose.msra.mxu0 0
        %1348 = vmatprep.subr.bf16.mxu0 0
        %1349 = vmatpush1.bf16.xpose.msra.mxu0 0
        %1350 = vmatprep.subr.bf16.mxu0 0
        %1351 = vmatpush1.bf16.xpose.msra.mxu0 0
        %1352 = vmatprep.subr.bf16.mxu0 0
        %1353 = vmatpush1.bf16.xpose.msra.mxu0 0
        %1354 = vmatprep.subr.bf16.mxu0 0
        %1355 = vmatpush1.bf16.xpose.msra.mxu0 0
        %1356 = vmatprep.subr.bf16.mxu0 0
        %1357 = vmatpush1.bf16.xpose.msra.mxu0 0
        %1358 = vmatprep.subr.bf16.mxu0 0
        %1359 = vmatpush1.bf16.xpose.msra.mxu0 0
        %1360 = vmatprep.mubr.bf16.mxu0 0
        %1361 = vmatmul.mubr.bf16.gmra.mrb[0].mxu0 %v1323
        %v1362 = vpop.f32.mrb[0].mxu0
        %v1363 = vadd.f32 0.0, %v1362
        %v1364 = vpop.f32.mrb[0].mxu0
        %v1365 = vpop.f32.mrb[0].mxu0
        %v1366 = vpop.f32.mrb[0].mxu0
        %1367 = vdwg.mxu0
        %v1369 = vsel %vm1275, %v1261, 0
        %v1372 = vsel %vm1275, %v1269, 0
        %1374 = vmatprep.subr.bf16.mxu0 0
        %1375 = vmatpush1.bf16.xpose.msra.mxu0 %v1372
        %1376 = vmatprep.subr.bf16.mxu0 0
        %1377 = vmatpush1.bf16.xpose.msra.mxu0 0
        %1378 = vmatprep.subr.bf16.mxu0 0
        %1379 = vmatpush1.bf16.xpose.msra.mxu0 0
        %1380 = vmatprep.subr.bf16.mxu0 0
        %1381 = vmatpush1.bf16.xpose.msra.mxu0 0
        %1382 = vmatprep.subr.bf16.mxu0 0
        %1383 = vmatpush1.bf16.xpose.msra.mxu0 0
        %1384 = vmatprep.subr.bf16.mxu0 0
        %1385 = vmatpush1.bf16.xpose.msra.mxu0 0
        %1386 = vmatprep.subr.bf16.mxu0 0
        %1387 = vmatpush1.bf16.xpose.msra.mxu0 0
        %1388 = vmatprep.subr.bf16.mxu0 0
        %1389 = vmatpush1.bf16.xpose.msra.mxu0 0
        %1390 = vmatprep.subr.bf16.mxu0 0
        %1391 = vmatpush1.bf16.xpose.msra.mxu0 0
        %1392 = vmatprep.subr.bf16.mxu0 0
        %1393 = vmatpush1.bf16.xpose.msra.mxu0 0
        %1394 = vmatprep.subr.bf16.mxu0 0
        %1395 = vmatpush1.bf16.xpose.msra.mxu0 0
        %1396 = vmatprep.subr.bf16.mxu0 0
        %1397 = vmatpush1.bf16.xpose.msra.mxu0 0
        %1398 = vmatprep.subr.bf16.mxu0 0
        %1399 = vmatpush1.bf16.xpose.msra.mxu0 0
        %1400 = vmatprep.subr.bf16.mxu0 0
        %1401 = vmatpush1.bf16.xpose.msra.mxu0 0
        %1402 = vmatprep.subr.bf16.mxu0 0
        %1403 = vmatpush1.bf16.xpose.msra.mxu0 0
        %1404 = vmatprep.subr.bf16.mxu0 0
        %1405 = vmatpush1.bf16.xpose.msra.mxu0 0
        %1406 = vmatprep.mubr.bf16.mxu0 0
        %1407 = vmatmul.mubr.bf16.gmra.mrb[0].mxu0 %v1369
        %v1408 = vpop.f32.mrb[0].mxu0
        %v1409 = vadd.f32 0.0, %v1408
        %v1410 = vpop.f32.mrb[0].mxu0
        %v1411 = vpop.f32.mrb[0].mxu0
        %v1412 = vpop.f32.mrb[0].mxu0
        %1413 = vdwg.mxu0
        %v1415 = vsel %vm1275, %v1262, 0
        %v1418 = vsel %vm1275, %v1270, 0
        %1420 = vmatprep.subr.bf16.mxu0 0
        %1421 = vmatpush1.bf16.xpose.msra.mxu0 %v1418
        %1422 = vmatprep.subr.bf16.mxu0 0
        %1423 = vmatpush1.bf16.xpose.msra.mxu0 0
        %1424 = vmatprep.subr.bf16.mxu0 0
        %1425 = vmatpush1.bf16.xpose.msra.mxu0 0
        %1426 = vmatprep.subr.bf16.mxu0 0
        %1427 = vmatpush1.bf16.xpose.msra.mxu0 0
        %1428 = vmatprep.subr.bf16.mxu0 0
        %1429 = vmatpush1.bf16.xpose.msra.mxu0 0
        %1430 = vmatprep.subr.bf16.mxu0 0
        %1431 = vmatpush1.bf16.xpose.msra.mxu0 0
        %1432 = vmatprep.subr.bf16.mxu0 0
        %1433 = vmatpush1.bf16.xpose.msra.mxu0 0
        %1434 = vmatprep.subr.bf16.mxu0 0
        %1435 = vmatpush1.bf16.xpose.msra.mxu0 0
        %1436 = vmatprep.subr.bf16.mxu0 0
        %1437 = vmatpush1.bf16.xpose.msra.mxu0 0
        %1438 = vmatprep.subr.bf16.mxu0 0
        %1439 = vmatpush1.bf16.xpose.msra.mxu0 0
        %1440 = vmatprep.subr.bf16.mxu0 0
        %1441 = vmatpush1.bf16.xpose.msra.mxu0 0
        %1442 = vmatprep.subr.bf16.mxu0 0
        %1443 = vmatpush1.bf16.xpose.msra.mxu0 0
        %1444 = vmatprep.subr.bf16.mxu0 0
        %1445 = vmatpush1.bf16.xpose.msra.mxu0 0
        %1446 = vmatprep.subr.bf16.mxu0 0
        %1447 = vmatpush1.bf16.xpose.msra.mxu0 0
        %1448 = vmatprep.subr.bf16.mxu0 0
        %1449 = vmatpush1.bf16.xpose.msra.mxu0 0
        %1450 = vmatprep.subr.bf16.mxu0 0
        %1451 = vmatpush1.bf16.xpose.msra.mxu0 0
        %1452 = vmatprep.mubr.bf16.mxu0 0
        %1453 = vmatmul.mubr.bf16.gmra.mrb[0].mxu0 %v1415
        %v1454 = vpop.f32.mrb[0].mxu0
        %v1455 = vadd.f32 0.0, %v1454
        %v1456 = vpop.f32.mrb[0].mxu0
        %v1457 = vpop.f32.mrb[0].mxu0
        %v1458 = vpop.f32.mrb[0].mxu0
        %1459 = vdwg.mxu0
        %v1461 = vsel %vm1275, %v1263, 0
        %v1464 = vsel %vm1275, %v1271, 0
        %1466 = vmatprep.subr.bf16.mxu0 0
        %1467 = vmatpush1.bf16.xpose.msra.mxu0 %v1464
        %1468 = vmatprep.subr.bf16.mxu0 0
        %1469 = vmatpush1.bf16.xpose.msra.mxu0 0
        %1470 = vmatprep.subr.bf16.mxu0 0
        %1471 = vmatpush1.bf16.xpose.msra.mxu0 0
        %1472 = vmatprep.subr.bf16.mxu0 0
        %1473 = vmatpush1.bf16.xpose.msra.mxu0 0
        %1474 = vmatprep.subr.bf16.mxu0 0
        %1475 = vmatpush1.bf16.xpose.msra.mxu0 0
        %1476 = vmatprep.subr.bf16.mxu0 0
        %1477 = vmatpush1.bf16.xpose.msra.mxu0 0
        %1478 = vmatprep.subr.bf16.mxu0 0
        %1479 = vmatpush1.bf16.xpose.msra.mxu0 0
        %1480 = vmatprep.subr.bf16.mxu0 0
        %1481 = vmatpush1.bf16.xpose.msra.mxu0 0
        %1482 = vmatprep.subr.bf16.mxu0 0
        %1483 = vmatpush1.bf16.xpose.msra.mxu0 0
        %1484 = vmatprep.subr.bf16.mxu0 0
        %1485 = vmatpush1.bf16.xpose.msra.mxu0 0
        %1486 = vmatprep.subr.bf16.mxu0 0
        %1487 = vmatpush1.bf16.xpose.msra.mxu0 0
        %1488 = vmatprep.subr.bf16.mxu0 0
        %1489 = vmatpush1.bf16.xpose.msra.mxu0 0
        %1490 = vmatprep.subr.bf16.mxu0 0
        %1491 = vmatpush1.bf16.xpose.msra.mxu0 0
        %1492 = vmatprep.subr.bf16.mxu0 0
        %1493 = vmatpush1.bf16.xpose.msra.mxu0 0
        %1494 = vmatprep.subr.bf16.mxu0 0
        %1495 = vmatpush1.bf16.xpose.msra.mxu0 0
        %1496 = vmatprep.subr.bf16.mxu0 0
        %1497 = vmatpush1.bf16.xpose.msra.mxu0 0
        %1498 = vmatprep.mubr.bf16.mxu0 0
        %1499 = vmatmul.mubr.bf16.gmra.mrb[0].mxu0 %v1461
        %v1500 = vpop.f32.mrb[0].mxu0
        %v1501 = vadd.f32 0.0, %v1500
        %v1502 = vpop.f32.mrb[0].mxu0
        %v1503 = vpop.f32.mrb[0].mxu0
        %v1504 = vpop.f32.mrb[0].mxu0
        %1505 = vdwg.mxu0
        %v1507 = vsel %vm1275, %v1264, 0
        %v1510 = vsel %vm1275, %v1272, 0
        %1512 = vmatprep.subr.bf16.mxu0 0
        %1513 = vmatpush1.bf16.xpose.msra.mxu0 %v1510
        %1514 = vmatprep.subr.bf16.mxu0 0
        %1515 = vmatpush1.bf16.xpose.msra.mxu0 0
        %1516 = vmatprep.subr.bf16.mxu0 0
        %1517 = vmatpush1.bf16.xpose.msra.mxu0 0
        %1518 = vmatprep.subr.bf16.mxu0 0
        %1519 = vmatpush1.bf16.xpose.msra.mxu0 0
        %1520 = vmatprep.subr.bf16.mxu0 0
        %1521 = vmatpush1.bf16.xpose.msra.mxu0 0
        %1522 = vmatprep.subr.bf16.mxu0 0
        %1523 = vmatpush1.bf16.xpose.msra.mxu0 0
        %1524 = vmatprep.subr.bf16.mxu0 0
        %1525 = vmatpush1.bf16.xpose.msra.mxu0 0
        %1526 = vmatprep.subr.bf16.mxu0 0
        %1527 = vmatpush1.bf16.xpose.msra.mxu0 0
        %1528 = vmatprep.subr.bf16.mxu0 0
        %1529 = vmatpush1.bf16.xpose.msra.mxu0 0
        %1530 = vmatprep.subr.bf16.mxu0 0
        %1531 = vmatpush1.bf16.xpose.msra.mxu0 0
        %1532 = vmatprep.subr.bf16.mxu0 0
        %1533 = vmatpush1.bf16.xpose.msra.mxu0 0
        %1534 = vmatprep.subr.bf16.mxu0 0
        %1535 = vmatpush1.bf16.xpose.msra.mxu0 0
        %1536 = vmatprep.subr.bf16.mxu0 0
        %1537 = vmatpush1.bf16.xpose.msra.mxu0 0
        %1538 = vmatprep.subr.bf16.mxu0 0
        %1539 = vmatpush1.bf16.xpose.msra.mxu0 0
        %1540 = vmatprep.subr.bf16.mxu0 0
        %1541 = vmatpush1.bf16.xpose.msra.mxu0 0
        %1542 = vmatprep.subr.bf16.mxu0 0
        %1543 = vmatpush1.bf16.xpose.msra.mxu0 0
        %1544 = vmatprep.mubr.bf16.mxu0 0
        %1545 = vmatmul.mubr.bf16.gmra.mrb[0].mxu0 %v1507
        %v1546 = vpop.f32.mrb[0].mxu0
        %v1547 = vadd.f32 0.0, %v1546
        %v1548 = vpop.f32.mrb[0].mxu0
        %v1549 = vpop.f32.mrb[0].mxu0
        %v1550 = vpop.f32.mrb[0].mxu0
        %1551 = vdwg.mxu0
        %v1553 = vsel %vm1275, %v1265, 0
        %v1556 = vsel %vm1275, %v1273, 0
        %1558 = vmatprep.subr.bf16.mxu0 0
        %1559 = vmatpush1.bf16.xpose.msra.mxu0 %v1556
        %1560 = vmatprep.subr.bf16.mxu0 0
        %1561 = vmatpush1.bf16.xpose.msra.mxu0 0
        %1562 = vmatprep.subr.bf16.mxu0 0
        %1563 = vmatpush1.bf16.xpose.msra.mxu0 0
        %1564 = vmatprep.subr.bf16.mxu0 0
        %1565 = vmatpush1.bf16.xpose.msra.mxu0 0
        %1566 = vmatprep.subr.bf16.mxu0 0
        %1567 = vmatpush1.bf16.xpose.msra.mxu0 0
        %1568 = vmatprep.subr.bf16.mxu0 0
        %1569 = vmatpush1.bf16.xpose.msra.mxu0 0
        %1570 = vmatprep.subr.bf16.mxu0 0
        %1571 = vmatpush1.bf16.xpose.msra.mxu0 0
        %1572 = vmatprep.subr.bf16.mxu0 0
        %1573 = vmatpush1.bf16.xpose.msra.mxu0 0
        %1574 = vmatprep.subr.bf16.mxu0 0
        %1575 = vmatpush1.bf16.xpose.msra.mxu0 0
        %1576 = vmatprep.subr.bf16.mxu0 0
        %1577 = vmatpush1.bf16.xpose.msra.mxu0 0
        %1578 = vmatprep.subr.bf16.mxu0 0
        %1579 = vmatpush1.bf16.xpose.msra.mxu0 0
        %1580 = vmatprep.subr.bf16.mxu0 0
        %1581 = vmatpush1.bf16.xpose.msra.mxu0 0
        %1582 = vmatprep.subr.bf16.mxu0 0
        %1583 = vmatpush1.bf16.xpose.msra.mxu0 0
        %1584 = vmatprep.subr.bf16.mxu0 0
        %1585 = vmatpush1.bf16.xpose.msra.mxu0 0
        %1586 = vmatprep.subr.bf16.mxu0 0
        %1587 = vmatpush1.bf16.xpose.msra.mxu0 0
        %1588 = vmatprep.subr.bf16.mxu0 0
        %1589 = vmatpush1.bf16.xpose.msra.mxu0 0
        %1590 = vmatprep.mubr.bf16.mxu0 0
        %1591 = vmatmul.mubr.bf16.gmra.mrb[0].mxu0 %v1553
        %v1592 = vpop.f32.mrb[0].mxu0
        %v1593 = vadd.f32 0.0, %v1592
        %v1594 = vpop.f32.mrb[0].mxu0
        %v1595 = vpop.f32.mrb[0].mxu0
        %v1596 = vpop.f32.mrb[0].mxu0
        %1597 = vdwg.mxu0
        %v1599 = vsel %vm1275, %v1266, 0
        %v1602 = vsel %vm1275, %v1274, 0
        %1604 = vmatprep.subr.bf16.mxu0 0
        %1605 = vmatpush1.bf16.xpose.msra.mxu0 %v1602
        %1606 = vmatprep.subr.bf16.mxu0 0
        %1607 = vmatpush1.bf16.xpose.msra.mxu0 0
        %1608 = vmatprep.subr.bf16.mxu0 0
        %1609 = vmatpush1.bf16.xpose.msra.mxu0 0
        %1610 = vmatprep.subr.bf16.mxu0 0
        %1611 = vmatpush1.bf16.xpose.msra.mxu0 0
        %1612 = vmatprep.subr.bf16.mxu0 0
        %1613 = vmatpush1.bf16.xpose.msra.mxu0 0
        %1614 = vmatprep.subr.bf16.mxu0 0
        %1615 = vmatpush1.bf16.xpose.msra.mxu0 0
        %1616 = vmatprep.subr.bf16.mxu0 0
        %1617 = vmatpush1.bf16.xpose.msra.mxu0 0
        %1618 = vmatprep.subr.bf16.mxu0 0
        %1619 = vmatpush1.bf16.xpose.msra.mxu0 0
        %1620 = vmatprep.subr.bf16.mxu0 0
        %1621 = vmatpush1.bf16.xpose.msra.mxu0 0
        %1622 = vmatprep.subr.bf16.mxu0 0
        %1623 = vmatpush1.bf16.xpose.msra.mxu0 0
        %1624 = vmatprep.subr.bf16.mxu0 0
        %1625 = vmatpush1.bf16.xpose.msra.mxu0 0
        %1626 = vmatprep.subr.bf16.mxu0 0
        %1627 = vmatpush1.bf16.xpose.msra.mxu0 0
        %1628 = vmatprep.subr.bf16.mxu0 0
        %1629 = vmatpush1.bf16.xpose.msra.mxu0 0
        %1630 = vmatprep.subr.bf16.mxu0 0
        %1631 = vmatpush1.bf16.xpose.msra.mxu0 0
        %1632 = vmatprep.subr.bf16.mxu0 0
        %1633 = vmatpush1.bf16.xpose.msra.mxu0 0
        %1634 = vmatprep.subr.bf16.mxu0 0
        %1635 = vmatpush1.bf16.xpose.msra.mxu0 0
        %1636 = vmatprep.mubr.bf16.mxu0 0
        %1637 = vmatmul.mubr.bf16.gmra.mrb[0].mxu0 %v1599
        %v1638 = vpop.f32.mrb[0].mxu0
        %v1639 = vadd.f32 0.0, %v1638
        %v1640 = vpop.f32.mrb[0].mxu0
        %v1641 = vpop.f32.mrb[0].mxu0
        %v1642 = vpop.f32.mrb[0].mxu0
        %1643 = vdwg.mxu0
        %vm1644 = vcmask 64512
        %v1645 = vsel %vm1644, %v1317, -inf
        %1646 = vmax.xlane.f32.xlu0 %v1645
        %v1647 = vpop.xlane.xlu0 %1646
        %v1648 = vsel %vm1644, %v1363, -inf
        %1649 = vmax.xlane.f32.xlu0 %v1648
        %v1650 = vpop.xlane.xlu0 %1649
        %v1651 = vsel %vm1644, %v1409, -inf
        %1652 = vmax.xlane.f32.xlu0 %v1651
        %v1653 = vpop.xlane.xlu0 %1652
        %v1654 = vsel %vm1644, %v1455, -inf
        %1655 = vmax.xlane.f32.xlu0 %v1654
        %v1656 = vpop.xlane.xlu0 %1655
        %v1657 = vsel %vm1644, %v1501, -inf
        %1658 = vmax.xlane.f32.xlu0 %v1657
        %v1659 = vpop.xlane.xlu0 %1658
        %v1660 = vsel %vm1644, %v1547, -inf
        %1661 = vmax.xlane.f32.xlu0 %v1660
        %v1662 = vpop.xlane.xlu0 %1661
        %v1663 = vsel %vm1644, %v1593, -inf
        %1664 = vmax.xlane.f32.xlu0 %v1663
        %v1665 = vpop.xlane.xlu0 %1664
        %v1666 = vsel %vm1644, %v1639, -inf
        %1667 = vmax.xlane.f32.xlu0 %v1666
        %v1668 = vpop.xlane.xlu0 %1667
        %v1669 = vsub.f32 %v1317, %v1647
        %v1670 = vsub.f32 %v1363, %v1650
        %v1671 = vsub.f32 %v1409, %v1653
        %v1672 = vsub.f32 %v1455, %v1656
        %v1673 = vsub.f32 %v1501, %v1659
        %v1674 = vsub.f32 %v1547, %v1662
        %v1675 = vsub.f32 %v1593, %v1665
        %v1676 = vsub.f32 %v1639, %v1668
        %v1677 = vmul.f32 %v1669, 1.442695
        %v1678 = vpow.pop %v1677
        %v1679 = vmul.f32 %v1670, 1.442695
        %v1680 = vpow.pop %v1679
        %v1681 = vmul.f32 %v1671, 1.442695
        %v1682 = vpow.pop %v1681
        %v1683 = vmul.f32 %v1672, 1.442695
        %v1684 = vpow.pop %v1683
        %v1685 = vmul.f32 %v1673, 1.442695
        %v1686 = vpow.pop %v1685
        %v1687 = vmul.f32 %v1674, 1.442695
        %v1688 = vpow.pop %v1687
        %v1689 = vmul.f32 %v1675, 1.442695
        %v1690 = vpow.pop %v1689
        %v1691 = vmul.f32 %v1676, 1.442695
        %v1692 = vpow.pop %v1691
        %v1693 = vsel %vm1644, %v1678, 0.0
        %1694 = vadd.xlane.f32.xlu0 %v1693
        %v1695 = vpop.xlane.xlu0 %1694
        %v1696 = vsel %vm1644, %v1680, 0.0
        %1697 = vadd.xlane.f32.xlu0 %v1696
        %v1698 = vpop.xlane.xlu0 %1697
        %v1699 = vsel %vm1644, %v1682, 0.0
        %1700 = vadd.xlane.f32.xlu0 %v1699
        %v1701 = vpop.xlane.xlu0 %1700
        %v1702 = vsel %vm1644, %v1684, 0.0
        %1703 = vadd.xlane.f32.xlu0 %v1702
        %v1704 = vpop.xlane.xlu0 %1703
        %v1705 = vsel %vm1644, %v1686, 0.0
        %1706 = vadd.xlane.f32.xlu0 %v1705
        %v1707 = vpop.xlane.xlu0 %1706
        %v1708 = vsel %vm1644, %v1688, 0.0
        %1709 = vadd.xlane.f32.xlu0 %v1708
        %v1710 = vpop.xlane.xlu0 %1709
        %v1711 = vsel %vm1644, %v1690, 0.0
        %1712 = vadd.xlane.f32.xlu0 %v1711
        %v1713 = vpop.xlane.xlu0 %1712
        %v1714 = vsel %vm1644, %v1692, 0.0
        %1715 = vadd.xlane.f32.xlu0 %v1714
        %v1716 = vpop.xlane.xlu0 %1715
        %v1717 = vrcp.pop %v1695
        %v1718 = vrcp.pop %v1698
        %v1719 = vrcp.pop %v1701
        %v1720 = vrcp.pop %v1704
        %v1721 = vrcp.pop %v1707
        %v1722 = vrcp.pop %v1710
        %v1723 = vrcp.pop %v1713
        %v1724 = vrcp.pop %v1716
        %v1725 = vmul.f32 %v1678, %v1717
        %v1726 = vmul.f32 %v1680, %v1718
        %v1727 = vmul.f32 %v1682, %v1719
        %v1728 = vmul.f32 %v1684, %v1720
        %v1729 = vmul.f32 %v1686, %v1721
        %v1730 = vmul.f32 %v1688, %v1722
        %v1731 = vmul.f32 %v1690, %v1723
        %v1732 = vmul.f32 %v1692, %v1724
        %v1733 = vpack.c.bf16 %v1725, %v1725
        %v1734 = vpack.c.bf16 %v1726, %v1726
        %v1735 = vpack.c.bf16 %v1727, %v1727
        %v1736 = vpack.c.bf16 %v1728, %v1728
        %v1737 = vpack.c.bf16 %v1729, %v1729
        %v1738 = vpack.c.bf16 %v1730, %v1730
        %v1739 = vpack.c.bf16 %v1731, %v1731
        %v1740 = vpack.c.bf16 %v1732, %v1732
        %v1741 = vpack.c.bf16 %v1229, %v1229
        %v1742 = vpack.c.bf16 %v1232, %v1232
        %v1743 = vpack.c.bf16 %v1237, %v1237
        %v1744 = vpack.c.bf16 %v1240, %v1240
        %v1745 = vpack.c.bf16 %v1245, %v1245
        %v1746 = vpack.c.bf16 %v1248, %v1248
        %v1747 = vpack.c.bf16 %v1253, %v1253
        %v1748 = vpack.c.bf16 %v1256, %v1256
        %v1750 = vsel %vm1644, %v1733, 0
        %vm1752 = vcmask 1043456
        %v1754 = vsel %vm1752, %v1741, 0
        %1756 = vmatprep.subr.bf16.mxu0 0
        %1757 = vmatpush1.bf16.msra.mxu0 %v1754
        %1758 = vmatprep.subr.bf16.mxu0 0
        %1759 = vmatpush1.bf16.msra.mxu0 0
        %1760 = vmatprep.subr.bf16.mxu0 0
        %1761 = vmatpush1.bf16.msra.mxu0 0
        %1762 = vmatprep.subr.bf16.mxu0 0
        %1763 = vmatpush1.bf16.msra.mxu0 0
        %1764 = vmatprep.subr.bf16.mxu0 0
        %1765 = vmatpush1.bf16.msra.mxu0 0
        %1766 = vmatprep.subr.bf16.mxu0 0
        %1767 = vmatpush1.bf16.msra.mxu0 0
        %1768 = vmatprep.subr.bf16.mxu0 0
        %1769 = vmatpush1.bf16.msra.mxu0 0
        %1770 = vmatprep.subr.bf16.mxu0 0
        %1771 = vmatpush1.bf16.msra.mxu0 0
        %1772 = vmatprep.subr.bf16.mxu0 0
        %1773 = vmatpush1.bf16.msra.mxu0 0
        %1774 = vmatprep.subr.bf16.mxu0 0
        %1775 = vmatpush1.bf16.msra.mxu0 0
        %1776 = vmatprep.subr.bf16.mxu0 0
        %1777 = vmatpush1.bf16.msra.mxu0 0
        %1778 = vmatprep.subr.bf16.mxu0 0
        %1779 = vmatpush1.bf16.msra.mxu0 0
        %1780 = vmatprep.subr.bf16.mxu0 0
        %1781 = vmatpush1.bf16.msra.mxu0 0
        %1782 = vmatprep.subr.bf16.mxu0 0
        %1783 = vmatpush1.bf16.msra.mxu0 0
        %1784 = vmatprep.subr.bf16.mxu0 0
        %1785 = vmatpush1.bf16.msra.mxu0 0
        %1786 = vmatprep.subr.bf16.mxu0 0
        %1787 = vmatpush1.bf16.msra.mxu0 0
        %1788 = vmatprep.mubr.bf16.mxu0 0
        %1789 = vmatmul.mubr.bf16.gmra.mrb[0].mxu0 %v1750
        %v1790 = vpop.f32.mrb[0].mxu0
        %v1791 = vadd.f32 0.0, %v1790
        %v1792 = vpop.f32.mrb[0].mxu0
        %v1793 = vpop.f32.mrb[0].mxu0
        %v1794 = vpop.f32.mrb[0].mxu0
        %1795 = vdwg.mxu0
        %v1797 = vsel %vm1644, %v1734, 0
        %v1800 = vsel %vm1752, %v1742, 0
        %1802 = vmatprep.subr.bf16.mxu0 0
        %1803 = vmatpush1.bf16.msra.mxu0 %v1800
        %1804 = vmatprep.subr.bf16.mxu0 0
        %1805 = vmatpush1.bf16.msra.mxu0 0
        %1806 = vmatprep.subr.bf16.mxu0 0
        %1807 = vmatpush1.bf16.msra.mxu0 0
        %1808 = vmatprep.subr.bf16.mxu0 0
        %1809 = vmatpush1.bf16.msra.mxu0 0
        %1810 = vmatprep.subr.bf16.mxu0 0
        %1811 = vmatpush1.bf16.msra.mxu0 0
        %1812 = vmatprep.subr.bf16.mxu0 0
        %1813 = vmatpush1.bf16.msra.mxu0 0
        %1814 = vmatprep.subr.bf16.mxu0 0
        %1815 = vmatpush1.bf16.msra.mxu0 0
        %1816 = vmatprep.subr.bf16.mxu0 0
        %1817 = vmatpush1.bf16.msra.mxu0 0
        %1818 = vmatprep.subr.bf16.mxu0 0
        %1819 = vmatpush1.bf16.msra.mxu0 0
        %1820 = vmatprep.subr.bf16.mxu0 0
        %1821 = vmatpush1.bf16.msra.mxu0 0
        %1822 = vmatprep.subr.bf16.mxu0 0
        %1823 = vmatpush1.bf16.msra.mxu0 0
        %1824 = vmatprep.subr.bf16.mxu0 0
        %1825 = vmatpush1.bf16.msra.mxu0 0
        %1826 = vmatprep.subr.bf16.mxu0 0
        %1827 = vmatpush1.bf16.msra.mxu0 0
        %1828 = vmatprep.subr.bf16.mxu0 0
        %1829 = vmatpush1.bf16.msra.mxu0 0
        %1830 = vmatprep.subr.bf16.mxu0 0
        %1831 = vmatpush1.bf16.msra.mxu0 0
        %1832 = vmatprep.subr.bf16.mxu0 0
        %1833 = vmatpush1.bf16.msra.mxu0 0
        %1834 = vmatprep.mubr.bf16.mxu0 0
        %1835 = vmatmul.mubr.bf16.gmra.mrb[0].mxu0 %v1797
        %v1836 = vpop.f32.mrb[0].mxu0
        %v1837 = vadd.f32 0.0, %v1836
        %v1838 = vpop.f32.mrb[0].mxu0
        %v1839 = vpop.f32.mrb[0].mxu0
        %v1840 = vpop.f32.mrb[0].mxu0
        %1841 = vdwg.mxu0
        %v1843 = vsel %vm1644, %v1735, 0
        %v1846 = vsel %vm1752, %v1743, 0
        %1848 = vmatprep.subr.bf16.mxu0 0
        %1849 = vmatpush1.bf16.msra.mxu0 %v1846
        %1850 = vmatprep.subr.bf16.mxu0 0
        %1851 = vmatpush1.bf16.msra.mxu0 0
        %1852 = vmatprep.subr.bf16.mxu0 0
        %1853 = vmatpush1.bf16.msra.mxu0 0
        %1854 = vmatprep.subr.bf16.mxu0 0
        %1855 = vmatpush1.bf16.msra.mxu0 0
        %1856 = vmatprep.subr.bf16.mxu0 0
        %1857 = vmatpush1.bf16.msra.mxu0 0
        %1858 = vmatprep.subr.bf16.mxu0 0
        %1859 = vmatpush1.bf16.msra.mxu0 0
        %1860 = vmatprep.subr.bf16.mxu0 0
        %1861 = vmatpush1.bf16.msra.mxu0 0
        %1862 = vmatprep.subr.bf16.mxu0 0
        %1863 = vmatpush1.bf16.msra.mxu0 0
        %1864 = vmatprep.subr.bf16.mxu0 0
        %1865 = vmatpush1.bf16.msra.mxu0 0
        %1866 = vmatprep.subr.bf16.mxu0 0
        %1867 = vmatpush1.bf16.msra.mxu0 0
        %1868 = vmatprep.subr.bf16.mxu0 0
        %1869 = vmatpush1.bf16.msra.mxu0 0
        %1870 = vmatprep.subr.bf16.mxu0 0
        %1871 = vmatpush1.bf16.msra.mxu0 0
        %1872 = vmatprep.subr.bf16.mxu0 0
        %1873 = vmatpush1.bf16.msra.mxu0 0
        %1874 = vmatprep.subr.bf16.mxu0 0
        %1875 = vmatpush1.bf16.msra.mxu0 0
        %1876 = vmatprep.subr.bf16.mxu0 0
        %1877 = vmatpush1.bf16.msra.mxu0 0
        %1878 = vmatprep.subr.bf16.mxu0 0
        %1879 = vmatpush1.bf16.msra.mxu0 0
        %1880 = vmatprep.mubr.bf16.mxu0 0
        %1881 = vmatmul.mubr.bf16.gmra.mrb[0].mxu0 %v1843
        %v1882 = vpop.f32.mrb[0].mxu0
        %v1883 = vadd.f32 0.0, %v1882
        %v1884 = vpop.f32.mrb[0].mxu0
        %v1885 = vpop.f32.mrb[0].mxu0
        %v1886 = vpop.f32.mrb[0].mxu0
        %1887 = vdwg.mxu0
        %v1889 = vsel %vm1644, %v1736, 0
        %v1892 = vsel %vm1752, %v1744, 0
        %1894 = vmatprep.subr.bf16.mxu0 0
        %1895 = vmatpush1.bf16.msra.mxu0 %v1892
        %1896 = vmatprep.subr.bf16.mxu0 0
        %1897 = vmatpush1.bf16.msra.mxu0 0
        %1898 = vmatprep.subr.bf16.mxu0 0
        %1899 = vmatpush1.bf16.msra.mxu0 0
        %1900 = vmatprep.subr.bf16.mxu0 0
        %1901 = vmatpush1.bf16.msra.mxu0 0
        %1902 = vmatprep.subr.bf16.mxu0 0
        %1903 = vmatpush1.bf16.msra.mxu0 0
        %1904 = vmatprep.subr.bf16.mxu0 0
        %1905 = vmatpush1.bf16.msra.mxu0 0
        %1906 = vmatprep.subr.bf16.mxu0 0
        %1907 = vmatpush1.bf16.msra.mxu0 0
        %1908 = vmatprep.subr.bf16.mxu0 0
        %1909 = vmatpush1.bf16.msra.mxu0 0
        %1910 = vmatprep.subr.bf16.mxu0 0
        %1911 = vmatpush1.bf16.msra.mxu0 0
        %1912 = vmatprep.subr.bf16.mxu0 0
        %1913 = vmatpush1.bf16.msra.mxu0 0
        %1914 = vmatprep.subr.bf16.mxu0 0
        %1915 = vmatpush1.bf16.msra.mxu0 0
        %1916 = vmatprep.subr.bf16.mxu0 0
        %1917 = vmatpush1.bf16.msra.mxu0 0
        %1918 = vmatprep.subr.bf16.mxu0 0
        %1919 = vmatpush1.bf16.msra.mxu0 0
        %1920 = vmatprep.subr.bf16.mxu0 0
        %1921 = vmatpush1.bf16.msra.mxu0 0
        %1922 = vmatprep.subr.bf16.mxu0 0
        %1923 = vmatpush1.bf16.msra.mxu0 0
        %1924 = vmatprep.subr.bf16.mxu0 0
        %1925 = vmatpush1.bf16.msra.mxu0 0
        %1926 = vmatprep.mubr.bf16.mxu0 0
        %1927 = vmatmul.mubr.bf16.gmra.mrb[0].mxu0 %v1889
        %v1928 = vpop.f32.mrb[0].mxu0
        %v1929 = vadd.f32 0.0, %v1928
        %v1930 = vpop.f32.mrb[0].mxu0
        %v1931 = vpop.f32.mrb[0].mxu0
        %v1932 = vpop.f32.mrb[0].mxu0
        %1933 = vdwg.mxu0
        %v1935 = vsel %vm1644, %v1737, 0
        %v1938 = vsel %vm1752, %v1745, 0
        %1940 = vmatprep.subr.bf16.mxu0 0
        %1941 = vmatpush1.bf16.msra.mxu0 %v1938
        %1942 = vmatprep.subr.bf16.mxu0 0
        %1943 = vmatpush1.bf16.msra.mxu0 0
        %1944 = vmatprep.subr.bf16.mxu0 0
        %1945 = vmatpush1.bf16.msra.mxu0 0
        %1946 = vmatprep.subr.bf16.mxu0 0
        %1947 = vmatpush1.bf16.msra.mxu0 0
        %1948 = vmatprep.subr.bf16.mxu0 0
        %1949 = vmatpush1.bf16.msra.mxu0 0
        %1950 = vmatprep.subr.bf16.mxu0 0
        %1951 = vmatpush1.bf16.msra.mxu0 0
        %1952 = vmatprep.subr.bf16.mxu0 0
        %1953 = vmatpush1.bf16.msra.mxu0 0
        %1954 = vmatprep.subr.bf16.mxu0 0
        %1955 = vmatpush1.bf16.msra.mxu0 0
        %1956 = vmatprep.subr.bf16.mxu0 0
        %1957 = vmatpush1.bf16.msra.mxu0 0
        %1958 = vmatprep.subr.bf16.mxu0 0
        %1959 = vmatpush1.bf16.msra.mxu0 0
        %1960 = vmatprep.subr.bf16.mxu0 0
        %1961 = vmatpush1.bf16.msra.mxu0 0
        %1962 = vmatprep.subr.bf16.mxu0 0
        %1963 = vmatpush1.bf16.msra.mxu0 0
        %1964 = vmatprep.subr.bf16.mxu0 0
        %1965 = vmatpush1.bf16.msra.mxu0 0
        %1966 = vmatprep.subr.bf16.mxu0 0
        %1967 = vmatpush1.bf16.msra.mxu0 0
        %1968 = vmatprep.subr.bf16.mxu0 0
        %1969 = vmatpush1.bf16.msra.mxu0 0
        %1970 = vmatprep.subr.bf16.mxu0 0
        %1971 = vmatpush1.bf16.msra.mxu0 0
        %1972 = vmatprep.mubr.bf16.mxu0 0
        %1973 = vmatmul.mubr.bf16.gmra.mrb[0].mxu0 %v1935
        %v1974 = vpop.f32.mrb[0].mxu0
        %v1975 = vadd.f32 0.0, %v1974
        %v1976 = vpop.f32.mrb[0].mxu0
        %v1977 = vpop.f32.mrb[0].mxu0
        %v1978 = vpop.f32.mrb[0].mxu0
        %1979 = vdwg.mxu0
        %v1981 = vsel %vm1644, %v1738, 0
        %v1984 = vsel %vm1752, %v1746, 0
        %1986 = vmatprep.subr.bf16.mxu0 0
        %1987 = vmatpush1.bf16.msra.mxu0 %v1984
        %1988 = vmatprep.subr.bf16.mxu0 0
        %1989 = vmatpush1.bf16.msra.mxu0 0
        %1990 = vmatprep.subr.bf16.mxu0 0
        %1991 = vmatpush1.bf16.msra.mxu0 0
        %1992 = vmatprep.subr.bf16.mxu0 0
        %1993 = vmatpush1.bf16.msra.mxu0 0
        %1994 = vmatprep.subr.bf16.mxu0 0
        %1995 = vmatpush1.bf16.msra.mxu0 0
        %1996 = vmatprep.subr.bf16.mxu0 0
        %1997 = vmatpush1.bf16.msra.mxu0 0
        %1998 = vmatprep.subr.bf16.mxu0 0
        %1999 = vmatpush1.bf16.msra.mxu0 0
        %2000 = vmatprep.subr.bf16.mxu0 0
        %2001 = vmatpush1.bf16.msra.mxu0 0
        %2002 = vmatprep.subr.bf16.mxu0 0
        %2003 = vmatpush1.bf16.msra.mxu0 0
        %2004 = vmatprep.subr.bf16.mxu0 0
        %2005 = vmatpush1.bf16.msra.mxu0 0
        %2006 = vmatprep.subr.bf16.mxu0 0
        %2007 = vmatpush1.bf16.msra.mxu0 0
        %2008 = vmatprep.subr.bf16.mxu0 0
        %2009 = vmatpush1.bf16.msra.mxu0 0
        %2010 = vmatprep.subr.bf16.mxu0 0
        %2011 = vmatpush1.bf16.msra.mxu0 0
        %2012 = vmatprep.subr.bf16.mxu0 0
        %2013 = vmatpush1.bf16.msra.mxu0 0
        %2014 = vmatprep.subr.bf16.mxu0 0
        %2015 = vmatpush1.bf16.msra.mxu0 0
        %2016 = vmatprep.subr.bf16.mxu0 0
        %2017 = vmatpush1.bf16.msra.mxu0 0
        %2018 = vmatprep.mubr.bf16.mxu0 0
        %2019 = vmatmul.mubr.bf16.gmra.mrb[0].mxu0 %v1981
        %v2020 = vpop.f32.mrb[0].mxu0
        %v2021 = vadd.f32 0.0, %v2020
        %v2022 = vpop.f32.mrb[0].mxu0
        %v2023 = vpop.f32.mrb[0].mxu0
        %v2024 = vpop.f32.mrb[0].mxu0
        %2025 = vdwg.mxu0
        %v2027 = vsel %vm1644, %v1739, 0
        %v2030 = vsel %vm1752, %v1747, 0
        %2032 = vmatprep.subr.bf16.mxu0 0
        %2033 = vmatpush1.bf16.msra.mxu0 %v2030
        %2034 = vmatprep.subr.bf16.mxu0 0
        %2035 = vmatpush1.bf16.msra.mxu0 0
        %2036 = vmatprep.subr.bf16.mxu0 0
        %2037 = vmatpush1.bf16.msra.mxu0 0
        %2038 = vmatprep.subr.bf16.mxu0 0
        %2039 = vmatpush1.bf16.msra.mxu0 0
        %2040 = vmatprep.subr.bf16.mxu0 0
        %2041 = vmatpush1.bf16.msra.mxu0 0
        %2042 = vmatprep.subr.bf16.mxu0 0
        %2043 = vmatpush1.bf16.msra.mxu0 0
        %2044 = vmatprep.subr.bf16.mxu0 0
        %2045 = vmatpush1.bf16.msra.mxu0 0
        %2046 = vmatprep.subr.bf16.mxu0 0
        %2047 = vmatpush1.bf16.msra.mxu0 0
        %2048 = vmatprep.subr.bf16.mxu0 0
        %2049 = vmatpush1.bf16.msra.mxu0 0
        %2050 = vmatprep.subr.bf16.mxu0 0
        %2051 = vmatpush1.bf16.msra.mxu0 0
        %2052 = vmatprep.subr.bf16.mxu0 0
        %2053 = vmatpush1.bf16.msra.mxu0 0
        %2054 = vmatprep.subr.bf16.mxu0 0
        %2055 = vmatpush1.bf16.msra.mxu0 0
        %2056 = vmatprep.subr.bf16.mxu0 0
        %2057 = vmatpush1.bf16.msra.mxu0 0
        %2058 = vmatprep.subr.bf16.mxu0 0
        %2059 = vmatpush1.bf16.msra.mxu0 0
        %2060 = vmatprep.subr.bf16.mxu0 0
        %2061 = vmatpush1.bf16.msra.mxu0 0
        %2062 = vmatprep.subr.bf16.mxu0 0
        %2063 = vmatpush1.bf16.msra.mxu0 0
        %2064 = vmatprep.mubr.bf16.mxu0 0
        %2065 = vmatmul.mubr.bf16.gmra.mrb[0].mxu0 %v2027
        %v2066 = vpop.f32.mrb[0].mxu0
        %v2067 = vadd.f32 0.0, %v2066
        %v2068 = vpop.f32.mrb[0].mxu0
        %v2069 = vpop.f32.mrb[0].mxu0
        %v2070 = vpop.f32.mrb[0].mxu0
        %2071 = vdwg.mxu0
        %v2073 = vsel %vm1644, %v1740, 0
        %v2076 = vsel %vm1752, %v1748, 0
        %2078 = vmatprep.subr.bf16.mxu0 0
        %2079 = vmatpush1.bf16.msra.mxu0 %v2076
        %2080 = vmatprep.subr.bf16.mxu0 0
        %2081 = vmatpush1.bf16.msra.mxu0 0
        %2082 = vmatprep.subr.bf16.mxu0 0
        %2083 = vmatpush1.bf16.msra.mxu0 0
        %2084 = vmatprep.subr.bf16.mxu0 0
        %2085 = vmatpush1.bf16.msra.mxu0 0
        %2086 = vmatprep.subr.bf16.mxu0 0
        %2087 = vmatpush1.bf16.msra.mxu0 0
        %2088 = vmatprep.subr.bf16.mxu0 0
        %2089 = vmatpush1.bf16.msra.mxu0 0
        %2090 = vmatprep.subr.bf16.mxu0 0
        %2091 = vmatpush1.bf16.msra.mxu0 0
        %2092 = vmatprep.subr.bf16.mxu0 0
        %2093 = vmatpush1.bf16.msra.mxu0 0
        %2094 = vmatprep.subr.bf16.mxu0 0
        %2095 = vmatpush1.bf16.msra.mxu0 0
        %2096 = vmatprep.subr.bf16.mxu0 0
        %2097 = vmatpush1.bf16.msra.mxu0 0
        %2098 = vmatprep.subr.bf16.mxu0 0
        %2099 = vmatpush1.bf16.msra.mxu0 0
        %2100 = vmatprep.subr.bf16.mxu0 0
        %2101 = vmatpush1.bf16.msra.mxu0 0
        %2102 = vmatprep.subr.bf16.mxu0 0
        %2103 = vmatpush1.bf16.msra.mxu0 0
        %2104 = vmatprep.subr.bf16.mxu0 0
        %2105 = vmatpush1.bf16.msra.mxu0 0
        %2106 = vmatprep.subr.bf16.mxu0 0
        %2107 = vmatpush1.bf16.msra.mxu0 0
        %2108 = vmatprep.subr.bf16.mxu0 0
        %2109 = vmatpush1.bf16.msra.mxu0 0
        %2110 = vmatprep.mubr.bf16.mxu0 0
        %2111 = vmatmul.mubr.bf16.gmra.mrb[0].mxu0 %v2073
        %v2112 = vpop.f32.mrb[0].mxu0
        %v2113 = vadd.f32 0.0, %v2112
        %v2114 = vpop.f32.mrb[0].mxu0
        %v2115 = vpop.f32.mrb[0].mxu0
        %v2116 = vpop.f32.mrb[0].mxu0
        %2117 = vdwg.mxu0
        %v2118 = vpack.c.bf16 %v1837, %v1791
        %v2119 = vpack.c.bf16 %v1929, %v1883
        %v2120 = vpack.c.bf16 %v2021, %v1975
        %v2121 = vpack.c.bf16 %v2113, %v2067
        %2122 = vst.msk [vmem:[#allocation2] sm:$0xff] %vm1275, %v2118
        %2123 = vst.msk [vmem:[#allocation2 + $0x8] sm:$0xff] %vm1275, %v2119
        %2124 = vst.msk [vmem:[#allocation2 + $0x10] sm:$0xff] %vm1275, %v2120
        %2125 = vst.msk [vmem:[#allocation2 + $0x18] sm:$0xff] %vm1275, %v2121
        %2127 = vrot.lane.b32.xlu0 %v1259, 96
        %v2128 = vpop.permute.xlu0 %2127
        %2130 = vrot.lane.b32.xlu0 %v1267, 96
        %v2131 = vpop.permute.xlu0 %2130
        %v2133 = vsel %vm1275, %v2128, 0
        %v2136 = vsel %vm1275, %v2131, 0
        %2138 = vmatprep.subr.bf16.mxu0 0
        %2139 = vmatpush1.bf16.xpose.msra.mxu0 %v2136
        %2140 = vmatprep.subr.bf16.mxu0 0
        %2141 = vmatpush1.bf16.xpose.msra.mxu0 0
        %2142 = vmatprep.subr.bf16.mxu0 0
        %2143 = vmatpush1.bf16.xpose.msra.mxu0 0
        %2144 = vmatprep.subr.bf16.mxu0 0
        %2145 = vmatpush1.bf16.xpose.msra.mxu0 0
        %2146 = vmatprep.subr.bf16.mxu0 0
        %2147 = vmatpush1.bf16.xpose.msra.mxu0 0
        %2148 = vmatprep.subr.bf16.mxu0 0
        %2149 = vmatpush1.bf16.xpose.msra.mxu0 0
        %2150 = vmatprep.subr.bf16.mxu0 0
        %2151 = vmatpush1.bf16.xpose.msra.mxu0 0
        %2152 = vmatprep.subr.bf16.mxu0 0
        %2153 = vmatpush1.bf16.xpose.msra.mxu0 0
        %2154 = vmatprep.subr.bf16.mxu0 0
        %2155 = vmatpush1.bf16.xpose.msra.mxu0 0
        %2156 = vmatprep.subr.bf16.mxu0 0
        %2157 = vmatpush1.bf16.xpose.msra.mxu0 0
        %2158 = vmatprep.subr.bf16.mxu0 0
        %2159 = vmatpush1.bf16.xpose.msra.mxu0 0
        %2160 = vmatprep.subr.bf16.mxu0 0
        %2161 = vmatpush1.bf16.xpose.msra.mxu0 0
        %2162 = vmatprep.subr.bf16.mxu0 0
        %2163 = vmatpush1.bf16.xpose.msra.mxu0 0
        %2164 = vmatprep.subr.bf16.mxu0 0
        %2165 = vmatpush1.bf16.xpose.msra.mxu0 0
        %2166 = vmatprep.subr.bf16.mxu0 0
        %2167 = vmatpush1.bf16.xpose.msra.mxu0 0
        %2168 = vmatprep.subr.bf16.mxu0 0
        %2169 = vmatpush1.bf16.xpose.msra.mxu0 0
        %2170 = vmatprep.mubr.bf16.mxu0 0
        %2171 = vmatmul.mubr.bf16.gmra.mrb[0].mxu0 %v2133
        %v2172 = vpop.f32.mrb[0].mxu0
        %v2173 = vadd.f32 0.0, %v2172
        %v2174 = vpop.f32.mrb[0].mxu0
        %v2175 = vpop.f32.mrb[0].mxu0
        %v2176 = vpop.f32.mrb[0].mxu0
        %2177 = vdwg.mxu0
        %2179 = vrot.lane.b32.xlu0 %v1260, 96
        %v2180 = vpop.permute.xlu0 %2179
        %2182 = vrot.lane.b32.xlu0 %v1268, 96
        %v2183 = vpop.permute.xlu0 %2182
        %v2185 = vsel %vm1275, %v2180, 0
        %v2188 = vsel %vm1275, %v2183, 0
        %2190 = vmatprep.subr.bf16.mxu0 0
        %2191 = vmatpush1.bf16.xpose.msra.mxu0 %v2188
        %2192 = vmatprep.subr.bf16.mxu0 0
        %2193 = vmatpush1.bf16.xpose.msra.mxu0 0
        %2194 = vmatprep.subr.bf16.mxu0 0
        %2195 = vmatpush1.bf16.xpose.msra.mxu0 0
        %2196 = vmatprep.subr.bf16.mxu0 0
        %2197 = vmatpush1.bf16.xpose.msra.mxu0 0
        %2198 = vmatprep.subr.bf16.mxu0 0
        %2199 = vmatpush1.bf16.xpose.msra.mxu0 0
        %2200 = vmatprep.subr.bf16.mxu0 0
        %2201 = vmatpush1.bf16.xpose.msra.mxu0 0
        %2202 = vmatprep.subr.bf16.mxu0 0
        %2203 = vmatpush1.bf16.xpose.msra.mxu0 0
        %2204 = vmatprep.subr.bf16.mxu0 0
        %2205 = vmatpush1.bf16.xpose.msra.mxu0 0
        %2206 = vmatprep.subr.bf16.mxu0 0
        %2207 = vmatpush1.bf16.xpose.msra.mxu0 0
        %2208 = vmatprep.subr.bf16.mxu0 0
        %2209 = vmatpush1.bf16.xpose.msra.mxu0 0
        %2210 = vmatprep.subr.bf16.mxu0 0
        %2211 = vmatpush1.bf16.xpose.msra.mxu0 0
        %2212 = vmatprep.subr.bf16.mxu0 0
        %2213 = vmatpush1.bf16.xpose.msra.mxu0 0
        %2214 = vmatprep.subr.bf16.mxu0 0
        %2215 = vmatpush1.bf16.xpose.msra.mxu0 0
        %2216 = vmatprep.subr.bf16.mxu0 0
        %2217 = vmatpush1.bf16.xpose.msra.mxu0 0
        %2218 = vmatprep.subr.bf16.mxu0 0
        %2219 = vmatpush1.bf16.xpose.msra.mxu0 0
        %2220 = vmatprep.subr.bf16.mxu0 0
        %2221 = vmatpush1.bf16.xpose.msra.mxu0 0
        %2222 = vmatprep.mubr.bf16.mxu0 0
        %2223 = vmatmul.mubr.bf16.gmra.mrb[0].mxu0 %v2185
        %v2224 = vpop.f32.mrb[0].mxu0
        %v2225 = vadd.f32 0.0, %v2224
        %v2226 = vpop.f32.mrb[0].mxu0
        %v2227 = vpop.f32.mrb[0].mxu0
        %v2228 = vpop.f32.mrb[0].mxu0
        %2229 = vdwg.mxu0
        %2231 = vrot.lane.b32.xlu0 %v1261, 96
        %v2232 = vpop.permute.xlu0 %2231
        %2234 = vrot.lane.b32.xlu0 %v1269, 96
        %v2235 = vpop.permute.xlu0 %2234
        %v2237 = vsel %vm1275, %v2232, 0
        %v2240 = vsel %vm1275, %v2235, 0
        %2242 = vmatprep.subr.bf16.mxu0 0
        %2243 = vmatpush1.bf16.xpose.msra.mxu0 %v2240
        %2244 = vmatprep.subr.bf16.mxu0 0
        %2245 = vmatpush1.bf16.xpose.msra.mxu0 0
        %2246 = vmatprep.subr.bf16.mxu0 0
        %2247 = vmatpush1.bf16.xpose.msra.mxu0 0
        %2248 = vmatprep.subr.bf16.mxu0 0
        %2249 = vmatpush1.bf16.xpose.msra.mxu0 0
        %2250 = vmatprep.subr.bf16.mxu0 0
        %2251 = vmatpush1.bf16.xpose.msra.mxu0 0
        %2252 = vmatprep.subr.bf16.mxu0 0
        %2253 = vmatpush1.bf16.xpose.msra.mxu0 0
        %2254 = vmatprep.subr.bf16.mxu0 0
        %2255 = vmatpush1.bf16.xpose.msra.mxu0 0
        %2256 = vmatprep.subr.bf16.mxu0 0
        %2257 = vmatpush1.bf16.xpose.msra.mxu0 0
        %2258 = vmatprep.subr.bf16.mxu0 0
        %2259 = vmatpush1.bf16.xpose.msra.mxu0 0
        %2260 = vmatprep.subr.bf16.mxu0 0
        %2261 = vmatpush1.bf16.xpose.msra.mxu0 0
        %2262 = vmatprep.subr.bf16.mxu0 0
        %2263 = vmatpush1.bf16.xpose.msra.mxu0 0
        %2264 = vmatprep.subr.bf16.mxu0 0
        %2265 = vmatpush1.bf16.xpose.msra.mxu0 0
        %2266 = vmatprep.subr.bf16.mxu0 0
        %2267 = vmatpush1.bf16.xpose.msra.mxu0 0
        %2268 = vmatprep.subr.bf16.mxu0 0
        %2269 = vmatpush1.bf16.xpose.msra.mxu0 0
        %2270 = vmatprep.subr.bf16.mxu0 0
        %2271 = vmatpush1.bf16.xpose.msra.mxu0 0
        %2272 = vmatprep.subr.bf16.mxu0 0
        %2273 = vmatpush1.bf16.xpose.msra.mxu0 0
        %2274 = vmatprep.mubr.bf16.mxu0 0
        %2275 = vmatmul.mubr.bf16.gmra.mrb[0].mxu0 %v2237
        %v2276 = vpop.f32.mrb[0].mxu0
        %v2277 = vadd.f32 0.0, %v2276
        %v2278 = vpop.f32.mrb[0].mxu0
        %v2279 = vpop.f32.mrb[0].mxu0
        %v2280 = vpop.f32.mrb[0].mxu0
        %2281 = vdwg.mxu0
        %2283 = vrot.lane.b32.xlu0 %v1262, 96
        %v2284 = vpop.permute.xlu0 %2283
        %2286 = vrot.lane.b32.xlu0 %v1270, 96
        %v2287 = vpop.permute.xlu0 %2286
        %v2289 = vsel %vm1275, %v2284, 0
        %v2292 = vsel %vm1275, %v2287, 0
        %2294 = vmatprep.subr.bf16.mxu0 0
        %2295 = vmatpush1.bf16.xpose.msra.mxu0 %v2292
        %2296 = vmatprep.subr.bf16.mxu0 0
        %2297 = vmatpush1.bf16.xpose.msra.mxu0 0
        %2298 = vmatprep.subr.bf16.mxu0 0
        %2299 = vmatpush1.bf16.xpose.msra.mxu0 0
        %2300 = vmatprep.subr.bf16.mxu0 0
        %2301 = vmatpush1.bf16.xpose.msra.mxu0 0
        %2302 = vmatprep.subr.bf16.mxu0 0
        %2303 = vmatpush1.bf16.xpose.msra.mxu0 0
        %2304 = vmatprep.subr.bf16.mxu0 0
        %2305 = vmatpush1.bf16.xpose.msra.mxu0 0
        %2306 = vmatprep.subr.bf16.mxu0 0
        %2307 = vmatpush1.bf16.xpose.msra.mxu0 0
        %2308 = vmatprep.subr.bf16.mxu0 0
        %2309 = vmatpush1.bf16.xpose.msra.mxu0 0
        %2310 = vmatprep.subr.bf16.mxu0 0
        %2311 = vmatpush1.bf16.xpose.msra.mxu0 0
        %2312 = vmatprep.subr.bf16.mxu0 0
        %2313 = vmatpush1.bf16.xpose.msra.mxu0 0
        %2314 = vmatprep.subr.bf16.mxu0 0
        %2315 = vmatpush1.bf16.xpose.msra.mxu0 0
        %2316 = vmatprep.subr.bf16.mxu0 0
        %2317 = vmatpush1.bf16.xpose.msra.mxu0 0
        %2318 = vmatprep.subr.bf16.mxu0 0
        %2319 = vmatpush1.bf16.xpose.msra.mxu0 0
        %2320 = vmatprep.subr.bf16.mxu0 0
        %2321 = vmatpush1.bf16.xpose.msra.mxu0 0
        %2322 = vmatprep.subr.bf16.mxu0 0
        %2323 = vmatpush1.bf16.xpose.msra.mxu0 0
        %2324 = vmatprep.subr.bf16.mxu0 0
        %2325 = vmatpush1.bf16.xpose.msra.mxu0 0
        %2326 = vmatprep.mubr.bf16.mxu0 0
        %2327 = vmatmul.mubr.bf16.gmra.mrb[0].mxu0 %v2289
        %v2328 = vpop.f32.mrb[0].mxu0
        %v2329 = vadd.f32 0.0, %v2328
        %v2330 = vpop.f32.mrb[0].mxu0
        %v2331 = vpop.f32.mrb[0].mxu0
        %v2332 = vpop.f32.mrb[0].mxu0
        %2333 = vdwg.mxu0
        %2335 = vrot.lane.b32.xlu0 %v1263, 96
        %v2336 = vpop.permute.xlu0 %2335
        %2338 = vrot.lane.b32.xlu0 %v1271, 96
        %v2339 = vpop.permute.xlu0 %2338
        %v2341 = vsel %vm1275, %v2336, 0
        %v2344 = vsel %vm1275, %v2339, 0
        %2346 = vmatprep.subr.bf16.mxu0 0
        %2347 = vmatpush1.bf16.xpose.msra.mxu0 %v2344
        %2348 = vmatprep.subr.bf16.mxu0 0
        %2349 = vmatpush1.bf16.xpose.msra.mxu0 0
        %2350 = vmatprep.subr.bf16.mxu0 0
        %2351 = vmatpush1.bf16.xpose.msra.mxu0 0
        %2352 = vmatprep.subr.bf16.mxu0 0
        %2353 = vmatpush1.bf16.xpose.msra.mxu0 0
        %2354 = vmatprep.subr.bf16.mxu0 0
        %2355 = vmatpush1.bf16.xpose.msra.mxu0 0
        %2356 = vmatprep.subr.bf16.mxu0 0
        %2357 = vmatpush1.bf16.xpose.msra.mxu0 0
        %2358 = vmatprep.subr.bf16.mxu0 0
        %2359 = vmatpush1.bf16.xpose.msra.mxu0 0
        %2360 = vmatprep.subr.bf16.mxu0 0
        %2361 = vmatpush1.bf16.xpose.msra.mxu0 0
        %2362 = vmatprep.subr.bf16.mxu0 0
        %2363 = vmatpush1.bf16.xpose.msra.mxu0 0
        %2364 = vmatprep.subr.bf16.mxu0 0
        %2365 = vmatpush1.bf16.xpose.msra.mxu0 0
        %2366 = vmatprep.subr.bf16.mxu0 0
        %2367 = vmatpush1.bf16.xpose.msra.mxu0 0
        %2368 = vmatprep.subr.bf16.mxu0 0
        %2369 = vmatpush1.bf16.xpose.msra.mxu0 0
        %2370 = vmatprep.subr.bf16.mxu0 0
        %2371 = vmatpush1.bf16.xpose.msra.mxu0 0
        %2372 = vmatprep.subr.bf16.mxu0 0
        %2373 = vmatpush1.bf16.xpose.msra.mxu0 0
        %2374 = vmatprep.subr.bf16.mxu0 0
        %2375 = vmatpush1.bf16.xpose.msra.mxu0 0
        %2376 = vmatprep.subr.bf16.mxu0 0
        %2377 = vmatpush1.bf16.xpose.msra.mxu0 0
        %2378 = vmatprep.mubr.bf16.mxu0 0
        %2379 = vmatmul.mubr.bf16.gmra.mrb[0].mxu0 %v2341
        %v2380 = vpop.f32.mrb[0].mxu0
        %v2381 = vadd.f32 0.0, %v2380
        %v2382 = vpop.f32.mrb[0].mxu0
        %v2383 = vpop.f32.mrb[0].mxu0
        %v2384 = vpop.f32.mrb[0].mxu0
        %2385 = vdwg.mxu0
        %2387 = vrot.lane.b32.xlu0 %v1264, 96
        %v2388 = vpop.permute.xlu0 %2387
        %2390 = vrot.lane.b32.xlu0 %v1272, 96
        %v2391 = vpop.permute.xlu0 %2390
        %v2393 = vsel %vm1275, %v2388, 0
        %v2396 = vsel %vm1275, %v2391, 0
        %2398 = vmatprep.subr.bf16.mxu0 0
        %2399 = vmatpush1.bf16.xpose.msra.mxu0 %v2396
        %2400 = vmatprep.subr.bf16.mxu0 0
        %2401 = vmatpush1.bf16.xpose.msra.mxu0 0
        %2402 = vmatprep.subr.bf16.mxu0 0
        %2403 = vmatpush1.bf16.xpose.msra.mxu0 0
        %2404 = vmatprep.subr.bf16.mxu0 0
        %2405 = vmatpush1.bf16.xpose.msra.mxu0 0
        %2406 = vmatprep.subr.bf16.mxu0 0
        %2407 = vmatpush1.bf16.xpose.msra.mxu0 0
        %2408 = vmatprep.subr.bf16.mxu0 0
        %2409 = vmatpush1.bf16.xpose.msra.mxu0 0
        %2410 = vmatprep.subr.bf16.mxu0 0
        %2411 = vmatpush1.bf16.xpose.msra.mxu0 0
        %2412 = vmatprep.subr.bf16.mxu0 0
        %2413 = vmatpush1.bf16.xpose.msra.mxu0 0
        %2414 = vmatprep.subr.bf16.mxu0 0
        %2415 = vmatpush1.bf16.xpose.msra.mxu0 0
        %2416 = vmatprep.subr.bf16.mxu0 0
        %2417 = vmatpush1.bf16.xpose.msra.mxu0 0
        %2418 = vmatprep.subr.bf16.mxu0 0
        %2419 = vmatpush1.bf16.xpose.msra.mxu0 0
        %2420 = vmatprep.subr.bf16.mxu0 0
        %2421 = vmatpush1.bf16.xpose.msra.mxu0 0
        %2422 = vmatprep.subr.bf16.mxu0 0
        %2423 = vmatpush1.bf16.xpose.msra.mxu0 0
        %2424 = vmatprep.subr.bf16.mxu0 0
        %2425 = vmatpush1.bf16.xpose.msra.mxu0 0
        %2426 = vmatprep.subr.bf16.mxu0 0
        %2427 = vmatpush1.bf16.xpose.msra.mxu0 0
        %2428 = vmatprep.subr.bf16.mxu0 0
        %2429 = vmatpush1.bf16.xpose.msra.mxu0 0
        %2430 = vmatprep.mubr.bf16.mxu0 0
        %2431 = vmatmul.mubr.bf16.gmra.mrb[0].mxu0 %v2393
        %v2432 = vpop.f32.mrb[0].mxu0
        %v2433 = vadd.f32 0.0, %v2432
        %v2434 = vpop.f32.mrb[0].mxu0
        %v2435 = vpop.f32.mrb[0].mxu0
        %v2436 = vpop.f32.mrb[0].mxu0
        %2437 = vdwg.mxu0
        %2439 = vrot.lane.b32.xlu0 %v1265, 96
        %v2440 = vpop.permute.xlu0 %2439
        %2442 = vrot.lane.b32.xlu0 %v1273, 96
        %v2443 = vpop.permute.xlu0 %2442
        %v2445 = vsel %vm1275, %v2440, 0
        %v2448 = vsel %vm1275, %v2443, 0
        %2450 = vmatprep.subr.bf16.mxu0 0
        %2451 = vmatpush1.bf16.xpose.msra.mxu0 %v2448
        %2452 = vmatprep.subr.bf16.mxu0 0
        %2453 = vmatpush1.bf16.xpose.msra.mxu0 0
        %2454 = vmatprep.subr.bf16.mxu0 0
        %2455 = vmatpush1.bf16.xpose.msra.mxu0 0
        %2456 = vmatprep.subr.bf16.mxu0 0
        %2457 = vmatpush1.bf16.xpose.msra.mxu0 0
        %2458 = vmatprep.subr.bf16.mxu0 0
        %2459 = vmatpush1.bf16.xpose.msra.mxu0 0
        %2460 = vmatprep.subr.bf16.mxu0 0
        %2461 = vmatpush1.bf16.xpose.msra.mxu0 0
        %2462 = vmatprep.subr.bf16.mxu0 0
        %2463 = vmatpush1.bf16.xpose.msra.mxu0 0
        %2464 = vmatprep.subr.bf16.mxu0 0
        %2465 = vmatpush1.bf16.xpose.msra.mxu0 0
        %2466 = vmatprep.subr.bf16.mxu0 0
        %2467 = vmatpush1.bf16.xpose.msra.mxu0 0
        %2468 = vmatprep.subr.bf16.mxu0 0
        %2469 = vmatpush1.bf16.xpose.msra.mxu0 0
        %2470 = vmatprep.subr.bf16.mxu0 0
        %2471 = vmatpush1.bf16.xpose.msra.mxu0 0
        %2472 = vmatprep.subr.bf16.mxu0 0
        %2473 = vmatpush1.bf16.xpose.msra.mxu0 0
        %2474 = vmatprep.subr.bf16.mxu0 0
        %2475 = vmatpush1.bf16.xpose.msra.mxu0 0
        %2476 = vmatprep.subr.bf16.mxu0 0
        %2477 = vmatpush1.bf16.xpose.msra.mxu0 0
        %2478 = vmatprep.subr.bf16.mxu0 0
        %2479 = vmatpush1.bf16.xpose.msra.mxu0 0
        %2480 = vmatprep.subr.bf16.mxu0 0
        %2481 = vmatpush1.bf16.xpose.msra.mxu0 0
        %2482 = vmatprep.mubr.bf16.mxu0 0
        %2483 = vmatmul.mubr.bf16.gmra.mrb[0].mxu0 %v2445
        %v2484 = vpop.f32.mrb[0].mxu0
        %v2485 = vadd.f32 0.0, %v2484
        %v2486 = vpop.f32.mrb[0].mxu0
        %v2487 = vpop.f32.mrb[0].mxu0
        %v2488 = vpop.f32.mrb[0].mxu0
        %2489 = vdwg.mxu0
        %2491 = vrot.lane.b32.xlu0 %v1266, 96
        %v2492 = vpop.permute.xlu0 %2491
        %2494 = vrot.lane.b32.xlu0 %v1274, 96
        %v2495 = vpop.permute.xlu0 %2494
        %v2497 = vsel %vm1275, %v2492, 0
        %v2500 = vsel %vm1275, %v2495, 0
        %2502 = vmatprep.subr.bf16.mxu0 0
        %2503 = vmatpush1.bf16.xpose.msra.mxu0 %v2500
        %2504 = vmatprep.subr.bf16.mxu0 0
        %2505 = vmatpush1.bf16.xpose.msra.mxu0 0
        %2506 = vmatprep.subr.bf16.mxu0 0
        %2507 = vmatpush1.bf16.xpose.msra.mxu0 0
        %2508 = vmatprep.subr.bf16.mxu0 0
        %2509 = vmatpush1.bf16.xpose.msra.mxu0 0
        %2510 = vmatprep.subr.bf16.mxu0 0
        %2511 = vmatpush1.bf16.xpose.msra.mxu0 0
        %2512 = vmatprep.subr.bf16.mxu0 0
        %2513 = vmatpush1.bf16.xpose.msra.mxu0 0
        %2514 = vmatprep.subr.bf16.mxu0 0
        %2515 = vmatpush1.bf16.xpose.msra.mxu0 0
        %2516 = vmatprep.subr.bf16.mxu0 0
        %2517 = vmatpush1.bf16.xpose.msra.mxu0 0
        %2518 = vmatprep.subr.bf16.mxu0 0
        %2519 = vmatpush1.bf16.xpose.msra.mxu0 0
        %2520 = vmatprep.subr.bf16.mxu0 0
        %2521 = vmatpush1.bf16.xpose.msra.mxu0 0
        %2522 = vmatprep.subr.bf16.mxu0 0
        %2523 = vmatpush1.bf16.xpose.msra.mxu0 0
        %2524 = vmatprep.subr.bf16.mxu0 0
        %2525 = vmatpush1.bf16.xpose.msra.mxu0 0
        %2526 = vmatprep.subr.bf16.mxu0 0
        %2527 = vmatpush1.bf16.xpose.msra.mxu0 0
        %2528 = vmatprep.subr.bf16.mxu0 0
        %2529 = vmatpush1.bf16.xpose.msra.mxu0 0
        %2530 = vmatprep.subr.bf16.mxu0 0
        %2531 = vmatpush1.bf16.xpose.msra.mxu0 0
        %2532 = vmatprep.subr.bf16.mxu0 0
        %2533 = vmatpush1.bf16.xpose.msra.mxu0 0
        %2534 = vmatprep.mubr.bf16.mxu0 0
        %2535 = vmatmul.mubr.bf16.gmra.mrb[0].mxu0 %v2497
        %v2536 = vpop.f32.mrb[0].mxu0
        %v2537 = vadd.f32 0.0, %v2536
        %v2538 = vpop.f32.mrb[0].mxu0
        %v2539 = vpop.f32.mrb[0].mxu0
        %v2540 = vpop.f32.mrb[0].mxu0
        %2541 = vdwg.mxu0
        %v2542 = vsel %vm1644, %v2173, -inf
        %2543 = vmax.xlane.f32.xlu0 %v2542
        %v2544 = vpop.xlane.xlu0 %2543
        %v2545 = vsel %vm1644, %v2225, -inf
        %2546 = vmax.xlane.f32.xlu0 %v2545
        %v2547 = vpop.xlane.xlu0 %2546
        %v2548 = vsel %vm1644, %v2277, -inf
        %2549 = vmax.xlane.f32.xlu0 %v2548
        %v2550 = vpop.xlane.xlu0 %2549
        %v2551 = vsel %vm1644, %v2329, -inf
        %2552 = vmax.xlane.f32.xlu0 %v2551
        %v2553 = vpop.xlane.xlu0 %2552
        %v2554 = vsel %vm1644, %v2381, -inf
        %2555 = vmax.xlane.f32.xlu0 %v2554
        %v2556 = vpop.xlane.xlu0 %2555
        %v2557 = vsel %vm1644, %v2433, -inf
        %2558 = vmax.xlane.f32.xlu0 %v2557
        %v2559 = vpop.xlane.xlu0 %2558
        %v2560 = vsel %vm1644, %v2485, -inf
        %2561 = vmax.xlane.f32.xlu0 %v2560
        %v2562 = vpop.xlane.xlu0 %2561
        %v2563 = vsel %vm1644, %v2537, -inf
        %2564 = vmax.xlane.f32.xlu0 %v2563
        %v2565 = vpop.xlane.xlu0 %2564
        %v2566 = vsub.f32 %v2173, %v2544
        %v2567 = vsub.f32 %v2225, %v2547
        %v2568 = vsub.f32 %v2277, %v2550
        %v2569 = vsub.f32 %v2329, %v2553
        %v2570 = vsub.f32 %v2381, %v2556
        %v2571 = vsub.f32 %v2433, %v2559
        %v2572 = vsub.f32 %v2485, %v2562
        %v2573 = vsub.f32 %v2537, %v2565
        %v2574 = vmul.f32 %v2566, 1.442695
        %v2575 = vpow.pop %v2574
        %v2576 = vmul.f32 %v2567, 1.442695
        %v2577 = vpow.pop %v2576
        %v2578 = vmul.f32 %v2568, 1.442695
        %v2579 = vpow.pop %v2578
        %v2580 = vmul.f32 %v2569, 1.442695
        %v2581 = vpow.pop %v2580
        %v2582 = vmul.f32 %v2570, 1.442695
        %v2583 = vpow.pop %v2582
        %v2584 = vmul.f32 %v2571, 1.442695
        %v2585 = vpow.pop %v2584
        %v2586 = vmul.f32 %v2572, 1.442695
        %v2587 = vpow.pop %v2586
        %v2588 = vmul.f32 %v2573, 1.442695
        %v2589 = vpow.pop %v2588
        %v2590 = vsel %vm1644, %v2575, 0.0
        %2591 = vadd.xlane.f32.xlu0 %v2590
        %v2592 = vpop.xlane.xlu0 %2591
        %v2593 = vsel %vm1644, %v2577, 0.0
        %2594 = vadd.xlane.f32.xlu0 %v2593
        %v2595 = vpop.xlane.xlu0 %2594
        %v2596 = vsel %vm1644, %v2579, 0.0
        %2597 = vadd.xlane.f32.xlu0 %v2596
        %v2598 = vpop.xlane.xlu0 %2597
        %v2599 = vsel %vm1644, %v2581, 0.0
        %2600 = vadd.xlane.f32.xlu0 %v2599
        %v2601 = vpop.xlane.xlu0 %2600
        %v2602 = vsel %vm1644, %v2583, 0.0
        %2603 = vadd.xlane.f32.xlu0 %v2602
        %v2604 = vpop.xlane.xlu0 %2603
        %v2605 = vsel %vm1644, %v2585, 0.0
        %2606 = vadd.xlane.f32.xlu0 %v2605
        %v2607 = vpop.xlane.xlu0 %2606
        %v2608 = vsel %vm1644, %v2587, 0.0
        %2609 = vadd.xlane.f32.xlu0 %v2608
        %v2610 = vpop.xlane.xlu0 %2609
        %v2611 = vsel %vm1644, %v2589, 0.0
        %2612 = vadd.xlane.f32.xlu0 %v2611
        %v2613 = vpop.xlane.xlu0 %2612
        %v2614 = vrcp.pop %v2592
        %v2615 = vrcp.pop %v2595
        %v2616 = vrcp.pop %v2598
        %v2617 = vrcp.pop %v2601
        %v2618 = vrcp.pop %v2604
        %v2619 = vrcp.pop %v2607
        %v2620 = vrcp.pop %v2610
        %v2621 = vrcp.pop %v2613
        %v2622 = vmul.f32 %v2575, %v2614
        %v2623 = vmul.f32 %v2577, %v2615
        %v2624 = vmul.f32 %v2579, %v2616
        %v2625 = vmul.f32 %v2581, %v2617
        %v2626 = vmul.f32 %v2583, %v2618
        %v2627 = vmul.f32 %v2585, %v2619
        %v2628 = vmul.f32 %v2587, %v2620
        %v2629 = vmul.f32 %v2589, %v2621
        %v2630 = vpack.c.bf16 %v2622, %v2622
        %v2631 = vpack.c.bf16 %v2623, %v2623
        %v2632 = vpack.c.bf16 %v2624, %v2624
        %v2633 = vpack.c.bf16 %v2625, %v2625
        %v2634 = vpack.c.bf16 %v2626, %v2626
        %v2635 = vpack.c.bf16 %v2627, %v2627
        %v2636 = vpack.c.bf16 %v2628, %v2628
        %v2637 = vpack.c.bf16 %v2629, %v2629
        %2639 = vrot.lane.b32.xlu0 %v1741, 96
        %v2640 = vpop.permute.xlu0 %2639
        %v2642 = vsel %vm1644, %v2630, 0
        %v2645 = vsel %vm1752, %v2640, 0
        %2647 = vmatprep.subr.bf16.mxu0 0
        %2648 = vmatpush1.bf16.msra.mxu0 %v2645
        %2649 = vmatprep.subr.bf16.mxu0 0
        %2650 = vmatpush1.bf16.msra.mxu0 0
        %2651 = vmatprep.subr.bf16.mxu0 0
        %2652 = vmatpush1.bf16.msra.mxu0 0
        %2653 = vmatprep.subr.bf16.mxu0 0
        %2654 = vmatpush1.bf16.msra.mxu0 0
        %2655 = vmatprep.subr.bf16.mxu0 0
        %2656 = vmatpush1.bf16.msra.mxu0 0
        %2657 = vmatprep.subr.bf16.mxu0 0
        %2658 = vmatpush1.bf16.msra.mxu0 0
        %2659 = vmatprep.subr.bf16.mxu0 0
        %2660 = vmatpush1.bf16.msra.mxu0 0
        %2661 = vmatprep.subr.bf16.mxu0 0
        %2662 = vmatpush1.bf16.msra.mxu0 0
        %2663 = vmatprep.subr.bf16.mxu0 0
        %2664 = vmatpush1.bf16.msra.mxu0 0
        %2665 = vmatprep.subr.bf16.mxu0 0
        %2666 = vmatpush1.bf16.msra.mxu0 0
        %2667 = vmatprep.subr.bf16.mxu0 0
        %2668 = vmatpush1.bf16.msra.mxu0 0
        %2669 = vmatprep.subr.bf16.mxu0 0
        %2670 = vmatpush1.bf16.msra.mxu0 0
        %2671 = vmatprep.subr.bf16.mxu0 0
        %2672 = vmatpush1.bf16.msra.mxu0 0
        %2673 = vmatprep.subr.bf16.mxu0 0
        %2674 = vmatpush1.bf16.msra.mxu0 0
        %2675 = vmatprep.subr.bf16.mxu0 0
        %2676 = vmatpush1.bf16.msra.mxu0 0
        %2677 = vmatprep.subr.bf16.mxu0 0
        %2678 = vmatpush1.bf16.msra.mxu0 0
        %2679 = vmatprep.mubr.bf16.mxu0 0
        %2680 = vmatmul.mubr.bf16.gmra.mrb[0].mxu0 %v2642
        %v2681 = vpop.f32.mrb[0].mxu0
        %v2682 = vadd.f32 0.0, %v2681
        %v2683 = vpop.f32.mrb[0].mxu0
        %v2684 = vpop.f32.mrb[0].mxu0
        %v2685 = vpop.f32.mrb[0].mxu0
        %2686 = vdwg.mxu0
        %2688 = vrot.lane.b32.xlu0 %v1742, 96
        %v2689 = vpop.permute.xlu0 %2688
        %v2691 = vsel %vm1644, %v2631, 0
        %v2694 = vsel %vm1752, %v2689, 0
        %2696 = vmatprep.subr.bf16.mxu0 0
        %2697 = vmatpush1.bf16.msra.mxu0 %v2694
        %2698 = vmatprep.subr.bf16.mxu0 0
        %2699 = vmatpush1.bf16.msra.mxu0 0
        %2700 = vmatprep.subr.bf16.mxu0 0
        %2701 = vmatpush1.bf16.msra.mxu0 0
        %2702 = vmatprep.subr.bf16.mxu0 0
        %2703 = vmatpush1.bf16.msra.mxu0 0
        %2704 = vmatprep.subr.bf16.mxu0 0
        %2705 = vmatpush1.bf16.msra.mxu0 0
        %2706 = vmatprep.subr.bf16.mxu0 0
        %2707 = vmatpush1.bf16.msra.mxu0 0
        %2708 = vmatprep.subr.bf16.mxu0 0
        %2709 = vmatpush1.bf16.msra.mxu0 0
        %2710 = vmatprep.subr.bf16.mxu0 0
        %2711 = vmatpush1.bf16.msra.mxu0 0
        %2712 = vmatprep.subr.bf16.mxu0 0
        %2713 = vmatpush1.bf16.msra.mxu0 0
        %2714 = vmatprep.subr.bf16.mxu0 0
        %2715 = vmatpush1.bf16.msra.mxu0 0
        %2716 = vmatprep.subr.bf16.mxu0 0
        %2717 = vmatpush1.bf16.msra.mxu0 0
        %2718 = vmatprep.subr.bf16.mxu0 0
        %2719 = vmatpush1.bf16.msra.mxu0 0
        %2720 = vmatprep.subr.bf16.mxu0 0
        %2721 = vmatpush1.bf16.msra.mxu0 0
        %2722 = vmatprep.subr.bf16.mxu0 0
        %2723 = vmatpush1.bf16.msra.mxu0 0
        %2724 = vmatprep.subr.bf16.mxu0 0
        %2725 = vmatpush1.bf16.msra.mxu0 0
        %2726 = vmatprep.subr.bf16.mxu0 0
        %2727 = vmatpush1.bf16.msra.mxu0 0
        %2728 = vmatprep.mubr.bf16.mxu0 0
        %2729 = vmatmul.mubr.bf16.gmra.mrb[0].mxu0 %v2691
        %v2730 = vpop.f32.mrb[0].mxu0
        %v2731 = vadd.f32 0.0, %v2730
        %v2732 = vpop.f32.mrb[0].mxu0
        %v2733 = vpop.f32.mrb[0].mxu0
        %v2734 = vpop.f32.mrb[0].mxu0
        %2735 = vdwg.mxu0
        %2737 = vrot.lane.b32.xlu0 %v1743, 96
        %v2738 = vpop.permute.xlu0 %2737
        %v2740 = vsel %vm1644, %v2632, 0
        %v2743 = vsel %vm1752, %v2738, 0
        %2745 = vmatprep.subr.bf16.mxu0 0
        %2746 = vmatpush1.bf16.msra.mxu0 %v2743
        %2747 = vmatprep.subr.bf16.mxu0 0
        %2748 = vmatpush1.bf16.msra.mxu0 0
        %2749 = vmatprep.subr.bf16.mxu0 0
        %2750 = vmatpush1.bf16.msra.mxu0 0
        %2751 = vmatprep.subr.bf16.mxu0 0
        %2752 = vmatpush1.bf16.msra.mxu0 0
        %2753 = vmatprep.subr.bf16.mxu0 0
        %2754 = vmatpush1.bf16.msra.mxu0 0
        %2755 = vmatprep.subr.bf16.mxu0 0
        %2756 = vmatpush1.bf16.msra.mxu0 0
        %2757 = vmatprep.subr.bf16.mxu0 0
        %2758 = vmatpush1.bf16.msra.mxu0 0
        %2759 = vmatprep.subr.bf16.mxu0 0
        %2760 = vmatpush1.bf16.msra.mxu0 0
        %2761 = vmatprep.subr.bf16.mxu0 0
        %2762 = vmatpush1.bf16.msra.mxu0 0
        %2763 = vmatprep.subr.bf16.mxu0 0
        %2764 = vmatpush1.bf16.msra.mxu0 0
        %2765 = vmatprep.subr.bf16.mxu0 0
        %2766 = vmatpush1.bf16.msra.mxu0 0
        %2767 = vmatprep.subr.bf16.mxu0 0
        %2768 = vmatpush1.bf16.msra.mxu0 0
        %2769 = vmatprep.subr.bf16.mxu0 0
        %2770 = vmatpush1.bf16.msra.mxu0 0
        %2771 = vmatprep.subr.bf16.mxu0 0
        %2772 = vmatpush1.bf16.msra.mxu0 0
        %2773 = vmatprep.subr.bf16.mxu0 0
        %2774 = vmatpush1.bf16.msra.mxu0 0
        %2775 = vmatprep.subr.bf16.mxu0 0
        %2776 = vmatpush1.bf16.msra.mxu0 0
        %2777 = vmatprep.mubr.bf16.mxu0 0
        %2778 = vmatmul.mubr.bf16.gmra.mrb[0].mxu0 %v2740
        %v2779 = vpop.f32.mrb[0].mxu0
        %v2780 = vadd.f32 0.0, %v2779
        %v2781 = vpop.f32.mrb[0].mxu0
        %v2782 = vpop.f32.mrb[0].mxu0
        %v2783 = vpop.f32.mrb[0].mxu0
        %2784 = vdwg.mxu0
        %2786 = vrot.lane.b32.xlu0 %v1744, 96
        %v2787 = vpop.permute.xlu0 %2786
        %v2789 = vsel %vm1644, %v2633, 0
        %v2792 = vsel %vm1752, %v2787, 0
        %2794 = vmatprep.subr.bf16.mxu0 0
        %2795 = vmatpush1.bf16.msra.mxu0 %v2792
        %2796 = vmatprep.subr.bf16.mxu0 0
        %2797 = vmatpush1.bf16.msra.mxu0 0
        %2798 = vmatprep.subr.bf16.mxu0 0
        %2799 = vmatpush1.bf16.msra.mxu0 0
        %2800 = vmatprep.subr.bf16.mxu0 0
        %2801 = vmatpush1.bf16.msra.mxu0 0
        %2802 = vmatprep.subr.bf16.mxu0 0
        %2803 = vmatpush1.bf16.msra.mxu0 0
        %2804 = vmatprep.subr.bf16.mxu0 0
        %2805 = vmatpush1.bf16.msra.mxu0 0
        %2806 = vmatprep.subr.bf16.mxu0 0
        %2807 = vmatpush1.bf16.msra.mxu0 0
        %2808 = vmatprep.subr.bf16.mxu0 0
        %2809 = vmatpush1.bf16.msra.mxu0 0
        %2810 = vmatprep.subr.bf16.mxu0 0
        %2811 = vmatpush1.bf16.msra.mxu0 0
        %2812 = vmatprep.subr.bf16.mxu0 0
        %2813 = vmatpush1.bf16.msra.mxu0 0
        %2814 = vmatprep.subr.bf16.mxu0 0
        %2815 = vmatpush1.bf16.msra.mxu0 0
        %2816 = vmatprep.subr.bf16.mxu0 0
        %2817 = vmatpush1.bf16.msra.mxu0 0
        %2818 = vmatprep.subr.bf16.mxu0 0
        %2819 = vmatpush1.bf16.msra.mxu0 0
        %2820 = vmatprep.subr.bf16.mxu0 0
        %2821 = vmatpush1.bf16.msra.mxu0 0
        %2822 = vmatprep.subr.bf16.mxu0 0
        %2823 = vmatpush1.bf16.msra.mxu0 0
        %2824 = vmatprep.subr.bf16.mxu0 0
        %2825 = vmatpush1.bf16.msra.mxu0 0
        %2826 = vmatprep.mubr.bf16.mxu0 0
        %2827 = vmatmul.mubr.bf16.gmra.mrb[0].mxu0 %v2789
        %v2828 = vpop.f32.mrb[0].mxu0
        %v2829 = vadd.f32 0.0, %v2828
        %v2830 = vpop.f32.mrb[0].mxu0
        %v2831 = vpop.f32.mrb[0].mxu0
        %v2832 = vpop.f32.mrb[0].mxu0
        %2833 = vdwg.mxu0
        %2835 = vrot.lane.b32.xlu0 %v1745, 96
        %v2836 = vpop.permute.xlu0 %2835
        %v2838 = vsel %vm1644, %v2634, 0
        %v2841 = vsel %vm1752, %v2836, 0
        %2843 = vmatprep.subr.bf16.mxu0 0
        %2844 = vmatpush1.bf16.msra.mxu0 %v2841
        %2845 = vmatprep.subr.bf16.mxu0 0
        %2846 = vmatpush1.bf16.msra.mxu0 0
        %2847 = vmatprep.subr.bf16.mxu0 0
        %2848 = vmatpush1.bf16.msra.mxu0 0
        %2849 = vmatprep.subr.bf16.mxu0 0
        %2850 = vmatpush1.bf16.msra.mxu0 0
        %2851 = vmatprep.subr.bf16.mxu0 0
        %2852 = vmatpush1.bf16.msra.mxu0 0
        %2853 = vmatprep.subr.bf16.mxu0 0
        %2854 = vmatpush1.bf16.msra.mxu0 0
        %2855 = vmatprep.subr.bf16.mxu0 0
        %2856 = vmatpush1.bf16.msra.mxu0 0
        %2857 = vmatprep.subr.bf16.mxu0 0
        %2858 = vmatpush1.bf16.msra.mxu0 0
        %2859 = vmatprep.subr.bf16.mxu0 0
        %2860 = vmatpush1.bf16.msra.mxu0 0
        %2861 = vmatprep.subr.bf16.mxu0 0
        %2862 = vmatpush1.bf16.msra.mxu0 0
        %2863 = vmatprep.subr.bf16.mxu0 0
        %2864 = vmatpush1.bf16.msra.mxu0 0
        %2865 = vmatprep.subr.bf16.mxu0 0
        %2866 = vmatpush1.bf16.msra.mxu0 0
        %2867 = vmatprep.subr.bf16.mxu0 0
        %2868 = vmatpush1.bf16.msra.mxu0 0
        %2869 = vmatprep.subr.bf16.mxu0 0
        %2870 = vmatpush1.bf16.msra.mxu0 0
        %2871 = vmatprep.subr.bf16.mxu0 0
        %2872 = vmatpush1.bf16.msra.mxu0 0
        %2873 = vmatprep.subr.bf16.mxu0 0
        %2874 = vmatpush1.bf16.msra.mxu0 0
        %2875 = vmatprep.mubr.bf16.mxu0 0
        %2876 = vmatmul.mubr.bf16.gmra.mrb[0].mxu0 %v2838
        %v2877 = vpop.f32.mrb[0].mxu0
        %v2878 = vadd.f32 0.0, %v2877
        %v2879 = vpop.f32.mrb[0].mxu0
        %v2880 = vpop.f32.mrb[0].mxu0
        %v2881 = vpop.f32.mrb[0].mxu0
        %2882 = vdwg.mxu0
        %2884 = vrot.lane.b32.xlu0 %v1746, 96
        %v2885 = vpop.permute.xlu0 %2884
        %v2887 = vsel %vm1644, %v2635, 0
        %v2890 = vsel %vm1752, %v2885, 0
        %2892 = vmatprep.subr.bf16.mxu0 0
        %2893 = vmatpush1.bf16.msra.mxu0 %v2890
        %2894 = vmatprep.subr.bf16.mxu0 0
        %2895 = vmatpush1.bf16.msra.mxu0 0
        %2896 = vmatprep.subr.bf16.mxu0 0
        %2897 = vmatpush1.bf16.msra.mxu0 0
        %2898 = vmatprep.subr.bf16.mxu0 0
        %2899 = vmatpush1.bf16.msra.mxu0 0
        %2900 = vmatprep.subr.bf16.mxu0 0
        %2901 = vmatpush1.bf16.msra.mxu0 0
        %2902 = vmatprep.subr.bf16.mxu0 0
        %2903 = vmatpush1.bf16.msra.mxu0 0
        %2904 = vmatprep.subr.bf16.mxu0 0
        %2905 = vmatpush1.bf16.msra.mxu0 0
        %2906 = vmatprep.subr.bf16.mxu0 0
        %2907 = vmatpush1.bf16.msra.mxu0 0
        %2908 = vmatprep.subr.bf16.mxu0 0
        %2909 = vmatpush1.bf16.msra.mxu0 0
        %2910 = vmatprep.subr.bf16.mxu0 0
        %2911 = vmatpush1.bf16.msra.mxu0 0
        %2912 = vmatprep.subr.bf16.mxu0 0
        %2913 = vmatpush1.bf16.msra.mxu0 0
        %2914 = vmatprep.subr.bf16.mxu0 0
        %2915 = vmatpush1.bf16.msra.mxu0 0
        %2916 = vmatprep.subr.bf16.mxu0 0
        %2917 = vmatpush1.bf16.msra.mxu0 0
        %2918 = vmatprep.subr.bf16.mxu0 0
        %2919 = vmatpush1.bf16.msra.mxu0 0
        %2920 = vmatprep.subr.bf16.mxu0 0
        %2921 = vmatpush1.bf16.msra.mxu0 0
        %2922 = vmatprep.subr.bf16.mxu0 0
        %2923 = vmatpush1.bf16.msra.mxu0 0
        %2924 = vmatprep.mubr.bf16.mxu0 0
        %2925 = vmatmul.mubr.bf16.gmra.mrb[0].mxu0 %v2887
        %v2926 = vpop.f32.mrb[0].mxu0
        %v2927 = vadd.f32 0.0, %v2926
        %v2928 = vpop.f32.mrb[0].mxu0
        %v2929 = vpop.f32.mrb[0].mxu0
        %v2930 = vpop.f32.mrb[0].mxu0
        %2931 = vdwg.mxu0
        %2933 = vrot.lane.b32.xlu0 %v1747, 96
        %v2934 = vpop.permute.xlu0 %2933
        %v2936 = vsel %vm1644, %v2636, 0
        %v2939 = vsel %vm1752, %v2934, 0
        %2941 = vmatprep.subr.bf16.mxu0 0
        %2942 = vmatpush1.bf16.msra.mxu0 %v2939
        %2943 = vmatprep.subr.bf16.mxu0 0
        %2944 = vmatpush1.bf16.msra.mxu0 0
        %2945 = vmatprep.subr.bf16.mxu0 0
        %2946 = vmatpush1.bf16.msra.mxu0 0
        %2947 = vmatprep.subr.bf16.mxu0 0
        %2948 = vmatpush1.bf16.msra.mxu0 0
        %2949 = vmatprep.subr.bf16.mxu0 0
        %2950 = vmatpush1.bf16.msra.mxu0 0
        %2951 = vmatprep.subr.bf16.mxu0 0
        %2952 = vmatpush1.bf16.msra.mxu0 0
        %2953 = vmatprep.subr.bf16.mxu0 0
        %2954 = vmatpush1.bf16.msra.mxu0 0
        %2955 = vmatprep.subr.bf16.mxu0 0
        %2956 = vmatpush1.bf16.msra.mxu0 0
        %2957 = vmatprep.subr.bf16.mxu0 0
        %2958 = vmatpush1.bf16.msra.mxu0 0
        %2959 = vmatprep.subr.bf16.mxu0 0
        %2960 = vmatpush1.bf16.msra.mxu0 0
        %2961 = vmatprep.subr.bf16.mxu0 0
        %2962 = vmatpush1.bf16.msra.mxu0 0
        %2963 = vmatprep.subr.bf16.mxu0 0
        %2964 = vmatpush1.bf16.msra.mxu0 0
        %2965 = vmatprep.subr.bf16.mxu0 0
        %2966 = vmatpush1.bf16.msra.mxu0 0
        %2967 = vmatprep.subr.bf16.mxu0 0
        %2968 = vmatpush1.bf16.msra.mxu0 0
        %2969 = vmatprep.subr.bf16.mxu0 0
        %2970 = vmatpush1.bf16.msra.mxu0 0
        %2971 = vmatprep.subr.bf16.mxu0 0
        %2972 = vmatpush1.bf16.msra.mxu0 0
        %2973 = vmatprep.mubr.bf16.mxu0 0
        %2974 = vmatmul.mubr.bf16.gmra.mrb[0].mxu0 %v2936
        %v2975 = vpop.f32.mrb[0].mxu0
        %v2976 = vadd.f32 0.0, %v2975
        %v2977 = vpop.f32.mrb[0].mxu0
        %v2978 = vpop.f32.mrb[0].mxu0
        %v2979 = vpop.f32.mrb[0].mxu0
        %2980 = vdwg.mxu0
        %2982 = vrot.lane.b32.xlu0 %v1748, 96
        %v2983 = vpop.permute.xlu0 %2982
        %v2985 = vsel %vm1644, %v2637, 0
        %v2988 = vsel %vm1752, %v2983, 0
        %2990 = vmatprep.subr.bf16.mxu0 0
        %2991 = vmatpush1.bf16.msra.mxu0 %v2988
        %2992 = vmatprep.subr.bf16.mxu0 0
        %2993 = vmatpush1.bf16.msra.mxu0 0
        %2994 = vmatprep.subr.bf16.mxu0 0
        %2995 = vmatpush1.bf16.msra.mxu0 0
        %2996 = vmatprep.subr.bf16.mxu0 0
        %2997 = vmatpush1.bf16.msra.mxu0 0
        %2998 = vmatprep.subr.bf16.mxu0 0
        %2999 = vmatpush1.bf16.msra.mxu0 0
        %3000 = vmatprep.subr.bf16.mxu0 0
        %3001 = vmatpush1.bf16.msra.mxu0 0
        %3002 = vmatprep.subr.bf16.mxu0 0
        %3003 = vmatpush1.bf16.msra.mxu0 0
        %3004 = vmatprep.subr.bf16.mxu0 0
        %3005 = vmatpush1.bf16.msra.mxu0 0
        %3006 = vmatprep.subr.bf16.mxu0 0
        %3007 = vmatpush1.bf16.msra.mxu0 0
        %3008 = vmatprep.subr.bf16.mxu0 0
        %3009 = vmatpush1.bf16.msra.mxu0 0
        %3010 = vmatprep.subr.bf16.mxu0 0
        %3011 = vmatpush1.bf16.msra.mxu0 0
        %3012 = vmatprep.subr.bf16.mxu0 0
        %3013 = vmatpush1.bf16.msra.mxu0 0
        %3014 = vmatprep.subr.bf16.mxu0 0
        %3015 = vmatpush1.bf16.msra.mxu0 0
        %3016 = vmatprep.subr.bf16.mxu0 0
        %3017 = vmatpush1.bf16.msra.mxu0 0
        %3018 = vmatprep.subr.bf16.mxu0 0
        %3019 = vmatpush1.bf16.msra.mxu0 0
        %3020 = vmatprep.subr.bf16.mxu0 0
        %3021 = vmatpush1.bf16.msra.mxu0 0
        %3022 = vmatprep.mubr.bf16.mxu0 0
        %3023 = vmatmul.mubr.bf16.gmra.mrb[0].mxu0 %v2985
        %v3024 = vpop.f32.mrb[0].mxu0
        %v3025 = vadd.f32 0.0, %v3024
        %v3026 = vpop.f32.mrb[0].mxu0
        %v3027 = vpop.f32.mrb[0].mxu0
        %v3028 = vpop.f32.mrb[0].mxu0
        %3029 = vdwg.mxu0
        %v3030 = vpack.c.bf16 %v2731, %v2682
        %v3031 = vpack.c.bf16 %v2829, %v2780
        %v3032 = vpack.c.bf16 %v2927, %v2878
        %v3033 = vpack.c.bf16 %v3025, %v2976
        %3038 = vrot.lane.b32.xlu0 %v3030, 32
        %v3039 = vpop.permute.xlu0 %3038
        %3040 = vrot.lane.b32.xlu0 %v3031, 32
        %v3041 = vpop.permute.xlu0 %3040
        %3042 = vrot.lane.b32.xlu0 %v3032, 32
        %v3043 = vpop.permute.xlu0 %3042
        %3044 = vrot.lane.b32.xlu0 %v3033, 32
        %v3045 = vpop.permute.xlu0 %3044
        %vm3050 = vcmask 523520
        %3051 = vst.msk [vmem:[#allocation2] sm:$0xff] %vm3050, %v3039
        %3052 = vst.msk [vmem:[#allocation2 + $0x8] sm:$0xff] %vm3050, %v3041
        %3053 = vst.msk [vmem:[#allocation2 + $0x10] sm:$0xff] %vm3050, %v3043
        %3054 = vst.msk [vmem:[#allocation2 + $0x18] sm:$0xff] %vm3050, %v3045
        %3055 = vrot.lane.b32.xlu0 %v1259, 64
        %v3056 = vpop.permute.xlu0 %3055
        %3057 = vrot.lane.b32.xlu0 %v1267, 64
        %v3058 = vpop.permute.xlu0 %3057
        %v3060 = vsel %vm1275, %v3056, 0
        %v3063 = vsel %vm1275, %v3058, 0
        %3065 = vmatprep.subr.bf16.mxu0 0
        %3066 = vmatpush1.bf16.xpose.msra.mxu0 %v3063
        %3067 = vmatprep.subr.bf16.mxu0 0
        %3068 = vmatpush1.bf16.xpose.msra.mxu0 0
        %3069 = vmatprep.subr.bf16.mxu0 0
        %3070 = vmatpush1.bf16.xpose.msra.mxu0 0
        %3071 = vmatprep.subr.bf16.mxu0 0
        %3072 = vmatpush1.bf16.xpose.msra.mxu0 0
        %3073 = vmatprep.subr.bf16.mxu0 0
        %3074 = vmatpush1.bf16.xpose.msra.mxu0 0
        %3075 = vmatprep.subr.bf16.mxu0 0
        %3076 = vmatpush1.bf16.xpose.msra.mxu0 0
        %3077 = vmatprep.subr.bf16.mxu0 0
        %3078 = vmatpush1.bf16.xpose.msra.mxu0 0
        %3079 = vmatprep.subr.bf16.mxu0 0
        %3080 = vmatpush1.bf16.xpose.msra.mxu0 0
        %3081 = vmatprep.subr.bf16.mxu0 0
        %3082 = vmatpush1.bf16.xpose.msra.mxu0 0
        %3083 = vmatprep.subr.bf16.mxu0 0
        %3084 = vmatpush1.bf16.xpose.msra.mxu0 0
        %3085 = vmatprep.subr.bf16.mxu0 0
        %3086 = vmatpush1.bf16.xpose.msra.mxu0 0
        %3087 = vmatprep.subr.bf16.mxu0 0
        %3088 = vmatpush1.bf16.xpose.msra.mxu0 0
        %3089 = vmatprep.subr.bf16.mxu0 0
        %3090 = vmatpush1.bf16.xpose.msra.mxu0 0
        %3091 = vmatprep.subr.bf16.mxu0 0
        %3092 = vmatpush1.bf16.xpose.msra.mxu0 0
        %3093 = vmatprep.subr.bf16.mxu0 0
        %3094 = vmatpush1.bf16.xpose.msra.mxu0 0
        %3095 = vmatprep.subr.bf16.mxu0 0
        %3096 = vmatpush1.bf16.xpose.msra.mxu0 0
        %3097 = vmatprep.mubr.bf16.mxu0 0
        %3098 = vmatmul.mubr.bf16.gmra.mrb[0].mxu0 %v3060
        %v3099 = vpop.f32.mrb[0].mxu0
        %v3100 = vadd.f32 0.0, %v3099
        %v3101 = vpop.f32.mrb[0].mxu0
        %v3102 = vpop.f32.mrb[0].mxu0
        %v3103 = vpop.f32.mrb[0].mxu0
        %3104 = vdwg.mxu0
        %3105 = vrot.lane.b32.xlu0 %v1260, 64
        %v3106 = vpop.permute.xlu0 %3105
        %3107 = vrot.lane.b32.xlu0 %v1268, 64
        %v3108 = vpop.permute.xlu0 %3107
        %v3110 = vsel %vm1275, %v3106, 0
        %v3113 = vsel %vm1275, %v3108, 0
        %3115 = vmatprep.subr.bf16.mxu0 0
        %3116 = vmatpush1.bf16.xpose.msra.mxu0 %v3113
        %3117 = vmatprep.subr.bf16.mxu0 0
        %3118 = vmatpush1.bf16.xpose.msra.mxu0 0
        %3119 = vmatprep.subr.bf16.mxu0 0
        %3120 = vmatpush1.bf16.xpose.msra.mxu0 0
        %3121 = vmatprep.subr.bf16.mxu0 0
        %3122 = vmatpush1.bf16.xpose.msra.mxu0 0
        %3123 = vmatprep.subr.bf16.mxu0 0
        %3124 = vmatpush1.bf16.xpose.msra.mxu0 0
        %3125 = vmatprep.subr.bf16.mxu0 0
        %3126 = vmatpush1.bf16.xpose.msra.mxu0 0
        %3127 = vmatprep.subr.bf16.mxu0 0
        %3128 = vmatpush1.bf16.xpose.msra.mxu0 0
        %3129 = vmatprep.subr.bf16.mxu0 0
        %3130 = vmatpush1.bf16.xpose.msra.mxu0 0
        %3131 = vmatprep.subr.bf16.mxu0 0
        %3132 = vmatpush1.bf16.xpose.msra.mxu0 0
        %3133 = vmatprep.subr.bf16.mxu0 0
        %3134 = vmatpush1.bf16.xpose.msra.mxu0 0
        %3135 = vmatprep.subr.bf16.mxu0 0
        %3136 = vmatpush1.bf16.xpose.msra.mxu0 0
        %3137 = vmatprep.subr.bf16.mxu0 0
        %3138 = vmatpush1.bf16.xpose.msra.mxu0 0
        %3139 = vmatprep.subr.bf16.mxu0 0
        %3140 = vmatpush1.bf16.xpose.msra.mxu0 0
        %3141 = vmatprep.subr.bf16.mxu0 0
        %3142 = vmatpush1.bf16.xpose.msra.mxu0 0
        %3143 = vmatprep.subr.bf16.mxu0 0
        %3144 = vmatpush1.bf16.xpose.msra.mxu0 0
        %3145 = vmatprep.subr.bf16.mxu0 0
        %3146 = vmatpush1.bf16.xpose.msra.mxu0 0
        %3147 = vmatprep.mubr.bf16.mxu0 0
        %3148 = vmatmul.mubr.bf16.gmra.mrb[0].mxu0 %v3110
        %v3149 = vpop.f32.mrb[0].mxu0
        %v3150 = vadd.f32 0.0, %v3149
        %v3151 = vpop.f32.mrb[0].mxu0
        %v3152 = vpop.f32.mrb[0].mxu0
        %v3153 = vpop.f32.mrb[0].mxu0
        %3154 = vdwg.mxu0
        %3155 = vrot.lane.b32.xlu0 %v1261, 64
        %v3156 = vpop.permute.xlu0 %3155
        %3157 = vrot.lane.b32.xlu0 %v1269, 64
        %v3158 = vpop.permute.xlu0 %3157
        %v3160 = vsel %vm1275, %v3156, 0
        %v3163 = vsel %vm1275, %v3158, 0
        %3165 = vmatprep.subr.bf16.mxu0 0
        %3166 = vmatpush1.bf16.xpose.msra.mxu0 %v3163
        %3167 = vmatprep.subr.bf16.mxu0 0
        %3168 = vmatpush1.bf16.xpose.msra.mxu0 0
        %3169 = vmatprep.subr.bf16.mxu0 0
        %3170 = vmatpush1.bf16.xpose.msra.mxu0 0
        %3171 = vmatprep.subr.bf16.mxu0 0
        %3172 = vmatpush1.bf16.xpose.msra.mxu0 0
        %3173 = vmatprep.subr.bf16.mxu0 0
        %3174 = vmatpush1.bf16.xpose.msra.mxu0 0
        %3175 = vmatprep.subr.bf16.mxu0 0
        %3176 = vmatpush1.bf16.xpose.msra.mxu0 0
        %3177 = vmatprep.subr.bf16.mxu0 0
        %3178 = vmatpush1.bf16.xpose.msra.mxu0 0
        %3179 = vmatprep.subr.bf16.mxu0 0
        %3180 = vmatpush1.bf16.xpose.msra.mxu0 0
        %3181 = vmatprep.subr.bf16.mxu0 0
        %3182 = vmatpush1.bf16.xpose.msra.mxu0 0
        %3183 = vmatprep.subr.bf16.mxu0 0
        %3184 = vmatpush1.bf16.xpose.msra.mxu0 0
        %3185 = vmatprep.subr.bf16.mxu0 0
        %3186 = vmatpush1.bf16.xpose.msra.mxu0 0
        %3187 = vmatprep.subr.bf16.mxu0 0
        %3188 = vmatpush1.bf16.xpose.msra.mxu0 0
        %3189 = vmatprep.subr.bf16.mxu0 0
        %3190 = vmatpush1.bf16.xpose.msra.mxu0 0
        %3191 = vmatprep.subr.bf16.mxu0 0
        %3192 = vmatpush1.bf16.xpose.msra.mxu0 0
        %3193 = vmatprep.subr.bf16.mxu0 0
        %3194 = vmatpush1.bf16.xpose.msra.mxu0 0
        %3195 = vmatprep.subr.bf16.mxu0 0
        %3196 = vmatpush1.bf16.xpose.msra.mxu0 0
        %3197 = vmatprep.mubr.bf16.mxu0 0
        %3198 = vmatmul.mubr.bf16.gmra.mrb[0].mxu0 %v3160
        %v3199 = vpop.f32.mrb[0].mxu0
        %v3200 = vadd.f32 0.0, %v3199
        %v3201 = vpop.f32.mrb[0].mxu0
        %v3202 = vpop.f32.mrb[0].mxu0
        %v3203 = vpop.f32.mrb[0].mxu0
        %3204 = vdwg.mxu0
        %3205 = vrot.lane.b32.xlu0 %v1262, 64
        %v3206 = vpop.permute.xlu0 %3205
        %3207 = vrot.lane.b32.xlu0 %v1270, 64
        %v3208 = vpop.permute.xlu0 %3207
        %v3210 = vsel %vm1275, %v3206, 0
        %v3213 = vsel %vm1275, %v3208, 0
        %3215 = vmatprep.subr.bf16.mxu0 0
        %3216 = vmatpush1.bf16.xpose.msra.mxu0 %v3213
        %3217 = vmatprep.subr.bf16.mxu0 0
        %3218 = vmatpush1.bf16.xpose.msra.mxu0 0
        %3219 = vmatprep.subr.bf16.mxu0 0
        %3220 = vmatpush1.bf16.xpose.msra.mxu0 0
        %3221 = vmatprep.subr.bf16.mxu0 0
        %3222 = vmatpush1.bf16.xpose.msra.mxu0 0
        %3223 = vmatprep.subr.bf16.mxu0 0
        %3224 = vmatpush1.bf16.xpose.msra.mxu0 0
        %3225 = vmatprep.subr.bf16.mxu0 0
        %3226 = vmatpush1.bf16.xpose.msra.mxu0 0
        %3227 = vmatprep.subr.bf16.mxu0 0
        %3228 = vmatpush1.bf16.xpose.msra.mxu0 0
        %3229 = vmatprep.subr.bf16.mxu0 0
        %3230 = vmatpush1.bf16.xpose.msra.mxu0 0
        %3231 = vmatprep.subr.bf16.mxu0 0
        %3232 = vmatpush1.bf16.xpose.msra.mxu0 0
        %3233 = vmatprep.subr.bf16.mxu0 0
        %3234 = vmatpush1.bf16.xpose.msra.mxu0 0
        %3235 = vmatprep.subr.bf16.mxu0 0
        %3236 = vmatpush1.bf16.xpose.msra.mxu0 0
        %3237 = vmatprep.subr.bf16.mxu0 0
        %3238 = vmatpush1.bf16.xpose.msra.mxu0 0
        %3239 = vmatprep.subr.bf16.mxu0 0
        %3240 = vmatpush1.bf16.xpose.msra.mxu0 0
        %3241 = vmatprep.subr.bf16.mxu0 0
        %3242 = vmatpush1.bf16.xpose.msra.mxu0 0
        %3243 = vmatprep.subr.bf16.mxu0 0
        %3244 = vmatpush1.bf16.xpose.msra.mxu0 0
        %3245 = vmatprep.subr.bf16.mxu0 0
        %3246 = vmatpush1.bf16.xpose.msra.mxu0 0
        %3247 = vmatprep.mubr.bf16.mxu0 0
        %3248 = vmatmul.mubr.bf16.gmra.mrb[0].mxu0 %v3210
        %v3249 = vpop.f32.mrb[0].mxu0
        %v3250 = vadd.f32 0.0, %v3249
        %v3251 = vpop.f32.mrb[0].mxu0
        %v3252 = vpop.f32.mrb[0].mxu0
        %v3253 = vpop.f32.mrb[0].mxu0
        %3254 = vdwg.mxu0
        %3255 = vrot.lane.b32.xlu0 %v1263, 64
        %v3256 = vpop.permute.xlu0 %3255
        %3257 = vrot.lane.b32.xlu0 %v1271, 64
        %v3258 = vpop.permute.xlu0 %3257
        %v3260 = vsel %vm1275, %v3256, 0
        %v3263 = vsel %vm1275, %v3258, 0
        %3265 = vmatprep.subr.bf16.mxu0 0
        %3266 = vmatpush1.bf16.xpose.msra.mxu0 %v3263
        %3267 = vmatprep.subr.bf16.mxu0 0
        %3268 = vmatpush1.bf16.xpose.msra.mxu0 0
        %3269 = vmatprep.subr.bf16.mxu0 0
        %3270 = vmatpush1.bf16.xpose.msra.mxu0 0
        %3271 = vmatprep.subr.bf16.mxu0 0
        %3272 = vmatpush1.bf16.xpose.msra.mxu0 0
        %3273 = vmatprep.subr.bf16.mxu0 0
        %3274 = vmatpush1.bf16.xpose.msra.mxu0 0
        %3275 = vmatprep.subr.bf16.mxu0 0
        %3276 = vmatpush1.bf16.xpose.msra.mxu0 0
        %3277 = vmatprep.subr.bf16.mxu0 0
        %3278 = vmatpush1.bf16.xpose.msra.mxu0 0
        %3279 = vmatprep.subr.bf16.mxu0 0
        %3280 = vmatpush1.bf16.xpose.msra.mxu0 0
        %3281 = vmatprep.subr.bf16.mxu0 0
        %3282 = vmatpush1.bf16.xpose.msra.mxu0 0
        %3283 = vmatprep.subr.bf16.mxu0 0
        %3284 = vmatpush1.bf16.xpose.msra.mxu0 0
        %3285 = vmatprep.subr.bf16.mxu0 0
        %3286 = vmatpush1.bf16.xpose.msra.mxu0 0
        %3287 = vmatprep.subr.bf16.mxu0 0
        %3288 = vmatpush1.bf16.xpose.msra.mxu0 0
        %3289 = vmatprep.subr.bf16.mxu0 0
        %3290 = vmatpush1.bf16.xpose.msra.mxu0 0
        %3291 = vmatprep.subr.bf16.mxu0 0
        %3292 = vmatpush1.bf16.xpose.msra.mxu0 0
        %3293 = vmatprep.subr.bf16.mxu0 0
        %3294 = vmatpush1.bf16.xpose.msra.mxu0 0
        %3295 = vmatprep.subr.bf16.mxu0 0
        %3296 = vmatpush1.bf16.xpose.msra.mxu0 0
        %3297 = vmatprep.mubr.bf16.mxu0 0
        %3298 = vmatmul.mubr.bf16.gmra.mrb[0].mxu0 %v3260
        %v3299 = vpop.f32.mrb[0].mxu0
        %v3300 = vadd.f32 0.0, %v3299
        %v3301 = vpop.f32.mrb[0].mxu0
        %v3302 = vpop.f32.mrb[0].mxu0
        %v3303 = vpop.f32.mrb[0].mxu0
        %3304 = vdwg.mxu0
        %3305 = vrot.lane.b32.xlu0 %v1264, 64
        %v3306 = vpop.permute.xlu0 %3305
        %3307 = vrot.lane.b32.xlu0 %v1272, 64
        %v3308 = vpop.permute.xlu0 %3307
        %v3310 = vsel %vm1275, %v3306, 0
        %v3313 = vsel %vm1275, %v3308, 0
        %3315 = vmatprep.subr.bf16.mxu0 0
        %3316 = vmatpush1.bf16.xpose.msra.mxu0 %v3313
        %3317 = vmatprep.subr.bf16.mxu0 0
        %3318 = vmatpush1.bf16.xpose.msra.mxu0 0
        %3319 = vmatprep.subr.bf16.mxu0 0
        %3320 = vmatpush1.bf16.xpose.msra.mxu0 0
        %3321 = vmatprep.subr.bf16.mxu0 0
        %3322 = vmatpush1.bf16.xpose.msra.mxu0 0
        %3323 = vmatprep.subr.bf16.mxu0 0
        %3324 = vmatpush1.bf16.xpose.msra.mxu0 0
        %3325 = vmatprep.subr.bf16.mxu0 0
        %3326 = vmatpush1.bf16.xpose.msra.mxu0 0
        %3327 = vmatprep.subr.bf16.mxu0 0
        %3328 = vmatpush1.bf16.xpose.msra.mxu0 0
        %3329 = vmatprep.subr.bf16.mxu0 0
        %3330 = vmatpush1.bf16.xpose.msra.mxu0 0
        %3331 = vmatprep.subr.bf16.mxu0 0
        %3332 = vmatpush1.bf16.xpose.msra.mxu0 0
        %3333 = vmatprep.subr.bf16.mxu0 0
        %3334 = vmatpush1.bf16.xpose.msra.mxu0 0
        %3335 = vmatprep.subr.bf16.mxu0 0
        %3336 = vmatpush1.bf16.xpose.msra.mxu0 0
        %3337 = vmatprep.subr.bf16.mxu0 0
        %3338 = vmatpush1.bf16.xpose.msra.mxu0 0
        %3339 = vmatprep.subr.bf16.mxu0 0
        %3340 = vmatpush1.bf16.xpose.msra.mxu0 0
        %3341 = vmatprep.subr.bf16.mxu0 0
        %3342 = vmatpush1.bf16.xpose.msra.mxu0 0
        %3343 = vmatprep.subr.bf16.mxu0 0
        %3344 = vmatpush1.bf16.xpose.msra.mxu0 0
        %3345 = vmatprep.subr.bf16.mxu0 0
        %3346 = vmatpush1.bf16.xpose.msra.mxu0 0
        %3347 = vmatprep.mubr.bf16.mxu0 0
        %3348 = vmatmul.mubr.bf16.gmra.mrb[0].mxu0 %v3310
        %v3349 = vpop.f32.mrb[0].mxu0
        %v3350 = vadd.f32 0.0, %v3349
        %v3351 = vpop.f32.mrb[0].mxu0
        %v3352 = vpop.f32.mrb[0].mxu0
        %v3353 = vpop.f32.mrb[0].mxu0
        %3354 = vdwg.mxu0
        %3355 = vrot.lane.b32.xlu0 %v1265, 64
        %v3356 = vpop.permute.xlu0 %3355
        %3357 = vrot.lane.b32.xlu0 %v1273, 64
        %v3358 = vpop.permute.xlu0 %3357
        %v3360 = vsel %vm1275, %v3356, 0
        %v3363 = vsel %vm1275, %v3358, 0
        %3365 = vmatprep.subr.bf16.mxu0 0
        %3366 = vmatpush1.bf16.xpose.msra.mxu0 %v3363
        %3367 = vmatprep.subr.bf16.mxu0 0
        %3368 = vmatpush1.bf16.xpose.msra.mxu0 0
        %3369 = vmatprep.subr.bf16.mxu0 0
        %3370 = vmatpush1.bf16.xpose.msra.mxu0 0
        %3371 = vmatprep.subr.bf16.mxu0 0
        %3372 = vmatpush1.bf16.xpose.msra.mxu0 0
        %3373 = vmatprep.subr.bf16.mxu0 0
        %3374 = vmatpush1.bf16.xpose.msra.mxu0 0
        %3375 = vmatprep.subr.bf16.mxu0 0
        %3376 = vmatpush1.bf16.xpose.msra.mxu0 0
        %3377 = vmatprep.subr.bf16.mxu0 0
        %3378 = vmatpush1.bf16.xpose.msra.mxu0 0
        %3379 = vmatprep.subr.bf16.mxu0 0
        %3380 = vmatpush1.bf16.xpose.msra.mxu0 0
        %3381 = vmatprep.subr.bf16.mxu0 0
        %3382 = vmatpush1.bf16.xpose.msra.mxu0 0
        %3383 = vmatprep.subr.bf16.mxu0 0
        %3384 = vmatpush1.bf16.xpose.msra.mxu0 0
        %3385 = vmatprep.subr.bf16.mxu0 0
        %3386 = vmatpush1.bf16.xpose.msra.mxu0 0
        %3387 = vmatprep.subr.bf16.mxu0 0
        %3388 = vmatpush1.bf16.xpose.msra.mxu0 0
        %3389 = vmatprep.subr.bf16.mxu0 0
        %3390 = vmatpush1.bf16.xpose.msra.mxu0 0
        %3391 = vmatprep.subr.bf16.mxu0 0
        %3392 = vmatpush1.bf16.xpose.msra.mxu0 0
        %3393 = vmatprep.subr.bf16.mxu0 0
        %3394 = vmatpush1.bf16.xpose.msra.mxu0 0
        %3395 = vmatprep.subr.bf16.mxu0 0
        %3396 = vmatpush1.bf16.xpose.msra.mxu0 0
        %3397 = vmatprep.mubr.bf16.mxu0 0
        %3398 = vmatmul.mubr.bf16.gmra.mrb[0].mxu0 %v3360
        %v3399 = vpop.f32.mrb[0].mxu0
        %v3400 = vadd.f32 0.0, %v3399
        %v3401 = vpop.f32.mrb[0].mxu0
        %v3402 = vpop.f32.mrb[0].mxu0
        %v3403 = vpop.f32.mrb[0].mxu0
        %3404 = vdwg.mxu0
        %3405 = vrot.lane.b32.xlu0 %v1266, 64
        %v3406 = vpop.permute.xlu0 %3405
        %3407 = vrot.lane.b32.xlu0 %v1274, 64
        %v3408 = vpop.permute.xlu0 %3407
        %v3410 = vsel %vm1275, %v3406, 0
        %v3413 = vsel %vm1275, %v3408, 0
        %3415 = vmatprep.subr.bf16.mxu0 0
        %3416 = vmatpush1.bf16.xpose.msra.mxu0 %v3413
        %3417 = vmatprep.subr.bf16.mxu0 0
        %3418 = vmatpush1.bf16.xpose.msra.mxu0 0
        %3419 = vmatprep.subr.bf16.mxu0 0
        %3420 = vmatpush1.bf16.xpose.msra.mxu0 0
        %3421 = vmatprep.subr.bf16.mxu0 0
        %3422 = vmatpush1.bf16.xpose.msra.mxu0 0
        %3423 = vmatprep.subr.bf16.mxu0 0
        %3424 = vmatpush1.bf16.xpose.msra.mxu0 0
        %3425 = vmatprep.subr.bf16.mxu0 0
        %3426 = vmatpush1.bf16.xpose.msra.mxu0 0
        %3427 = vmatprep.subr.bf16.mxu0 0
        %3428 = vmatpush1.bf16.xpose.msra.mxu0 0
        %3429 = vmatprep.subr.bf16.mxu0 0
        %3430 = vmatpush1.bf16.xpose.msra.mxu0 0
        %3431 = vmatprep.subr.bf16.mxu0 0
        %3432 = vmatpush1.bf16.xpose.msra.mxu0 0
        %3433 = vmatprep.subr.bf16.mxu0 0
        %3434 = vmatpush1.bf16.xpose.msra.mxu0 0
        %3435 = vmatprep.subr.bf16.mxu0 0
        %3436 = vmatpush1.bf16.xpose.msra.mxu0 0
        %3437 = vmatprep.subr.bf16.mxu0 0
        %3438 = vmatpush1.bf16.xpose.msra.mxu0 0
        %3439 = vmatprep.subr.bf16.mxu0 0
        %3440 = vmatpush1.bf16.xpose.msra.mxu0 0
        %3441 = vmatprep.subr.bf16.mxu0 0
        %3442 = vmatpush1.bf16.xpose.msra.mxu0 0
        %3443 = vmatprep.subr.bf16.mxu0 0
        %3444 = vmatpush1.bf16.xpose.msra.mxu0 0
        %3445 = vmatprep.subr.bf16.mxu0 0
        %3446 = vmatpush1.bf16.xpose.msra.mxu0 0
        %3447 = vmatprep.mubr.bf16.mxu0 0
        %3448 = vmatmul.mubr.bf16.gmra.mrb[0].mxu0 %v3410
        %v3449 = vpop.f32.mrb[0].mxu0
        %v3450 = vadd.f32 0.0, %v3449
        %v3451 = vpop.f32.mrb[0].mxu0
        %v3452 = vpop.f32.mrb[0].mxu0
        %v3453 = vpop.f32.mrb[0].mxu0
        %3454 = vdwg.mxu0
        %v3455 = vsel %vm1644, %v3100, -inf
        %3456 = vmax.xlane.f32.xlu0 %v3455
        %v3457 = vpop.xlane.xlu0 %3456
        %v3458 = vsel %vm1644, %v3150, -inf
        %3459 = vmax.xlane.f32.xlu0 %v3458
        %v3460 = vpop.xlane.xlu0 %3459
        %v3461 = vsel %vm1644, %v3200, -inf
        %3462 = vmax.xlane.f32.xlu0 %v3461
        %v3463 = vpop.xlane.xlu0 %3462
        %v3464 = vsel %vm1644, %v3250, -inf
        %3465 = vmax.xlane.f32.xlu0 %v3464
        %v3466 = vpop.xlane.xlu0 %3465
        %v3467 = vsel %vm1644, %v3300, -inf
        %3468 = vmax.xlane.f32.xlu0 %v3467
        %v3469 = vpop.xlane.xlu0 %3468
        %v3470 = vsel %vm1644, %v3350, -inf
        %3471 = vmax.xlane.f32.xlu0 %v3470
        %v3472 = vpop.xlane.xlu0 %3471
        %v3473 = vsel %vm1644, %v3400, -inf
        %3474 = vmax.xlane.f32.xlu0 %v3473
        %v3475 = vpop.xlane.xlu0 %3474
        %v3476 = vsel %vm1644, %v3450, -inf
        %3477 = vmax.xlane.f32.xlu0 %v3476
        %v3478 = vpop.xlane.xlu0 %3477
        %v3479 = vsub.f32 %v3100, %v3457
        %v3480 = vsub.f32 %v3150, %v3460
        %v3481 = vsub.f32 %v3200, %v3463
        %v3482 = vsub.f32 %v3250, %v3466
        %v3483 = vsub.f32 %v3300, %v3469
        %v3484 = vsub.f32 %v3350, %v3472
        %v3485 = vsub.f32 %v3400, %v3475
        %v3486 = vsub.f32 %v3450, %v3478
        %v3487 = vmul.f32 %v3479, 1.442695
        %v3488 = vpow.pop %v3487
        %v3489 = vmul.f32 %v3480, 1.442695
        %v3490 = vpow.pop %v3489
        %v3491 = vmul.f32 %v3481, 1.442695
        %v3492 = vpow.pop %v3491
        %v3493 = vmul.f32 %v3482, 1.442695
        %v3494 = vpow.pop %v3493
        %v3495 = vmul.f32 %v3483, 1.442695
        %v3496 = vpow.pop %v3495
        %v3497 = vmul.f32 %v3484, 1.442695
        %v3498 = vpow.pop %v3497
        %v3499 = vmul.f32 %v3485, 1.442695
        %v3500 = vpow.pop %v3499
        %v3501 = vmul.f32 %v3486, 1.442695
        %v3502 = vpow.pop %v3501
        %v3503 = vsel %vm1644, %v3488, 0.0
        %3504 = vadd.xlane.f32.xlu0 %v3503
        %v3505 = vpop.xlane.xlu0 %3504
        %v3506 = vsel %vm1644, %v3490, 0.0
        %3507 = vadd.xlane.f32.xlu0 %v3506
        %v3508 = vpop.xlane.xlu0 %3507
        %v3509 = vsel %vm1644, %v3492, 0.0
        %3510 = vadd.xlane.f32.xlu0 %v3509
        %v3511 = vpop.xlane.xlu0 %3510
        %v3512 = vsel %vm1644, %v3494, 0.0
        %3513 = vadd.xlane.f32.xlu0 %v3512
        %v3514 = vpop.xlane.xlu0 %3513
        %v3515 = vsel %vm1644, %v3496, 0.0
        %3516 = vadd.xlane.f32.xlu0 %v3515
        %v3517 = vpop.xlane.xlu0 %3516
        %v3518 = vsel %vm1644, %v3498, 0.0
        %3519 = vadd.xlane.f32.xlu0 %v3518
        %v3520 = vpop.xlane.xlu0 %3519
        %v3521 = vsel %vm1644, %v3500, 0.0
        %3522 = vadd.xlane.f32.xlu0 %v3521
        %v3523 = vpop.xlane.xlu0 %3522
        %v3524 = vsel %vm1644, %v3502, 0.0
        %3525 = vadd.xlane.f32.xlu0 %v3524
        %v3526 = vpop.xlane.xlu0 %3525
        %v3527 = vrcp.pop %v3505
        %v3528 = vrcp.pop %v3508
        %v3529 = vrcp.pop %v3511
        %v3530 = vrcp.pop %v3514
        %v3531 = vrcp.pop %v3517
        %v3532 = vrcp.pop %v3520
        %v3533 = vrcp.pop %v3523
        %v3534 = vrcp.pop %v3526
        %v3535 = vmul.f32 %v3488, %v3527
        %v3536 = vmul.f32 %v3490, %v3528
        %v3537 = vmul.f32 %v3492, %v3529
        %v3538 = vmul.f32 %v3494, %v3530
        %v3539 = vmul.f32 %v3496, %v3531
        %v3540 = vmul.f32 %v3498, %v3532
        %v3541 = vmul.f32 %v3500, %v3533
        %v3542 = vmul.f32 %v3502, %v3534
        %v3543 = vpack.c.bf16 %v3535, %v3535
        %v3544 = vpack.c.bf16 %v3536, %v3536
        %v3545 = vpack.c.bf16 %v3537, %v3537
        %v3546 = vpack.c.bf16 %v3538, %v3538
        %v3547 = vpack.c.bf16 %v3539, %v3539
        %v3548 = vpack.c.bf16 %v3540, %v3540
        %v3549 = vpack.c.bf16 %v3541, %v3541
        %v3550 = vpack.c.bf16 %v3542, %v3542
        %3551 = vrot.lane.b32.xlu0 %v1741, 64
        %v3552 = vpop.permute.xlu0 %3551
        %v3554 = vsel %vm1644, %v3543, 0
        %v3557 = vsel %vm1752, %v3552, 0
        %3559 = vmatprep.subr.bf16.mxu0 0
        %3560 = vmatpush1.bf16.msra.mxu0 %v3557
        %3561 = vmatprep.subr.bf16.mxu0 0
        %3562 = vmatpush1.bf16.msra.mxu0 0
        %3563 = vmatprep.subr.bf16.mxu0 0
        %3564 = vmatpush1.bf16.msra.mxu0 0
        %3565 = vmatprep.subr.bf16.mxu0 0
        %3566 = vmatpush1.bf16.msra.mxu0 0
        %3567 = vmatprep.subr.bf16.mxu0 0
        %3568 = vmatpush1.bf16.msra.mxu0 0
        %3569 = vmatprep.subr.bf16.mxu0 0
        %3570 = vmatpush1.bf16.msra.mxu0 0
        %3571 = vmatprep.subr.bf16.mxu0 0
        %3572 = vmatpush1.bf16.msra.mxu0 0
        %3573 = vmatprep.subr.bf16.mxu0 0
        %3574 = vmatpush1.bf16.msra.mxu0 0
        %3575 = vmatprep.subr.bf16.mxu0 0
        %3576 = vmatpush1.bf16.msra.mxu0 0
        %3577 = vmatprep.subr.bf16.mxu0 0
        %3578 = vmatpush1.bf16.msra.mxu0 0
        %3579 = vmatprep.subr.bf16.mxu0 0
        %3580 = vmatpush1.bf16.msra.mxu0 0
        %3581 = vmatprep.subr.bf16.mxu0 0
        %3582 = vmatpush1.bf16.msra.mxu0 0
        %3583 = vmatprep.subr.bf16.mxu0 0
        %3584 = vmatpush1.bf16.msra.mxu0 0
        %3585 = vmatprep.subr.bf16.mxu0 0
        %3586 = vmatpush1.bf16.msra.mxu0 0
        %3587 = vmatprep.subr.bf16.mxu0 0
        %3588 = vmatpush1.bf16.msra.mxu0 0
        %3589 = vmatprep.subr.bf16.mxu0 0
        %3590 = vmatpush1.bf16.msra.mxu0 0
        %3591 = vmatprep.mubr.bf16.mxu0 0
        %3592 = vmatmul.mubr.bf16.gmra.mrb[0].mxu0 %v3554
        %v3593 = vpop.f32.mrb[0].mxu0
        %v3594 = vadd.f32 0.0, %v3593
        %v3595 = vpop.f32.mrb[0].mxu0
        %v3596 = vpop.f32.mrb[0].mxu0
        %v3597 = vpop.f32.mrb[0].mxu0
        %3598 = vdwg.mxu0
        %3599 = vrot.lane.b32.xlu0 %v1742, 64
        %v3600 = vpop.permute.xlu0 %3599
        %v3602 = vsel %vm1644, %v3544, 0
        %v3605 = vsel %vm1752, %v3600, 0
        %3607 = vmatprep.subr.bf16.mxu0 0
        %3608 = vmatpush1.bf16.msra.mxu0 %v3605
        %3609 = vmatprep.subr.bf16.mxu0 0
        %3610 = vmatpush1.bf16.msra.mxu0 0
        %3611 = vmatprep.subr.bf16.mxu0 0
        %3612 = vmatpush1.bf16.msra.mxu0 0
        %3613 = vmatprep.subr.bf16.mxu0 0
        %3614 = vmatpush1.bf16.msra.mxu0 0
        %3615 = vmatprep.subr.bf16.mxu0 0
        %3616 = vmatpush1.bf16.msra.mxu0 0
        %3617 = vmatprep.subr.bf16.mxu0 0
        %3618 = vmatpush1.bf16.msra.mxu0 0
        %3619 = vmatprep.subr.bf16.mxu0 0
        %3620 = vmatpush1.bf16.msra.mxu0 0
        %3621 = vmatprep.subr.bf16.mxu0 0
        %3622 = vmatpush1.bf16.msra.mxu0 0
        %3623 = vmatprep.subr.bf16.mxu0 0
        %3624 = vmatpush1.bf16.msra.mxu0 0
        %3625 = vmatprep.subr.bf16.mxu0 0
        %3626 = vmatpush1.bf16.msra.mxu0 0
        %3627 = vmatprep.subr.bf16.mxu0 0
        %3628 = vmatpush1.bf16.msra.mxu0 0
        %3629 = vmatprep.subr.bf16.mxu0 0
        %3630 = vmatpush1.bf16.msra.mxu0 0
        %3631 = vmatprep.subr.bf16.mxu0 0
        %3632 = vmatpush1.bf16.msra.mxu0 0
        %3633 = vmatprep.subr.bf16.mxu0 0
        %3634 = vmatpush1.bf16.msra.mxu0 0
        %3635 = vmatprep.subr.bf16.mxu0 0
        %3636 = vmatpush1.bf16.msra.mxu0 0
        %3637 = vmatprep.subr.bf16.mxu0 0
        %3638 = vmatpush1.bf16.msra.mxu0 0
        %3639 = vmatprep.mubr.bf16.mxu0 0
        %3640 = vmatmul.mubr.bf16.gmra.mrb[0].mxu0 %v3602
        %v3641 = vpop.f32.mrb[0].mxu0
        %v3642 = vadd.f32 0.0, %v3641
        %v3643 = vpop.f32.mrb[0].mxu0
        %v3644 = vpop.f32.mrb[0].mxu0
        %v3645 = vpop.f32.mrb[0].mxu0
        %3646 = vdwg.mxu0
        %3647 = vrot.lane.b32.xlu0 %v1743, 64
        %v3648 = vpop.permute.xlu0 %3647
        %v3650 = vsel %vm1644, %v3545, 0
        %v3653 = vsel %vm1752, %v3648, 0
        %3655 = vmatprep.subr.bf16.mxu0 0
        %3656 = vmatpush1.bf16.msra.mxu0 %v3653
        %3657 = vmatprep.subr.bf16.mxu0 0
        %3658 = vmatpush1.bf16.msra.mxu0 0
        %3659 = vmatprep.subr.bf16.mxu0 0
        %3660 = vmatpush1.bf16.msra.mxu0 0
        %3661 = vmatprep.subr.bf16.mxu0 0
        %3662 = vmatpush1.bf16.msra.mxu0 0
        %3663 = vmatprep.subr.bf16.mxu0 0
        %3664 = vmatpush1.bf16.msra.mxu0 0
        %3665 = vmatprep.subr.bf16.mxu0 0
        %3666 = vmatpush1.bf16.msra.mxu0 0
        %3667 = vmatprep.subr.bf16.mxu0 0
        %3668 = vmatpush1.bf16.msra.mxu0 0
        %3669 = vmatprep.subr.bf16.mxu0 0
        %3670 = vmatpush1.bf16.msra.mxu0 0
        %3671 = vmatprep.subr.bf16.mxu0 0
        %3672 = vmatpush1.bf16.msra.mxu0 0
        %3673 = vmatprep.subr.bf16.mxu0 0
        %3674 = vmatpush1.bf16.msra.mxu0 0
        %3675 = vmatprep.subr.bf16.mxu0 0
        %3676 = vmatpush1.bf16.msra.mxu0 0
        %3677 = vmatprep.subr.bf16.mxu0 0
        %3678 = vmatpush1.bf16.msra.mxu0 0
        %3679 = vmatprep.subr.bf16.mxu0 0
        %3680 = vmatpush1.bf16.msra.mxu0 0
        %3681 = vmatprep.subr.bf16.mxu0 0
        %3682 = vmatpush1.bf16.msra.mxu0 0
        %3683 = vmatprep.subr.bf16.mxu0 0
        %3684 = vmatpush1.bf16.msra.mxu0 0
        %3685 = vmatprep.subr.bf16.mxu0 0
        %3686 = vmatpush1.bf16.msra.mxu0 0
        %3687 = vmatprep.mubr.bf16.mxu0 0
        %3688 = vmatmul.mubr.bf16.gmra.mrb[0].mxu0 %v3650
        %v3689 = vpop.f32.mrb[0].mxu0
        %v3690 = vadd.f32 0.0, %v3689
        %v3691 = vpop.f32.mrb[0].mxu0
        %v3692 = vpop.f32.mrb[0].mxu0
        %v3693 = vpop.f32.mrb[0].mxu0
        %3694 = vdwg.mxu0
        %3695 = vrot.lane.b32.xlu0 %v1744, 64
        %v3696 = vpop.permute.xlu0 %3695
        %v3698 = vsel %vm1644, %v3546, 0
        %v3701 = vsel %vm1752, %v3696, 0
        %3703 = vmatprep.subr.bf16.mxu0 0
        %3704 = vmatpush1.bf16.msra.mxu0 %v3701
        %3705 = vmatprep.subr.bf16.mxu0 0
        %3706 = vmatpush1.bf16.msra.mxu0 0
        %3707 = vmatprep.subr.bf16.mxu0 0
        %3708 = vmatpush1.bf16.msra.mxu0 0
        %3709 = vmatprep.subr.bf16.mxu0 0
        %3710 = vmatpush1.bf16.msra.mxu0 0
        %3711 = vmatprep.subr.bf16.mxu0 0
        %3712 = vmatpush1.bf16.msra.mxu0 0
        %3713 = vmatprep.subr.bf16.mxu0 0
        %3714 = vmatpush1.bf16.msra.mxu0 0
        %3715 = vmatprep.subr.bf16.mxu0 0
        %3716 = vmatpush1.bf16.msra.mxu0 0
        %3717 = vmatprep.subr.bf16.mxu0 0
        %3718 = vmatpush1.bf16.msra.mxu0 0
        %3719 = vmatprep.subr.bf16.mxu0 0
        %3720 = vmatpush1.bf16.msra.mxu0 0
        %3721 = vmatprep.subr.bf16.mxu0 0
        %3722 = vmatpush1.bf16.msra.mxu0 0
        %3723 = vmatprep.subr.bf16.mxu0 0
        %3724 = vmatpush1.bf16.msra.mxu0 0
        %3725 = vmatprep.subr.bf16.mxu0 0
        %3726 = vmatpush1.bf16.msra.mxu0 0
        %3727 = vmatprep.subr.bf16.mxu0 0
        %3728 = vmatpush1.bf16.msra.mxu0 0
        %3729 = vmatprep.subr.bf16.mxu0 0
        %3730 = vmatpush1.bf16.msra.mxu0 0
        %3731 = vmatprep.subr.bf16.mxu0 0
        %3732 = vmatpush1.bf16.msra.mxu0 0
        %3733 = vmatprep.subr.bf16.mxu0 0
        %3734 = vmatpush1.bf16.msra.mxu0 0
        %3735 = vmatprep.mubr.bf16.mxu0 0
        %3736 = vmatmul.mubr.bf16.gmra.mrb[0].mxu0 %v3698
        %v3737 = vpop.f32.mrb[0].mxu0
        %v3738 = vadd.f32 0.0, %v3737
        %v3739 = vpop.f32.mrb[0].mxu0
        %v3740 = vpop.f32.mrb[0].mxu0
        %v3741 = vpop.f32.mrb[0].mxu0
        %3742 = vdwg.mxu0
        %3743 = vrot.lane.b32.xlu0 %v1745, 64
        %v3744 = vpop.permute.xlu0 %3743
        %v3746 = vsel %vm1644, %v3547, 0
        %v3749 = vsel %vm1752, %v3744, 0
        %3751 = vmatprep.subr.bf16.mxu0 0
        %3752 = vmatpush1.bf16.msra.mxu0 %v3749
        %3753 = vmatprep.subr.bf16.mxu0 0
        %3754 = vmatpush1.bf16.msra.mxu0 0
        %3755 = vmatprep.subr.bf16.mxu0 0
        %3756 = vmatpush1.bf16.msra.mxu0 0
        %3757 = vmatprep.subr.bf16.mxu0 0
        %3758 = vmatpush1.bf16.msra.mxu0 0
        %3759 = vmatprep.subr.bf16.mxu0 0
        %3760 = vmatpush1.bf16.msra.mxu0 0
        %3761 = vmatprep.subr.bf16.mxu0 0
        %3762 = vmatpush1.bf16.msra.mxu0 0
        %3763 = vmatprep.subr.bf16.mxu0 0
        %3764 = vmatpush1.bf16.msra.mxu0 0
        %3765 = vmatprep.subr.bf16.mxu0 0
        %3766 = vmatpush1.bf16.msra.mxu0 0
        %3767 = vmatprep.subr.bf16.mxu0 0
        %3768 = vmatpush1.bf16.msra.mxu0 0
        %3769 = vmatprep.subr.bf16.mxu0 0
        %3770 = vmatpush1.bf16.msra.mxu0 0
        %3771 = vmatprep.subr.bf16.mxu0 0
        %3772 = vmatpush1.bf16.msra.mxu0 0
        %3773 = vmatprep.subr.bf16.mxu0 0
        %3774 = vmatpush1.bf16.msra.mxu0 0
        %3775 = vmatprep.subr.bf16.mxu0 0
        %3776 = vmatpush1.bf16.msra.mxu0 0
        %3777 = vmatprep.subr.bf16.mxu0 0
        %3778 = vmatpush1.bf16.msra.mxu0 0
        %3779 = vmatprep.subr.bf16.mxu0 0
        %3780 = vmatpush1.bf16.msra.mxu0 0
        %3781 = vmatprep.subr.bf16.mxu0 0
        %3782 = vmatpush1.bf16.msra.mxu0 0
        %3783 = vmatprep.mubr.bf16.mxu0 0
        %3784 = vmatmul.mubr.bf16.gmra.mrb[0].mxu0 %v3746
        %v3785 = vpop.f32.mrb[0].mxu0
        %v3786 = vadd.f32 0.0, %v3785
        %v3787 = vpop.f32.mrb[0].mxu0
        %v3788 = vpop.f32.mrb[0].mxu0
        %v3789 = vpop.f32.mrb[0].mxu0
        %3790 = vdwg.mxu0
        %3791 = vrot.lane.b32.xlu0 %v1746, 64
        %v3792 = vpop.permute.xlu0 %3791
        %v3794 = vsel %vm1644, %v3548, 0
        %v3797 = vsel %vm1752, %v3792, 0
        %3799 = vmatprep.subr.bf16.mxu0 0
        %3800 = vmatpush1.bf16.msra.mxu0 %v3797
        %3801 = vmatprep.subr.bf16.mxu0 0
        %3802 = vmatpush1.bf16.msra.mxu0 0
        %3803 = vmatprep.subr.bf16.mxu0 0
        %3804 = vmatpush1.bf16.msra.mxu0 0
        %3805 = vmatprep.subr.bf16.mxu0 0
        %3806 = vmatpush1.bf16.msra.mxu0 0
        %3807 = vmatprep.subr.bf16.mxu0 0
        %3808 = vmatpush1.bf16.msra.mxu0 0
        %3809 = vmatprep.subr.bf16.mxu0 0
        %3810 = vmatpush1.bf16.msra.mxu0 0
        %3811 = vmatprep.subr.bf16.mxu0 0
        %3812 = vmatpush1.bf16.msra.mxu0 0
        %3813 = vmatprep.subr.bf16.mxu0 0
        %3814 = vmatpush1.bf16.msra.mxu0 0
        %3815 = vmatprep.subr.bf16.mxu0 0
        %3816 = vmatpush1.bf16.msra.mxu0 0
        %3817 = vmatprep.subr.bf16.mxu0 0
        %3818 = vmatpush1.bf16.msra.mxu0 0
        %3819 = vmatprep.subr.bf16.mxu0 0
        %3820 = vmatpush1.bf16.msra.mxu0 0
        %3821 = vmatprep.subr.bf16.mxu0 0
        %3822 = vmatpush1.bf16.msra.mxu0 0
        %3823 = vmatprep.subr.bf16.mxu0 0
        %3824 = vmatpush1.bf16.msra.mxu0 0
        %3825 = vmatprep.subr.bf16.mxu0 0
        %3826 = vmatpush1.bf16.msra.mxu0 0
        %3827 = vmatprep.subr.bf16.mxu0 0
        %3828 = vmatpush1.bf16.msra.mxu0 0
        %3829 = vmatprep.subr.bf16.mxu0 0
        %3830 = vmatpush1.bf16.msra.mxu0 0
        %3831 = vmatprep.mubr.bf16.mxu0 0
        %3832 = vmatmul.mubr.bf16.gmra.mrb[0].mxu0 %v3794
        %v3833 = vpop.f32.mrb[0].mxu0
        %v3834 = vadd.f32 0.0, %v3833
        %v3835 = vpop.f32.mrb[0].mxu0
        %v3836 = vpop.f32.mrb[0].mxu0
        %v3837 = vpop.f32.mrb[0].mxu0
        %3838 = vdwg.mxu0
        %3839 = vrot.lane.b32.xlu0 %v1747, 64
        %v3840 = vpop.permute.xlu0 %3839
        %v3842 = vsel %vm1644, %v3549, 0
        %v3845 = vsel %vm1752, %v3840, 0
        %3847 = vmatprep.subr.bf16.mxu0 0
        %3848 = vmatpush1.bf16.msra.mxu0 %v3845
        %3849 = vmatprep.subr.bf16.mxu0 0
        %3850 = vmatpush1.bf16.msra.mxu0 0
        %3851 = vmatprep.subr.bf16.mxu0 0
        %3852 = vmatpush1.bf16.msra.mxu0 0
        %3853 = vmatprep.subr.bf16.mxu0 0
        %3854 = vmatpush1.bf16.msra.mxu0 0
        %3855 = vmatprep.subr.bf16.mxu0 0
        %3856 = vmatpush1.bf16.msra.mxu0 0
        %3857 = vmatprep.subr.bf16.mxu0 0
        %3858 = vmatpush1.bf16.msra.mxu0 0
        %3859 = vmatprep.subr.bf16.mxu0 0
        %3860 = vmatpush1.bf16.msra.mxu0 0
        %3861 = vmatprep.subr.bf16.mxu0 0
        %3862 = vmatpush1.bf16.msra.mxu0 0
        %3863 = vmatprep.subr.bf16.mxu0 0
        %3864 = vmatpush1.bf16.msra.mxu0 0
        %3865 = vmatprep.subr.bf16.mxu0 0
        %3866 = vmatpush1.bf16.msra.mxu0 0
        %3867 = vmatprep.subr.bf16.mxu0 0
        %3868 = vmatpush1.bf16.msra.mxu0 0
        %3869 = vmatprep.subr.bf16.mxu0 0
        %3870 = vmatpush1.bf16.msra.mxu0 0
        %3871 = vmatprep.subr.bf16.mxu0 0
        %3872 = vmatpush1.bf16.msra.mxu0 0
        %3873 = vmatprep.subr.bf16.mxu0 0
        %3874 = vmatpush1.bf16.msra.mxu0 0
        %3875 = vmatprep.subr.bf16.mxu0 0
        %3876 = vmatpush1.bf16.msra.mxu0 0
        %3877 = vmatprep.subr.bf16.mxu0 0
        %3878 = vmatpush1.bf16.msra.mxu0 0
        %3879 = vmatprep.mubr.bf16.mxu0 0
        %3880 = vmatmul.mubr.bf16.gmra.mrb[0].mxu0 %v3842
        %v3881 = vpop.f32.mrb[0].mxu0
        %v3882 = vadd.f32 0.0, %v3881
        %v3883 = vpop.f32.mrb[0].mxu0
        %v3884 = vpop.f32.mrb[0].mxu0
        %v3885 = vpop.f32.mrb[0].mxu0
        %3886 = vdwg.mxu0
        %3887 = vrot.lane.b32.xlu0 %v1748, 64
        %v3888 = vpop.permute.xlu0 %3887
        %v3890 = vsel %vm1644, %v3550, 0
        %v3893 = vsel %vm1752, %v3888, 0
        %3895 = vmatprep.subr.bf16.mxu0 0
        %3896 = vmatpush1.bf16.msra.mxu0 %v3893
        %3897 = vmatprep.subr.bf16.mxu0 0
        %3898 = vmatpush1.bf16.msra.mxu0 0
        %3899 = vmatprep.subr.bf16.mxu0 0
        %3900 = vmatpush1.bf16.msra.mxu0 0
        %3901 = vmatprep.subr.bf16.mxu0 0
        %3902 = vmatpush1.bf16.msra.mxu0 0
        %3903 = vmatprep.subr.bf16.mxu0 0
        %3904 = vmatpush1.bf16.msra.mxu0 0
        %3905 = vmatprep.subr.bf16.mxu0 0
        %3906 = vmatpush1.bf16.msra.mxu0 0
        %3907 = vmatprep.subr.bf16.mxu0 0
        %3908 = vmatpush1.bf16.msra.mxu0 0
        %3909 = vmatprep.subr.bf16.mxu0 0
        %3910 = vmatpush1.bf16.msra.mxu0 0
        %3911 = vmatprep.subr.bf16.mxu0 0
        %3912 = vmatpush1.bf16.msra.mxu0 0
        %3913 = vmatprep.subr.bf16.mxu0 0
        %3914 = vmatpush1.bf16.msra.mxu0 0
        %3915 = vmatprep.subr.bf16.mxu0 0
        %3916 = vmatpush1.bf16.msra.mxu0 0
        %3917 = vmatprep.subr.bf16.mxu0 0
        %3918 = vmatpush1.bf16.msra.mxu0 0
        %3919 = vmatprep.subr.bf16.mxu0 0
        %3920 = vmatpush1.bf16.msra.mxu0 0
        %3921 = vmatprep.subr.bf16.mxu0 0
        %3922 = vmatpush1.bf16.msra.mxu0 0
        %3923 = vmatprep.subr.bf16.mxu0 0
        %3924 = vmatpush1.bf16.msra.mxu0 0
        %3925 = vmatprep.subr.bf16.mxu0 0
        %3926 = vmatpush1.bf16.msra.mxu0 0
        %3927 = vmatprep.mubr.bf16.mxu0 0
        %3928 = vmatmul.mubr.bf16.gmra.mrb[0].mxu0 %v3890
        %v3929 = vpop.f32.mrb[0].mxu0
        %v3930 = vadd.f32 0.0, %v3929
        %v3931 = vpop.f32.mrb[0].mxu0
        %v3932 = vpop.f32.mrb[0].mxu0
        %v3933 = vpop.f32.mrb[0].mxu0
        %3934 = vdwg.mxu0
        %v3935 = vpack.c.bf16 %v3642, %v3594
        %v3936 = vpack.c.bf16 %v3738, %v3690
        %v3937 = vpack.c.bf16 %v3834, %v3786
        %v3938 = vpack.c.bf16 %v3930, %v3882
        %3943 = vrot.lane.b32.xlu0 %v3935, 64
        %v3944 = vpop.permute.xlu0 %3943
        %3945 = vrot.lane.b32.xlu0 %v3936, 64
        %v3946 = vpop.permute.xlu0 %3945
        %3947 = vrot.lane.b32.xlu0 %v3937, 64
        %v3948 = vpop.permute.xlu0 %3947
        %3949 = vrot.lane.b32.xlu0 %v3938, 64
        %v3950 = vpop.permute.xlu0 %3949
        %vm3955 = vcmask 785920
        %3956 = vst.msk [vmem:[#allocation2] sm:$0xff] %vm3955, %v3944
        %3957 = vst.msk [vmem:[#allocation2 + $0x8] sm:$0xff] %vm3955, %v3946
        %3958 = vst.msk [vmem:[#allocation2 + $0x10] sm:$0xff] %vm3955, %v3948
        %3959 = vst.msk [vmem:[#allocation2 + $0x18] sm:$0xff] %vm3955, %v3950
        %3960 = vrot.lane.b32.xlu0 %v1259, 32
        %v3961 = vpop.permute.xlu0 %3960
        %3962 = vrot.lane.b32.xlu0 %v1267, 32
        %v3963 = vpop.permute.xlu0 %3962
        %v3965 = vsel %vm1275, %v3961, 0
        %v3968 = vsel %vm1275, %v3963, 0
        %3970 = vmatprep.subr.bf16.mxu0 0
        %3971 = vmatpush1.bf16.xpose.msra.mxu0 %v3968
        %3972 = vmatprep.subr.bf16.mxu0 0
        %3973 = vmatpush1.bf16.xpose.msra.mxu0 0
        %3974 = vmatprep.subr.bf16.mxu0 0
        %3975 = vmatpush1.bf16.xpose.msra.mxu0 0
        %3976 = vmatprep.subr.bf16.mxu0 0
        %3977 = vmatpush1.bf16.xpose.msra.mxu0 0
        %3978 = vmatprep.subr.bf16.mxu0 0
        %3979 = vmatpush1.bf16.xpose.msra.mxu0 0
        %3980 = vmatprep.subr.bf16.mxu0 0
        %3981 = vmatpush1.bf16.xpose.msra.mxu0 0
        %3982 = vmatprep.subr.bf16.mxu0 0
        %3983 = vmatpush1.bf16.xpose.msra.mxu0 0
        %3984 = vmatprep.subr.bf16.mxu0 0
        %3985 = vmatpush1.bf16.xpose.msra.mxu0 0
        %3986 = vmatprep.subr.bf16.mxu0 0
        %3987 = vmatpush1.bf16.xpose.msra.mxu0 0
        %3988 = vmatprep.subr.bf16.mxu0 0
        %3989 = vmatpush1.bf16.xpose.msra.mxu0 0
        %3990 = vmatprep.subr.bf16.mxu0 0
        %3991 = vmatpush1.bf16.xpose.msra.mxu0 0
        %3992 = vmatprep.subr.bf16.mxu0 0
        %3993 = vmatpush1.bf16.xpose.msra.mxu0 0
        %3994 = vmatprep.subr.bf16.mxu0 0
        %3995 = vmatpush1.bf16.xpose.msra.mxu0 0
        %3996 = vmatprep.subr.bf16.mxu0 0
        %3997 = vmatpush1.bf16.xpose.msra.mxu0 0
        %3998 = vmatprep.subr.bf16.mxu0 0
        %3999 = vmatpush1.bf16.xpose.msra.mxu0 0
        %4000 = vmatprep.subr.bf16.mxu0 0
        %4001 = vmatpush1.bf16.xpose.msra.mxu0 0
        %4002 = vmatprep.mubr.bf16.mxu0 0
        %4003 = vmatmul.mubr.bf16.gmra.mrb[0].mxu0 %v3965
        %v4004 = vpop.f32.mrb[0].mxu0
        %v4005 = vadd.f32 0.0, %v4004
        %v4006 = vpop.f32.mrb[0].mxu0
        %v4007 = vpop.f32.mrb[0].mxu0
        %v4008 = vpop.f32.mrb[0].mxu0
        %4009 = vdwg.mxu0
        %4010 = vrot.lane.b32.xlu0 %v1260, 32
        %v4011 = vpop.permute.xlu0 %4010
        %4012 = vrot.lane.b32.xlu0 %v1268, 32
        %v4013 = vpop.permute.xlu0 %4012
        %v4015 = vsel %vm1275, %v4011, 0
        %v4018 = vsel %vm1275, %v4013, 0
        %4020 = vmatprep.subr.bf16.mxu0 0
        %4021 = vmatpush1.bf16.xpose.msra.mxu0 %v4018
        %4022 = vmatprep.subr.bf16.mxu0 0
        %4023 = vmatpush1.bf16.xpose.msra.mxu0 0
        %4024 = vmatprep.subr.bf16.mxu0 0
        %4025 = vmatpush1.bf16.xpose.msra.mxu0 0
        %4026 = vmatprep.subr.bf16.mxu0 0
        %4027 = vmatpush1.bf16.xpose.msra.mxu0 0
        %4028 = vmatprep.subr.bf16.mxu0 0
        %4029 = vmatpush1.bf16.xpose.msra.mxu0 0
        %4030 = vmatprep.subr.bf16.mxu0 0
        %4031 = vmatpush1.bf16.xpose.msra.mxu0 0
        %4032 = vmatprep.subr.bf16.mxu0 0
        %4033 = vmatpush1.bf16.xpose.msra.mxu0 0
        %4034 = vmatprep.subr.bf16.mxu0 0
        %4035 = vmatpush1.bf16.xpose.msra.mxu0 0
        %4036 = vmatprep.subr.bf16.mxu0 0
        %4037 = vmatpush1.bf16.xpose.msra.mxu0 0
        %4038 = vmatprep.subr.bf16.mxu0 0
        %4039 = vmatpush1.bf16.xpose.msra.mxu0 0
        %4040 = vmatprep.subr.bf16.mxu0 0
        %4041 = vmatpush1.bf16.xpose.msra.mxu0 0
        %4042 = vmatprep.subr.bf16.mxu0 0
        %4043 = vmatpush1.bf16.xpose.msra.mxu0 0
        %4044 = vmatprep.subr.bf16.mxu0 0
        %4045 = vmatpush1.bf16.xpose.msra.mxu0 0
        %4046 = vmatprep.subr.bf16.mxu0 0
        %4047 = vmatpush1.bf16.xpose.msra.mxu0 0
        %4048 = vmatprep.subr.bf16.mxu0 0
        %4049 = vmatpush1.bf16.xpose.msra.mxu0 0
        %4050 = vmatprep.subr.bf16.mxu0 0
        %4051 = vmatpush1.bf16.xpose.msra.mxu0 0
        %4052 = vmatprep.mubr.bf16.mxu0 0
        %4053 = vmatmul.mubr.bf16.gmra.mrb[0].mxu0 %v4015
        %v4054 = vpop.f32.mrb[0].mxu0
        %v4055 = vadd.f32 0.0, %v4054
        %v4056 = vpop.f32.mrb[0].mxu0
        %v4057 = vpop.f32.mrb[0].mxu0
        %v4058 = vpop.f32.mrb[0].mxu0
        %4059 = vdwg.mxu0
        %4060 = vrot.lane.b32.xlu0 %v1261, 32
        %v4061 = vpop.permute.xlu0 %4060
        %4062 = vrot.lane.b32.xlu0 %v1269, 32
        %v4063 = vpop.permute.xlu0 %4062
        %v4065 = vsel %vm1275, %v4061, 0
        %v4068 = vsel %vm1275, %v4063, 0
        %4070 = vmatprep.subr.bf16.mxu0 0
        %4071 = vmatpush1.bf16.xpose.msra.mxu0 %v4068
        %4072 = vmatprep.subr.bf16.mxu0 0
        %4073 = vmatpush1.bf16.xpose.msra.mxu0 0
        %4074 = vmatprep.subr.bf16.mxu0 0
        %4075 = vmatpush1.bf16.xpose.msra.mxu0 0
        %4076 = vmatprep.subr.bf16.mxu0 0
        %4077 = vmatpush1.bf16.xpose.msra.mxu0 0
        %4078 = vmatprep.subr.bf16.mxu0 0
        %4079 = vmatpush1.bf16.xpose.msra.mxu0 0
        %4080 = vmatprep.subr.bf16.mxu0 0
        %4081 = vmatpush1.bf16.xpose.msra.mxu0 0
        %4082 = vmatprep.subr.bf16.mxu0 0
        %4083 = vmatpush1.bf16.xpose.msra.mxu0 0
        %4084 = vmatprep.subr.bf16.mxu0 0
        %4085 = vmatpush1.bf16.xpose.msra.mxu0 0
        %4086 = vmatprep.subr.bf16.mxu0 0
        %4087 = vmatpush1.bf16.xpose.msra.mxu0 0
        %4088 = vmatprep.subr.bf16.mxu0 0
        %4089 = vmatpush1.bf16.xpose.msra.mxu0 0
        %4090 = vmatprep.subr.bf16.mxu0 0
        %4091 = vmatpush1.bf16.xpose.msra.mxu0 0
        %4092 = vmatprep.subr.bf16.mxu0 0
        %4093 = vmatpush1.bf16.xpose.msra.mxu0 0
        %4094 = vmatprep.subr.bf16.mxu0 0
        %4095 = vmatpush1.bf16.xpose.msra.mxu0 0
        %4096 = vmatprep.subr.bf16.mxu0 0
        %4097 = vmatpush1.bf16.xpose.msra.mxu0 0
        %4098 = vmatprep.subr.bf16.mxu0 0
        %4099 = vmatpush1.bf16.xpose.msra.mxu0 0
        %4100 = vmatprep.subr.bf16.mxu0 0
        %4101 = vmatpush1.bf16.xpose.msra.mxu0 0
        %4102 = vmatprep.mubr.bf16.mxu0 0
        %4103 = vmatmul.mubr.bf16.gmra.mrb[0].mxu0 %v4065
        %v4104 = vpop.f32.mrb[0].mxu0
        %v4105 = vadd.f32 0.0, %v4104
        %v4106 = vpop.f32.mrb[0].mxu0
        %v4107 = vpop.f32.mrb[0].mxu0
        %v4108 = vpop.f32.mrb[0].mxu0
        %4109 = vdwg.mxu0
        %4110 = vrot.lane.b32.xlu0 %v1262, 32
        %v4111 = vpop.permute.xlu0 %4110
        %4112 = vrot.lane.b32.xlu0 %v1270, 32
        %v4113 = vpop.permute.xlu0 %4112
        %v4115 = vsel %vm1275, %v4111, 0
        %v4118 = vsel %vm1275, %v4113, 0
        %4120 = vmatprep.subr.bf16.mxu0 0
        %4121 = vmatpush1.bf16.xpose.msra.mxu0 %v4118
        %4122 = vmatprep.subr.bf16.mxu0 0
        %4123 = vmatpush1.bf16.xpose.msra.mxu0 0
        %4124 = vmatprep.subr.bf16.mxu0 0
        %4125 = vmatpush1.bf16.xpose.msra.mxu0 0
        %4126 = vmatprep.subr.bf16.mxu0 0
        %4127 = vmatpush1.bf16.xpose.msra.mxu0 0
        %4128 = vmatprep.subr.bf16.mxu0 0
        %4129 = vmatpush1.bf16.xpose.msra.mxu0 0
        %4130 = vmatprep.subr.bf16.mxu0 0
        %4131 = vmatpush1.bf16.xpose.msra.mxu0 0
        %4132 = vmatprep.subr.bf16.mxu0 0
        %4133 = vmatpush1.bf16.xpose.msra.mxu0 0
        %4134 = vmatprep.subr.bf16.mxu0 0
        %4135 = vmatpush1.bf16.xpose.msra.mxu0 0
        %4136 = vmatprep.subr.bf16.mxu0 0
        %4137 = vmatpush1.bf16.xpose.msra.mxu0 0
        %4138 = vmatprep.subr.bf16.mxu0 0
        %4139 = vmatpush1.bf16.xpose.msra.mxu0 0
        %4140 = vmatprep.subr.bf16.mxu0 0
        %4141 = vmatpush1.bf16.xpose.msra.mxu0 0
        %4142 = vmatprep.subr.bf16.mxu0 0
        %4143 = vmatpush1.bf16.xpose.msra.mxu0 0
        %4144 = vmatprep.subr.bf16.mxu0 0
        %4145 = vmatpush1.bf16.xpose.msra.mxu0 0
        %4146 = vmatprep.subr.bf16.mxu0 0
        %4147 = vmatpush1.bf16.xpose.msra.mxu0 0
        %4148 = vmatprep.subr.bf16.mxu0 0
        %4149 = vmatpush1.bf16.xpose.msra.mxu0 0
        %4150 = vmatprep.subr.bf16.mxu0 0
        %4151 = vmatpush1.bf16.xpose.msra.mxu0 0
        %4152 = vmatprep.mubr.bf16.mxu0 0
        %4153 = vmatmul.mubr.bf16.gmra.mrb[0].mxu0 %v4115
        %v4154 = vpop.f32.mrb[0].mxu0
        %v4155 = vadd.f32 0.0, %v4154
        %v4156 = vpop.f32.mrb[0].mxu0
        %v4157 = vpop.f32.mrb[0].mxu0
        %v4158 = vpop.f32.mrb[0].mxu0
        %4159 = vdwg.mxu0
        %4160 = vrot.lane.b32.xlu0 %v1263, 32
        %v4161 = vpop.permute.xlu0 %4160
        %4162 = vrot.lane.b32.xlu0 %v1271, 32
        %v4163 = vpop.permute.xlu0 %4162
        %v4165 = vsel %vm1275, %v4161, 0
        %v4168 = vsel %vm1275, %v4163, 0
        %4170 = vmatprep.subr.bf16.mxu0 0
        %4171 = vmatpush1.bf16.xpose.msra.mxu0 %v4168
        %4172 = vmatprep.subr.bf16.mxu0 0
        %4173 = vmatpush1.bf16.xpose.msra.mxu0 0
        %4174 = vmatprep.subr.bf16.mxu0 0
        %4175 = vmatpush1.bf16.xpose.msra.mxu0 0
        %4176 = vmatprep.subr.bf16.mxu0 0
        %4177 = vmatpush1.bf16.xpose.msra.mxu0 0
        %4178 = vmatprep.subr.bf16.mxu0 0
        %4179 = vmatpush1.bf16.xpose.msra.mxu0 0
        %4180 = vmatprep.subr.bf16.mxu0 0
        %4181 = vmatpush1.bf16.xpose.msra.mxu0 0
        %4182 = vmatprep.subr.bf16.mxu0 0
        %4183 = vmatpush1.bf16.xpose.msra.mxu0 0
        %4184 = vmatprep.subr.bf16.mxu0 0
        %4185 = vmatpush1.bf16.xpose.msra.mxu0 0
        %4186 = vmatprep.subr.bf16.mxu0 0
        %4187 = vmatpush1.bf16.xpose.msra.mxu0 0
        %4188 = vmatprep.subr.bf16.mxu0 0
        %4189 = vmatpush1.bf16.xpose.msra.mxu0 0
        %4190 = vmatprep.subr.bf16.mxu0 0
        %4191 = vmatpush1.bf16.xpose.msra.mxu0 0
        %4192 = vmatprep.subr.bf16.mxu0 0
        %4193 = vmatpush1.bf16.xpose.msra.mxu0 0
        %4194 = vmatprep.subr.bf16.mxu0 0
        %4195 = vmatpush1.bf16.xpose.msra.mxu0 0
        %4196 = vmatprep.subr.bf16.mxu0 0
        %4197 = vmatpush1.bf16.xpose.msra.mxu0 0
        %4198 = vmatprep.subr.bf16.mxu0 0
        %4199 = vmatpush1.bf16.xpose.msra.mxu0 0
        %4200 = vmatprep.subr.bf16.mxu0 0
        %4201 = vmatpush1.bf16.xpose.msra.mxu0 0
        %4202 = vmatprep.mubr.bf16.mxu0 0
        %4203 = vmatmul.mubr.bf16.gmra.mrb[0].mxu0 %v4165
        %v4204 = vpop.f32.mrb[0].mxu0
        %v4205 = vadd.f32 0.0, %v4204
        %v4206 = vpop.f32.mrb[0].mxu0
        %v4207 = vpop.f32.mrb[0].mxu0
        %v4208 = vpop.f32.mrb[0].mxu0
        %4209 = vdwg.mxu0
        %4210 = vrot.lane.b32.xlu0 %v1264, 32
        %v4211 = vpop.permute.xlu0 %4210
        %4212 = vrot.lane.b32.xlu0 %v1272, 32
        %v4213 = vpop.permute.xlu0 %4212
        %v4215 = vsel %vm1275, %v4211, 0
        %v4218 = vsel %vm1275, %v4213, 0
        %4220 = vmatprep.subr.bf16.mxu0 0
        %4221 = vmatpush1.bf16.xpose.msra.mxu0 %v4218
        %4222 = vmatprep.subr.bf16.mxu0 0
        %4223 = vmatpush1.bf16.xpose.msra.mxu0 0
        %4224 = vmatprep.subr.bf16.mxu0 0
        %4225 = vmatpush1.bf16.xpose.msra.mxu0 0
        %4226 = vmatprep.subr.bf16.mxu0 0
        %4227 = vmatpush1.bf16.xpose.msra.mxu0 0
        %4228 = vmatprep.subr.bf16.mxu0 0
        %4229 = vmatpush1.bf16.xpose.msra.mxu0 0
        %4230 = vmatprep.subr.bf16.mxu0 0
        %4231 = vmatpush1.bf16.xpose.msra.mxu0 0
        %4232 = vmatprep.subr.bf16.mxu0 0
        %4233 = vmatpush1.bf16.xpose.msra.mxu0 0
        %4234 = vmatprep.subr.bf16.mxu0 0
        %4235 = vmatpush1.bf16.xpose.msra.mxu0 0
        %4236 = vmatprep.subr.bf16.mxu0 0
        %4237 = vmatpush1.bf16.xpose.msra.mxu0 0
        %4238 = vmatprep.subr.bf16.mxu0 0
        %4239 = vmatpush1.bf16.xpose.msra.mxu0 0
        %4240 = vmatprep.subr.bf16.mxu0 0
        %4241 = vmatpush1.bf16.xpose.msra.mxu0 0
        %4242 = vmatprep.subr.bf16.mxu0 0
        %4243 = vmatpush1.bf16.xpose.msra.mxu0 0
        %4244 = vmatprep.subr.bf16.mxu0 0
        %4245 = vmatpush1.bf16.xpose.msra.mxu0 0
        %4246 = vmatprep.subr.bf16.mxu0 0
        %4247 = vmatpush1.bf16.xpose.msra.mxu0 0
        %4248 = vmatprep.subr.bf16.mxu0 0
        %4249 = vmatpush1.bf16.xpose.msra.mxu0 0
        %4250 = vmatprep.subr.bf16.mxu0 0
        %4251 = vmatpush1.bf16.xpose.msra.mxu0 0
        %4252 = vmatprep.mubr.bf16.mxu0 0
        %4253 = vmatmul.mubr.bf16.gmra.mrb[0].mxu0 %v4215
        %v4254 = vpop.f32.mrb[0].mxu0
        %v4255 = vadd.f32 0.0, %v4254
        %v4256 = vpop.f32.mrb[0].mxu0
        %v4257 = vpop.f32.mrb[0].mxu0
        %v4258 = vpop.f32.mrb[0].mxu0
        %4259 = vdwg.mxu0
        %4260 = vrot.lane.b32.xlu0 %v1265, 32
        %v4261 = vpop.permute.xlu0 %4260
        %4262 = vrot.lane.b32.xlu0 %v1273, 32
        %v4263 = vpop.permute.xlu0 %4262
        %v4265 = vsel %vm1275, %v4261, 0
        %v4268 = vsel %vm1275, %v4263, 0
        %4270 = vmatprep.subr.bf16.mxu0 0
        %4271 = vmatpush1.bf16.xpose.msra.mxu0 %v4268
        %4272 = vmatprep.subr.bf16.mxu0 0
        %4273 = vmatpush1.bf16.xpose.msra.mxu0 0
        %4274 = vmatprep.subr.bf16.mxu0 0
        %4275 = vmatpush1.bf16.xpose.msra.mxu0 0
        %4276 = vmatprep.subr.bf16.mxu0 0
        %4277 = vmatpush1.bf16.xpose.msra.mxu0 0
        %4278 = vmatprep.subr.bf16.mxu0 0
        %4279 = vmatpush1.bf16.xpose.msra.mxu0 0
        %4280 = vmatprep.subr.bf16.mxu0 0
        %4281 = vmatpush1.bf16.xpose.msra.mxu0 0
        %4282 = vmatprep.subr.bf16.mxu0 0
        %4283 = vmatpush1.bf16.xpose.msra.mxu0 0
        %4284 = vmatprep.subr.bf16.mxu0 0
        %4285 = vmatpush1.bf16.xpose.msra.mxu0 0
        %4286 = vmatprep.subr.bf16.mxu0 0
        %4287 = vmatpush1.bf16.xpose.msra.mxu0 0
        %4288 = vmatprep.subr.bf16.mxu0 0
        %4289 = vmatpush1.bf16.xpose.msra.mxu0 0
        %4290 = vmatprep.subr.bf16.mxu0 0
        %4291 = vmatpush1.bf16.xpose.msra.mxu0 0
        %4292 = vmatprep.subr.bf16.mxu0 0
        %4293 = vmatpush1.bf16.xpose.msra.mxu0 0
        %4294 = vmatprep.subr.bf16.mxu0 0
        %4295 = vmatpush1.bf16.xpose.msra.mxu0 0
        %4296 = vmatprep.subr.bf16.mxu0 0
        %4297 = vmatpush1.bf16.xpose.msra.mxu0 0
        %4298 = vmatprep.subr.bf16.mxu0 0
        %4299 = vmatpush1.bf16.xpose.msra.mxu0 0
        %4300 = vmatprep.subr.bf16.mxu0 0
        %4301 = vmatpush1.bf16.xpose.msra.mxu0 0
        %4302 = vmatprep.mubr.bf16.mxu0 0
        %4303 = vmatmul.mubr.bf16.gmra.mrb[0].mxu0 %v4265
        %v4304 = vpop.f32.mrb[0].mxu0
        %v4305 = vadd.f32 0.0, %v4304
        %v4306 = vpop.f32.mrb[0].mxu0
        %v4307 = vpop.f32.mrb[0].mxu0
        %v4308 = vpop.f32.mrb[0].mxu0
        %4309 = vdwg.mxu0
        %4310 = vrot.lane.b32.xlu0 %v1266, 32
        %v4311 = vpop.permute.xlu0 %4310
        %4312 = vrot.lane.b32.xlu0 %v1274, 32
        %v4313 = vpop.permute.xlu0 %4312
        %v4315 = vsel %vm1275, %v4311, 0
        %v4318 = vsel %vm1275, %v4313, 0
        %4320 = vmatprep.subr.bf16.mxu0 0
        %4321 = vmatpush1.bf16.xpose.msra.mxu0 %v4318
        %4322 = vmatprep.subr.bf16.mxu0 0
        %4323 = vmatpush1.bf16.xpose.msra.mxu0 0
        %4324 = vmatprep.subr.bf16.mxu0 0
        %4325 = vmatpush1.bf16.xpose.msra.mxu0 0
        %4326 = vmatprep.subr.bf16.mxu0 0
        %4327 = vmatpush1.bf16.xpose.msra.mxu0 0
        %4328 = vmatprep.subr.bf16.mxu0 0
        %4329 = vmatpush1.bf16.xpose.msra.mxu0 0
        %4330 = vmatprep.subr.bf16.mxu0 0
        %4331 = vmatpush1.bf16.xpose.msra.mxu0 0
        %4332 = vmatprep.subr.bf16.mxu0 0
        %4333 = vmatpush1.bf16.xpose.msra.mxu0 0
        %4334 = vmatprep.subr.bf16.mxu0 0
        %4335 = vmatpush1.bf16.xpose.msra.mxu0 0
        %4336 = vmatprep.subr.bf16.mxu0 0
        %4337 = vmatpush1.bf16.xpose.msra.mxu0 0
        %4338 = vmatprep.subr.bf16.mxu0 0
        %4339 = vmatpush1.bf16.xpose.msra.mxu0 0
        %4340 = vmatprep.subr.bf16.mxu0 0
        %4341 = vmatpush1.bf16.xpose.msra.mxu0 0
        %4342 = vmatprep.subr.bf16.mxu0 0
        %4343 = vmatpush1.bf16.xpose.msra.mxu0 0
        %4344 = vmatprep.subr.bf16.mxu0 0
        %4345 = vmatpush1.bf16.xpose.msra.mxu0 0
        %4346 = vmatprep.subr.bf16.mxu0 0
        %4347 = vmatpush1.bf16.xpose.msra.mxu0 0
        %4348 = vmatprep.subr.bf16.mxu0 0
        %4349 = vmatpush1.bf16.xpose.msra.mxu0 0
        %4350 = vmatprep.subr.bf16.mxu0 0
        %4351 = vmatpush1.bf16.xpose.msra.mxu0 0
        %4352 = vmatprep.mubr.bf16.mxu0 0
        %4353 = vmatmul.mubr.bf16.gmra.mrb[0].mxu0 %v4315
        %v4354 = vpop.f32.mrb[0].mxu0
        %v4355 = vadd.f32 0.0, %v4354
        %v4356 = vpop.f32.mrb[0].mxu0
        %v4357 = vpop.f32.mrb[0].mxu0
        %v4358 = vpop.f32.mrb[0].mxu0
        %4359 = vdwg.mxu0
        %v4360 = vsel %vm1644, %v4005, -inf
        %4361 = vmax.xlane.f32.xlu0 %v4360
        %v4362 = vpop.xlane.xlu0 %4361
        %v4363 = vsel %vm1644, %v4055, -inf
        %4364 = vmax.xlane.f32.xlu0 %v4363
        %v4365 = vpop.xlane.xlu0 %4364
        %v4366 = vsel %vm1644, %v4105, -inf
        %4367 = vmax.xlane.f32.xlu0 %v4366
        %v4368 = vpop.xlane.xlu0 %4367
        %v4369 = vsel %vm1644, %v4155, -inf
        %4370 = vmax.xlane.f32.xlu0 %v4369
        %v4371 = vpop.xlane.xlu0 %4370
        %v4372 = vsel %vm1644, %v4205, -inf
        %4373 = vmax.xlane.f32.xlu0 %v4372
        %v4374 = vpop.xlane.xlu0 %4373
        %v4375 = vsel %vm1644, %v4255, -inf
        %4376 = vmax.xlane.f32.xlu0 %v4375
        %v4377 = vpop.xlane.xlu0 %4376
        %v4378 = vsel %vm1644, %v4305, -inf
        %4379 = vmax.xlane.f32.xlu0 %v4378
        %v4380 = vpop.xlane.xlu0 %4379
        %v4381 = vsel %vm1644, %v4355, -inf
        %4382 = vmax.xlane.f32.xlu0 %v4381
        %v4383 = vpop.xlane.xlu0 %4382
        %v4384 = vsub.f32 %v4005, %v4362
        %v4385 = vsub.f32 %v4055, %v4365
        %v4386 = vsub.f32 %v4105, %v4368
        %v4387 = vsub.f32 %v4155, %v4371
        %v4388 = vsub.f32 %v4205, %v4374
        %v4389 = vsub.f32 %v4255, %v4377
        %v4390 = vsub.f32 %v4305, %v4380
        %v4391 = vsub.f32 %v4355, %v4383
        %v4392 = vmul.f32 %v4384, 1.442695
        %v4393 = vpow.pop %v4392
        %v4394 = vmul.f32 %v4385, 1.442695
        %v4395 = vpow.pop %v4394
        %v4396 = vmul.f32 %v4386, 1.442695
        %v4397 = vpow.pop %v4396
        %v4398 = vmul.f32 %v4387, 1.442695
        %v4399 = vpow.pop %v4398
        %v4400 = vmul.f32 %v4388, 1.442695
        %v4401 = vpow.pop %v4400
        %v4402 = vmul.f32 %v4389, 1.442695
        %v4403 = vpow.pop %v4402
        %v4404 = vmul.f32 %v4390, 1.442695
        %v4405 = vpow.pop %v4404
        %v4406 = vmul.f32 %v4391, 1.442695
        %v4407 = vpow.pop %v4406
        %v4408 = vsel %vm1644, %v4393, 0.0
        %4409 = vadd.xlane.f32.xlu0 %v4408
        %v4410 = vpop.xlane.xlu0 %4409
        %v4411 = vsel %vm1644, %v4395, 0.0
        %4412 = vadd.xlane.f32.xlu0 %v4411
        %v4413 = vpop.xlane.xlu0 %4412
        %v4414 = vsel %vm1644, %v4397, 0.0
        %4415 = vadd.xlane.f32.xlu0 %v4414
        %v4416 = vpop.xlane.xlu0 %4415
        %v4417 = vsel %vm1644, %v4399, 0.0
        %4418 = vadd.xlane.f32.xlu0 %v4417
        %v4419 = vpop.xlane.xlu0 %4418
        %v4420 = vsel %vm1644, %v4401, 0.0
        %4421 = vadd.xlane.f32.xlu0 %v4420
        %v4422 = vpop.xlane.xlu0 %4421
        %v4423 = vsel %vm1644, %v4403, 0.0
        %4424 = vadd.xlane.f32.xlu0 %v4423
        %v4425 = vpop.xlane.xlu0 %4424
        %v4426 = vsel %vm1644, %v4405, 0.0
        %4427 = vadd.xlane.f32.xlu0 %v4426
        %v4428 = vpop.xlane.xlu0 %4427
        %v4429 = vsel %vm1644, %v4407, 0.0
        %4430 = vadd.xlane.f32.xlu0 %v4429
        %v4431 = vpop.xlane.xlu0 %4430
        %v4432 = vrcp.pop %v4410
        %v4433 = vrcp.pop %v4413
        %v4434 = vrcp.pop %v4416
        %v4435 = vrcp.pop %v4419
        %v4436 = vrcp.pop %v4422
        %v4437 = vrcp.pop %v4425
        %v4438 = vrcp.pop %v4428
        %v4439 = vrcp.pop %v4431
        %v4440 = vmul.f32 %v4393, %v4432
        %v4441 = vmul.f32 %v4395, %v4433
        %v4442 = vmul.f32 %v4397, %v4434
        %v4443 = vmul.f32 %v4399, %v4435
        %v4444 = vmul.f32 %v4401, %v4436
        %v4445 = vmul.f32 %v4403, %v4437
        %v4446 = vmul.f32 %v4405, %v4438
        %v4447 = vmul.f32 %v4407, %v4439
        %v4448 = vpack.c.bf16 %v4440, %v4440
        %v4449 = vpack.c.bf16 %v4441, %v4441
        %v4450 = vpack.c.bf16 %v4442, %v4442
        %v4451 = vpack.c.bf16 %v4443, %v4443
        %v4452 = vpack.c.bf16 %v4444, %v4444
        %v4453 = vpack.c.bf16 %v4445, %v4445
        %v4454 = vpack.c.bf16 %v4446, %v4446
        %v4455 = vpack.c.bf16 %v4447, %v4447
        %4456 = vrot.lane.b32.xlu0 %v1741, 32
        %v4457 = vpop.permute.xlu0 %4456
        %v4459 = vsel %vm1644, %v4448, 0
        %v4462 = vsel %vm1752, %v4457, 0
        %4464 = vmatprep.subr.bf16.mxu0 0
        %4465 = vmatpush1.bf16.msra.mxu0 %v4462
        %4466 = vmatprep.subr.bf16.mxu0 0
        %4467 = vmatpush1.bf16.msra.mxu0 0
        %4468 = vmatprep.subr.bf16.mxu0 0
        %4469 = vmatpush1.bf16.msra.mxu0 0
        %4470 = vmatprep.subr.bf16.mxu0 0
        %4471 = vmatpush1.bf16.msra.mxu0 0
        %4472 = vmatprep.subr.bf16.mxu0 0
        %4473 = vmatpush1.bf16.msra.mxu0 0
        %4474 = vmatprep.subr.bf16.mxu0 0
        %4475 = vmatpush1.bf16.msra.mxu0 0
        %4476 = vmatprep.subr.bf16.mxu0 0
        %4477 = vmatpush1.bf16.msra.mxu0 0
        %4478 = vmatprep.subr.bf16.mxu0 0
        %4479 = vmatpush1.bf16.msra.mxu0 0
        %4480 = vmatprep.subr.bf16.mxu0 0
        %4481 = vmatpush1.bf16.msra.mxu0 0
        %4482 = vmatprep.subr.bf16.mxu0 0
        %4483 = vmatpush1.bf16.msra.mxu0 0
        %4484 = vmatprep.subr.bf16.mxu0 0
        %4485 = vmatpush1.bf16.msra.mxu0 0
        %4486 = vmatprep.subr.bf16.mxu0 0
        %4487 = vmatpush1.bf16.msra.mxu0 0
        %4488 = vmatprep.subr.bf16.mxu0 0
        %4489 = vmatpush1.bf16.msra.mxu0 0
        %4490 = vmatprep.subr.bf16.mxu0 0
        %4491 = vmatpush1.bf16.msra.mxu0 0
        %4492 = vmatprep.subr.bf16.mxu0 0
        %4493 = vmatpush1.bf16.msra.mxu0 0
        %4494 = vmatprep.subr.bf16.mxu0 0
        %4495 = vmatpush1.bf16.msra.mxu0 0
        %4496 = vmatprep.mubr.bf16.mxu0 0
        %4497 = vmatmul.mubr.bf16.gmra.mrb[0].mxu0 %v4459
        %v4498 = vpop.f32.mrb[0].mxu0
        %v4499 = vadd.f32 0.0, %v4498
        %v4500 = vpop.f32.mrb[0].mxu0
        %v4501 = vpop.f32.mrb[0].mxu0
        %v4502 = vpop.f32.mrb[0].mxu0
        %4503 = vdwg.mxu0
        %4504 = vrot.lane.b32.xlu0 %v1742, 32
        %v4505 = vpop.permute.xlu0 %4504
        %v4507 = vsel %vm1644, %v4449, 0
        %v4510 = vsel %vm1752, %v4505, 0
        %4512 = vmatprep.subr.bf16.mxu0 0
        %4513 = vmatpush1.bf16.msra.mxu0 %v4510
        %4514 = vmatprep.subr.bf16.mxu0 0
        %4515 = vmatpush1.bf16.msra.mxu0 0
        %4516 = vmatprep.subr.bf16.mxu0 0
        %4517 = vmatpush1.bf16.msra.mxu0 0
        %4518 = vmatprep.subr.bf16.mxu0 0
        %4519 = vmatpush1.bf16.msra.mxu0 0
        %4520 = vmatprep.subr.bf16.mxu0 0
        %4521 = vmatpush1.bf16.msra.mxu0 0
        %4522 = vmatprep.subr.bf16.mxu0 0
        %4523 = vmatpush1.bf16.msra.mxu0 0
        %4524 = vmatprep.subr.bf16.mxu0 0
        %4525 = vmatpush1.bf16.msra.mxu0 0
        %4526 = vmatprep.subr.bf16.mxu0 0
        %4527 = vmatpush1.bf16.msra.mxu0 0
        %4528 = vmatprep.subr.bf16.mxu0 0
        %4529 = vmatpush1.bf16.msra.mxu0 0
        %4530 = vmatprep.subr.bf16.mxu0 0
        %4531 = vmatpush1.bf16.msra.mxu0 0
        %4532 = vmatprep.subr.bf16.mxu0 0
        %4533 = vmatpush1.bf16.msra.mxu0 0
        %4534 = vmatprep.subr.bf16.mxu0 0
        %4535 = vmatpush1.bf16.msra.mxu0 0
        %4536 = vmatprep.subr.bf16.mxu0 0
        %4537 = vmatpush1.bf16.msra.mxu0 0
        %4538 = vmatprep.subr.bf16.mxu0 0
        %4539 = vmatpush1.bf16.msra.mxu0 0
        %4540 = vmatprep.subr.bf16.mxu0 0
        %4541 = vmatpush1.bf16.msra.mxu0 0
        %4542 = vmatprep.subr.bf16.mxu0 0
        %4543 = vmatpush1.bf16.msra.mxu0 0
        %4544 = vmatprep.mubr.bf16.mxu0 0
        %4545 = vmatmul.mubr.bf16.gmra.mrb[0].mxu0 %v4507
        %v4546 = vpop.f32.mrb[0].mxu0
        %v4547 = vadd.f32 0.0, %v4546
        %v4548 = vpop.f32.mrb[0].mxu0
        %v4549 = vpop.f32.mrb[0].mxu0
        %v4550 = vpop.f32.mrb[0].mxu0
        %4551 = vdwg.mxu0
        %4552 = vrot.lane.b32.xlu0 %v1743, 32
        %v4553 = vpop.permute.xlu0 %4552
        %v4555 = vsel %vm1644, %v4450, 0
        %v4558 = vsel %vm1752, %v4553, 0
        %4560 = vmatprep.subr.bf16.mxu0 0
        %4561 = vmatpush1.bf16.msra.mxu0 %v4558
        %4562 = vmatprep.subr.bf16.mxu0 0
        %4563 = vmatpush1.bf16.msra.mxu0 0
        %4564 = vmatprep.subr.bf16.mxu0 0
        %4565 = vmatpush1.bf16.msra.mxu0 0
        %4566 = vmatprep.subr.bf16.mxu0 0
        %4567 = vmatpush1.bf16.msra.mxu0 0
        %4568 = vmatprep.subr.bf16.mxu0 0
        %4569 = vmatpush1.bf16.msra.mxu0 0
        %4570 = vmatprep.subr.bf16.mxu0 0
        %4571 = vmatpush1.bf16.msra.mxu0 0
        %4572 = vmatprep.subr.bf16.mxu0 0
        %4573 = vmatpush1.bf16.msra.mxu0 0
        %4574 = vmatprep.subr.bf16.mxu0 0
        %4575 = vmatpush1.bf16.msra.mxu0 0
        %4576 = vmatprep.subr.bf16.mxu0 0
        %4577 = vmatpush1.bf16.msra.mxu0 0
        %4578 = vmatprep.subr.bf16.mxu0 0
        %4579 = vmatpush1.bf16.msra.mxu0 0
        %4580 = vmatprep.subr.bf16.mxu0 0
        %4581 = vmatpush1.bf16.msra.mxu0 0
        %4582 = vmatprep.subr.bf16.mxu0 0
        %4583 = vmatpush1.bf16.msra.mxu0 0
        %4584 = vmatprep.subr.bf16.mxu0 0
        %4585 = vmatpush1.bf16.msra.mxu0 0
        %4586 = vmatprep.subr.bf16.mxu0 0
        %4587 = vmatpush1.bf16.msra.mxu0 0
        %4588 = vmatprep.subr.bf16.mxu0 0
        %4589 = vmatpush1.bf16.msra.mxu0 0
        %4590 = vmatprep.subr.bf16.mxu0 0
        %4591 = vmatpush1.bf16.msra.mxu0 0
        %4592 = vmatprep.mubr.bf16.mxu0 0
        %4593 = vmatmul.mubr.bf16.gmra.mrb[0].mxu0 %v4555
        %v4594 = vpop.f32.mrb[0].mxu0
        %v4595 = vadd.f32 0.0, %v4594
        %v4596 = vpop.f32.mrb[0].mxu0
        %v4597 = vpop.f32.mrb[0].mxu0
        %v4598 = vpop.f32.mrb[0].mxu0
        %4599 = vdwg.mxu0
        %4600 = vrot.lane.b32.xlu0 %v1744, 32
        %v4601 = vpop.permute.xlu0 %4600
        %v4603 = vsel %vm1644, %v4451, 0
        %v4606 = vsel %vm1752, %v4601, 0
        %4608 = vmatprep.subr.bf16.mxu0 0
        %4609 = vmatpush1.bf16.msra.mxu0 %v4606
        %4610 = vmatprep.subr.bf16.mxu0 0
        %4611 = vmatpush1.bf16.msra.mxu0 0
        %4612 = vmatprep.subr.bf16.mxu0 0
        %4613 = vmatpush1.bf16.msra.mxu0 0
        %4614 = vmatprep.subr.bf16.mxu0 0
        %4615 = vmatpush1.bf16.msra.mxu0 0
        %4616 = vmatprep.subr.bf16.mxu0 0
        %4617 = vmatpush1.bf16.msra.mxu0 0
        %4618 = vmatprep.subr.bf16.mxu0 0
        %4619 = vmatpush1.bf16.msra.mxu0 0
        %4620 = vmatprep.subr.bf16.mxu0 0
        %4621 = vmatpush1.bf16.msra.mxu0 0
        %4622 = vmatprep.subr.bf16.mxu0 0
        %4623 = vmatpush1.bf16.msra.mxu0 0
        %4624 = vmatprep.subr.bf16.mxu0 0
        %4625 = vmatpush1.bf16.msra.mxu0 0
        %4626 = vmatprep.subr.bf16.mxu0 0
        %4627 = vmatpush1.bf16.msra.mxu0 0
        %4628 = vmatprep.subr.bf16.mxu0 0
        %4629 = vmatpush1.bf16.msra.mxu0 0
        %4630 = vmatprep.subr.bf16.mxu0 0
        %4631 = vmatpush1.bf16.msra.mxu0 0
        %4632 = vmatprep.subr.bf16.mxu0 0
        %4633 = vmatpush1.bf16.msra.mxu0 0
        %4634 = vmatprep.subr.bf16.mxu0 0
        %4635 = vmatpush1.bf16.msra.mxu0 0
        %4636 = vmatprep.subr.bf16.mxu0 0
        %4637 = vmatpush1.bf16.msra.mxu0 0
        %4638 = vmatprep.subr.bf16.mxu0 0
        %4639 = vmatpush1.bf16.msra.mxu0 0
        %4640 = vmatprep.mubr.bf16.mxu0 0
        %4641 = vmatmul.mubr.bf16.gmra.mrb[0].mxu0 %v4603
        %v4642 = vpop.f32.mrb[0].mxu0
        %v4643 = vadd.f32 0.0, %v4642
        %v4644 = vpop.f32.mrb[0].mxu0
        %v4645 = vpop.f32.mrb[0].mxu0
        %v4646 = vpop.f32.mrb[0].mxu0
        %4647 = vdwg.mxu0
        %4648 = vrot.lane.b32.xlu0 %v1745, 32
        %v4649 = vpop.permute.xlu0 %4648
        %v4651 = vsel %vm1644, %v4452, 0
        %v4654 = vsel %vm1752, %v4649, 0
        %4656 = vmatprep.subr.bf16.mxu0 0
        %4657 = vmatpush1.bf16.msra.mxu0 %v4654
        %4658 = vmatprep.subr.bf16.mxu0 0
        %4659 = vmatpush1.bf16.msra.mxu0 0
        %4660 = vmatprep.subr.bf16.mxu0 0
        %4661 = vmatpush1.bf16.msra.mxu0 0
        %4662 = vmatprep.subr.bf16.mxu0 0
        %4663 = vmatpush1.bf16.msra.mxu0 0
        %4664 = vmatprep.subr.bf16.mxu0 0
        %4665 = vmatpush1.bf16.msra.mxu0 0
        %4666 = vmatprep.subr.bf16.mxu0 0
        %4667 = vmatpush1.bf16.msra.mxu0 0
        %4668 = vmatprep.subr.bf16.mxu0 0
        %4669 = vmatpush1.bf16.msra.mxu0 0
        %4670 = vmatprep.subr.bf16.mxu0 0
        %4671 = vmatpush1.bf16.msra.mxu0 0
        %4672 = vmatprep.subr.bf16.mxu0 0
        %4673 = vmatpush1.bf16.msra.mxu0 0
        %4674 = vmatprep.subr.bf16.mxu0 0
        %4675 = vmatpush1.bf16.msra.mxu0 0
        %4676 = vmatprep.subr.bf16.mxu0 0
        %4677 = vmatpush1.bf16.msra.mxu0 0
        %4678 = vmatprep.subr.bf16.mxu0 0
        %4679 = vmatpush1.bf16.msra.mxu0 0
        %4680 = vmatprep.subr.bf16.mxu0 0
        %4681 = vmatpush1.bf16.msra.mxu0 0
        %4682 = vmatprep.subr.bf16.mxu0 0
        %4683 = vmatpush1.bf16.msra.mxu0 0
        %4684 = vmatprep.subr.bf16.mxu0 0
        %4685 = vmatpush1.bf16.msra.mxu0 0
        %4686 = vmatprep.subr.bf16.mxu0 0
        %4687 = vmatpush1.bf16.msra.mxu0 0
        %4688 = vmatprep.mubr.bf16.mxu0 0
        %4689 = vmatmul.mubr.bf16.gmra.mrb[0].mxu0 %v4651
        %v4690 = vpop.f32.mrb[0].mxu0
        %v4691 = vadd.f32 0.0, %v4690
        %v4692 = vpop.f32.mrb[0].mxu0
        %v4693 = vpop.f32.mrb[0].mxu0
        %v4694 = vpop.f32.mrb[0].mxu0
        %4695 = vdwg.mxu0
        %4696 = vrot.lane.b32.xlu0 %v1746, 32
        %v4697 = vpop.permute.xlu0 %4696
        %v4699 = vsel %vm1644, %v4453, 0
        %v4702 = vsel %vm1752, %v4697, 0
        %4704 = vmatprep.subr.bf16.mxu0 0
        %4705 = vmatpush1.bf16.msra.mxu0 %v4702
        %4706 = vmatprep.subr.bf16.mxu0 0
        %4707 = vmatpush1.bf16.msra.mxu0 0
        %4708 = vmatprep.subr.bf16.mxu0 0
        %4709 = vmatpush1.bf16.msra.mxu0 0
        %4710 = vmatprep.subr.bf16.mxu0 0
        %4711 = vmatpush1.bf16.msra.mxu0 0
        %4712 = vmatprep.subr.bf16.mxu0 0
        %4713 = vmatpush1.bf16.msra.mxu0 0
        %4714 = vmatprep.subr.bf16.mxu0 0
        %4715 = vmatpush1.bf16.msra.mxu0 0
        %4716 = vmatprep.subr.bf16.mxu0 0
        %4717 = vmatpush1.bf16.msra.mxu0 0
        %4718 = vmatprep.subr.bf16.mxu0 0
        %4719 = vmatpush1.bf16.msra.mxu0 0
        %4720 = vmatprep.subr.bf16.mxu0 0
        %4721 = vmatpush1.bf16.msra.mxu0 0
        %4722 = vmatprep.subr.bf16.mxu0 0
        %4723 = vmatpush1.bf16.msra.mxu0 0
        %4724 = vmatprep.subr.bf16.mxu0 0
        %4725 = vmatpush1.bf16.msra.mxu0 0
        %4726 = vmatprep.subr.bf16.mxu0 0
        %4727 = vmatpush1.bf16.msra.mxu0 0
        %4728 = vmatprep.subr.bf16.mxu0 0
        %4729 = vmatpush1.bf16.msra.mxu0 0
        %4730 = vmatprep.subr.bf16.mxu0 0
        %4731 = vmatpush1.bf16.msra.mxu0 0
        %4732 = vmatprep.subr.bf16.mxu0 0
        %4733 = vmatpush1.bf16.msra.mxu0 0
        %4734 = vmatprep.subr.bf16.mxu0 0
        %4735 = vmatpush1.bf16.msra.mxu0 0
        %4736 = vmatprep.mubr.bf16.mxu0 0
        %4737 = vmatmul.mubr.bf16.gmra.mrb[0].mxu0 %v4699
        %v4738 = vpop.f32.mrb[0].mxu0
        %v4739 = vadd.f32 0.0, %v4738
        %v4740 = vpop.f32.mrb[0].mxu0
        %v4741 = vpop.f32.mrb[0].mxu0
        %v4742 = vpop.f32.mrb[0].mxu0
        %4743 = vdwg.mxu0
        %4744 = vrot.lane.b32.xlu0 %v1747, 32
        %v4745 = vpop.permute.xlu0 %4744
        %v4747 = vsel %vm1644, %v4454, 0
        %v4750 = vsel %vm1752, %v4745, 0
        %4752 = vmatprep.subr.bf16.mxu0 0
        %4753 = vmatpush1.bf16.msra.mxu0 %v4750
        %4754 = vmatprep.subr.bf16.mxu0 0
        %4755 = vmatpush1.bf16.msra.mxu0 0
        %4756 = vmatprep.subr.bf16.mxu0 0
        %4757 = vmatpush1.bf16.msra.mxu0 0
        %4758 = vmatprep.subr.bf16.mxu0 0
        %4759 = vmatpush1.bf16.msra.mxu0 0
        %4760 = vmatprep.subr.bf16.mxu0 0
        %4761 = vmatpush1.bf16.msra.mxu0 0
        %4762 = vmatprep.subr.bf16.mxu0 0
        %4763 = vmatpush1.bf16.msra.mxu0 0
        %4764 = vmatprep.subr.bf16.mxu0 0
        %4765 = vmatpush1.bf16.msra.mxu0 0
        %4766 = vmatprep.subr.bf16.mxu0 0
        %4767 = vmatpush1.bf16.msra.mxu0 0
        %4768 = vmatprep.subr.bf16.mxu0 0
        %4769 = vmatpush1.bf16.msra.mxu0 0
        %4770 = vmatprep.subr.bf16.mxu0 0
        %4771 = vmatpush1.bf16.msra.mxu0 0
        %4772 = vmatprep.subr.bf16.mxu0 0
        %4773 = vmatpush1.bf16.msra.mxu0 0
        %4774 = vmatprep.subr.bf16.mxu0 0
        %4775 = vmatpush1.bf16.msra.mxu0 0
        %4776 = vmatprep.subr.bf16.mxu0 0
        %4777 = vmatpush1.bf16.msra.mxu0 0
        %4778 = vmatprep.subr.bf16.mxu0 0
        %4779 = vmatpush1.bf16.msra.mxu0 0
        %4780 = vmatprep.subr.bf16.mxu0 0
        %4781 = vmatpush1.bf16.msra.mxu0 0
        %4782 = vmatprep.subr.bf16.mxu0 0
        %4783 = vmatpush1.bf16.msra.mxu0 0
        %4784 = vmatprep.mubr.bf16.mxu0 0
        %4785 = vmatmul.mubr.bf16.gmra.mrb[0].mxu0 %v4747
        %v4786 = vpop.f32.mrb[0].mxu0
        %v4787 = vadd.f32 0.0, %v4786
        %v4788 = vpop.f32.mrb[0].mxu0
        %v4789 = vpop.f32.mrb[0].mxu0
        %v4790 = vpop.f32.mrb[0].mxu0
        %4791 = vdwg.mxu0
        %4792 = vrot.lane.b32.xlu0 %v1748, 32
        %v4793 = vpop.permute.xlu0 %4792
        %v4795 = vsel %vm1644, %v4455, 0
        %v4798 = vsel %vm1752, %v4793, 0
        %4800 = vmatprep.subr.bf16.mxu0 0
        %4801 = vmatpush1.bf16.msra.mxu0 %v4798
        %4802 = vmatprep.subr.bf16.mxu0 0
        %4803 = vmatpush1.bf16.msra.mxu0 0
        %4804 = vmatprep.subr.bf16.mxu0 0
        %4805 = vmatpush1.bf16.msra.mxu0 0
        %4806 = vmatprep.subr.bf16.mxu0 0
        %4807 = vmatpush1.bf16.msra.mxu0 0
        %4808 = vmatprep.subr.bf16.mxu0 0
        %4809 = vmatpush1.bf16.msra.mxu0 0
        %4810 = vmatprep.subr.bf16.mxu0 0
        %4811 = vmatpush1.bf16.msra.mxu0 0
        %4812 = vmatprep.subr.bf16.mxu0 0
        %4813 = vmatpush1.bf16.msra.mxu0 0
        %4814 = vmatprep.subr.bf16.mxu0 0
        %4815 = vmatpush1.bf16.msra.mxu0 0
        %4816 = vmatprep.subr.bf16.mxu0 0
        %4817 = vmatpush1.bf16.msra.mxu0 0
        %4818 = vmatprep.subr.bf16.mxu0 0
        %4819 = vmatpush1.bf16.msra.mxu0 0
        %4820 = vmatprep.subr.bf16.mxu0 0
        %4821 = vmatpush1.bf16.msra.mxu0 0
        %4822 = vmatprep.subr.bf16.mxu0 0
        %4823 = vmatpush1.bf16.msra.mxu0 0
        %4824 = vmatprep.subr.bf16.mxu0 0
        %4825 = vmatpush1.bf16.msra.mxu0 0
        %4826 = vmatprep.subr.bf16.mxu0 0
        %4827 = vmatpush1.bf16.msra.mxu0 0
        %4828 = vmatprep.subr.bf16.mxu0 0
        %4829 = vmatpush1.bf16.msra.mxu0 0
        %4830 = vmatprep.subr.bf16.mxu0 0
        %4831 = vmatpush1.bf16.msra.mxu0 0
        %4832 = vmatprep.mubr.bf16.mxu0 0
        %4833 = vmatmul.mubr.bf16.gmra.mrb[0].mxu0 %v4795
        %v4834 = vpop.f32.mrb[0].mxu0
        %v4835 = vadd.f32 0.0, %v4834
        %v4836 = vpop.f32.mrb[0].mxu0
        %v4837 = vpop.f32.mrb[0].mxu0
        %v4838 = vpop.f32.mrb[0].mxu0
        %4839 = vdwg.mxu0
        %v4840 = vpack.c.bf16 %v4547, %v4499
        %v4841 = vpack.c.bf16 %v4643, %v4595
        %v4842 = vpack.c.bf16 %v4739, %v4691
        %v4843 = vpack.c.bf16 %v4835, %v4787
        %4848 = vrot.lane.b32.xlu0 %v4840, 96
        %v4849 = vpop.permute.xlu0 %4848
        %4850 = vrot.lane.b32.xlu0 %v4841, 96
        %v4851 = vpop.permute.xlu0 %4850
        %4852 = vrot.lane.b32.xlu0 %v4842, 96
        %v4853 = vpop.permute.xlu0 %4852
        %4854 = vrot.lane.b32.xlu0 %v4843, 96
        %v4855 = vpop.permute.xlu0 %4854
        %vm4860 = vcmask 1048320
        %4861 = vst.msk [vmem:[#allocation2] sm:$0xff] %vm4860, %v4849
        %4862 = vst.msk [vmem:[#allocation2 + $0x8] sm:$0xff] %vm4860, %v4851
        %4863 = vst.msk [vmem:[#allocation2 + $0x10] sm:$0xff] %vm4860, %v4853
        %4864 = vst.msk [vmem:[#allocation2 + $0x18] sm:$0xff] %vm4860, %v4855
        %v4865 = vld [vmem:[#allocation2] sm:$0xff]
        %v4866 = vld [vmem:[#allocation2 + $0x8] sm:$0xff]
        %v4867 = vld [vmem:[#allocation2 + $0x10] sm:$0xff]
        %v4868 = vld [vmem:[#allocation2 + $0x18] sm:$0xff]
        %v4869 = vld [vmem:[%s668] sm:$0xf]
        %v4870 = vld [vmem:[%s668 + $0x4] sm:$0xf]
        %v4871 = vld [vmem:[%s668 + $0x8] sm:$0xf]
        %v4872 = vld [vmem:[%s668 + $0xc] sm:$0xf]
        %v4873 = vld [vmem:[%s668 + $0x10] sm:$0xf]
        %v4874 = vld [vmem:[%s668 + $0x14] sm:$0xf]
        %v4875 = vld [vmem:[%s668 + $0x18] sm:$0xf]
        %v4876 = vld [vmem:[%s668 + $0x1c] sm:$0xf]
        %v4877 = vld [vmem:[%s668 + $0x20] sm:$0xf]
        %v4878 = vld [vmem:[%s668 + $0x24] sm:$0xf]
        %v4879 = vld [vmem:[%s668 + $0x28] sm:$0xf]
        %v4880 = vld [vmem:[%s668 + $0x2c] sm:$0xf]
        %v4881 = vld [vmem:[%s668 + $0x30] sm:$0xf]
        %v4882 = vld [vmem:[%s668 + $0x34] sm:$0xf]
        %v4883 = vld [vmem:[%s668 + $0x38] sm:$0xf]
        %v4884 = vld [vmem:[%s668 + $0x3c] sm:$0xf]
        %v4885 = vld [vmem:[%s676] sm:$0x1]
        %v4887 = vlaneseq
        %v4888 = vshrl.u32 %v4887, 7
        %v4889 = vsub.s32 0, %v4888
        %v4890 = vrot.slane %v4885, %v4889
        %v4908 = vunpack.c.l.b16 %v4869
        %v4909 = vunpack.c.l.b16 %v4870
        %v4910 = vunpack.c.l.b16 %v4871
        %v4911 = vunpack.c.l.b16 %v4872
        %v4912 = vunpack.c.l.b16 %v4873
        %v4913 = vunpack.c.l.b16 %v4874
        %v4914 = vunpack.c.l.b16 %v4875
        %v4915 = vunpack.c.l.b16 %v4876
        %v4916 = vunpack.c.l.b16 %v4877
        %v4917 = vunpack.c.l.b16 %v4878
        %v4918 = vunpack.c.l.b16 %v4879
        %v4919 = vunpack.c.l.b16 %v4880
        %v4920 = vunpack.c.l.b16 %v4881
        %v4921 = vunpack.c.l.b16 %v4882
        %v4922 = vunpack.c.l.b16 %v4883
        %v4923 = vunpack.c.l.b16 %v4884
        %v4924 = vpack.c.b16 %v4909, %v4908
        %v4925 = vpack.c.b16 %v4911, %v4910
        %v4926 = vpack.c.b16 %v4913, %v4912
        %v4927 = vpack.c.b16 %v4915, %v4914
        %v4928 = vpack.c.b16 %v4917, %v4916
        %v4929 = vpack.c.b16 %v4919, %v4918
        %v4930 = vpack.c.b16 %v4921, %v4920
        %v4931 = vpack.c.b16 %v4923, %v4922
        %4940 = vmatprep.subr.bf16.mxu0 0
        %4941 = vmatpush1.bf16.msra.mxu0 %v4924
        %4942 = vmatprep.subr.bf16.mxu0 0
        %4943 = vmatpush1.bf16.msra.mxu0 %v4925
        %4944 = vmatprep.subr.bf16.mxu0 0
        %4945 = vmatpush1.bf16.msra.mxu0 %v4926
        %4946 = vmatprep.subr.bf16.mxu0 0
        %4947 = vmatpush1.bf16.msra.mxu0 %v4927
        %4948 = vmatprep.subr.bf16.mxu0 0
        %4949 = vmatpush1.bf16.msra.mxu0 %v4928
        %4950 = vmatprep.subr.bf16.mxu0 0
        %4951 = vmatpush1.bf16.msra.mxu0 %v4929
        %4952 = vmatprep.subr.bf16.mxu0 0
        %4953 = vmatpush1.bf16.msra.mxu0 %v4930
        %4954 = vmatprep.subr.bf16.mxu0 0
        %4955 = vmatpush1.bf16.msra.mxu0 %v4931
        %4956 = vmatprep.subr.bf16.mxu0 0
        %4957 = vmatpush1.bf16.msra.mxu0 0
        %4958 = vmatprep.subr.bf16.mxu0 0
        %4959 = vmatpush1.bf16.msra.mxu0 0
        %4960 = vmatprep.subr.bf16.mxu0 0
        %4961 = vmatpush1.bf16.msra.mxu0 0
        %4962 = vmatprep.subr.bf16.mxu0 0
        %4963 = vmatpush1.bf16.msra.mxu0 0
        %4964 = vmatprep.subr.bf16.mxu0 0
        %4965 = vmatpush1.bf16.msra.mxu0 0
        %4966 = vmatprep.subr.bf16.mxu0 0
        %4967 = vmatpush1.bf16.msra.mxu0 0
        %4968 = vmatprep.subr.bf16.mxu0 0
        %4969 = vmatpush1.bf16.msra.mxu0 0
        %4970 = vmatprep.subr.bf16.mxu0 0
        %4971 = vmatpush1.bf16.msra.mxu0 0
        %4972 = vmatprep.mubr.bf16.mxu0 0
        %4973 = vmatmul.mubr.bf16.gmra.mrb[0].mxu0 %v4865
        %v4974 = vpop.f32.mrb[0].mxu0
        %v4975 = vadd.f32 %v4890, %v4974
        %v4976 = vpop.f32.mrb[0].mxu0
        %v4977 = vpop.f32.mrb[0].mxu0
        %v4978 = vadd.f32 %v4890, %v4977
        %v4979 = vpop.f32.mrb[0].mxu0
        %4980 = vmatprep.mubr.bf16.mxu0 0
        %4981 = vmatmul.mubr.bf16.gmra.mrb[0].mxu0 %v4866
        %v4982 = vpop.f32.mrb[0].mxu0
        %v4983 = vadd.f32 %v4890, %v4982
        %v4984 = vpop.f32.mrb[0].mxu0
        %v4985 = vpop.f32.mrb[0].mxu0
        %v4986 = vadd.f32 %v4890, %v4985
        %v4987 = vpop.f32.mrb[0].mxu0
        %4988 = vmatprep.mubr.bf16.mxu0 0
        %4989 = vmatmul.mubr.bf16.gmra.mrb[0].mxu0 %v4867
        %v4990 = vpop.f32.mrb[0].mxu0
        %v4991 = vadd.f32 %v4890, %v4990
        %v4992 = vpop.f32.mrb[0].mxu0
        %v4993 = vpop.f32.mrb[0].mxu0
        %v4994 = vadd.f32 %v4890, %v4993
        %v4995 = vpop.f32.mrb[0].mxu0
        %4996 = vmatprep.mubr.bf16.mxu0 0
        %4997 = vmatmul.mubr.bf16.gmra.mrb[0].mxu0 %v4868
        %v4998 = vpop.f32.mrb[0].mxu0
        %v4999 = vadd.f32 %v4890, %v4998
        %v5000 = vpop.f32.mrb[0].mxu0
        %v5001 = vpop.f32.mrb[0].mxu0
        %v5002 = vadd.f32 %v4890, %v5001
        %v5003 = vpop.f32.mrb[0].mxu0
        %5004 = vdwg.mxu0
        %v5005 = vadd.f32 %v830, %v4975
        %v5006 = vadd.f32 %v831, %v4978
        %v5007 = vadd.f32 %v832, %v4983
        %v5008 = vadd.f32 %v833, %v4986
        %v5009 = vadd.f32 %v834, %v4991
        %v5010 = vadd.f32 %v835, %v4994
        %v5011 = vadd.f32 %v836, %v4999
        %v5012 = vadd.f32 %v837, %v5002
        %v5013 = vld [vmem:[%s684] sm:$0x1]
        %v5014 = vld [vmem:[%s692] sm:$0x1]
        %5015 = vadd.xlane.f32.xlu0 %v5005
        %v5016 = vpop.xlane.xlu0 %5015
        %5017 = vadd.xlane.f32.xlu0 %v5006
        %v5018 = vpop.xlane.xlu0 %5017
        %5019 = vadd.xlane.f32.xlu0 %v5007
        %v5020 = vpop.xlane.xlu0 %5019
        %5021 = vadd.xlane.f32.xlu0 %v5008
        %v5022 = vpop.xlane.xlu0 %5021
        %5023 = vadd.xlane.f32.xlu0 %v5009
        %v5024 = vpop.xlane.xlu0 %5023
        %5025 = vadd.xlane.f32.xlu0 %v5010
        %v5026 = vpop.xlane.xlu0 %5025
        %5027 = vadd.xlane.f32.xlu0 %v5011
        %v5028 = vpop.xlane.xlu0 %5027
        %5029 = vadd.xlane.f32.xlu0 %v5012
        %v5030 = vpop.xlane.xlu0 %5029
        %v5031 = vmul.f32 %v5016, %v856
        %v5032 = vmul.f32 %v5018, %v856
        %v5033 = vmul.f32 %v5020, %v856
        %v5034 = vmul.f32 %v5022, %v856
        %v5035 = vmul.f32 %v5024, %v856
        %v5036 = vmul.f32 %v5026, %v856
        %v5037 = vmul.f32 %v5028, %v856
        %v5038 = vmul.f32 %v5030, %v856
        %v5039 = vsub.f32 %v5005, %v5031
        %v5040 = vsub.f32 %v5006, %v5032
        %v5041 = vsub.f32 %v5007, %v5033
        %v5042 = vsub.f32 %v5008, %v5034
        %v5043 = vsub.f32 %v5009, %v5035
        %v5044 = vsub.f32 %v5010, %v5036
        %v5045 = vsub.f32 %v5011, %v5037
        %v5046 = vsub.f32 %v5012, %v5038
        %v5047 = vmul.f32 %v5039, %v5039
        %v5048 = vmul.f32 %v5040, %v5040
        %v5049 = vmul.f32 %v5041, %v5041
        %v5050 = vmul.f32 %v5042, %v5042
        %v5051 = vmul.f32 %v5043, %v5043
        %v5052 = vmul.f32 %v5044, %v5044
        %v5053 = vmul.f32 %v5045, %v5045
        %v5054 = vmul.f32 %v5046, %v5046
        %5055 = vadd.xlane.f32.xlu0 %v5047
        %v5056 = vpop.xlane.xlu0 %5055
        %5057 = vadd.xlane.f32.xlu0 %v5048
        %v5058 = vpop.xlane.xlu0 %5057
        %5059 = vadd.xlane.f32.xlu0 %v5049
        %v5060 = vpop.xlane.xlu0 %5059
        %5061 = vadd.xlane.f32.xlu0 %v5050
        %v5062 = vpop.xlane.xlu0 %5061
        %5063 = vadd.xlane.f32.xlu0 %v5051
        %v5064 = vpop.xlane.xlu0 %5063
        %5065 = vadd.xlane.f32.xlu0 %v5052
        %v5066 = vpop.xlane.xlu0 %5065
        %5067 = vadd.xlane.f32.xlu0 %v5053
        %v5068 = vpop.xlane.xlu0 %5067
        %5069 = vadd.xlane.f32.xlu0 %v5054
        %v5070 = vpop.xlane.xlu0 %5069
        %v5071 = vmul.f32 %v5056, %v856
        %v5072 = vmul.f32 %v5058, %v856
        %v5073 = vmul.f32 %v5060, %v856
        %v5074 = vmul.f32 %v5062, %v856
        %v5075 = vmul.f32 %v5064, %v856
        %v5076 = vmul.f32 %v5066, %v856
        %v5077 = vmul.f32 %v5068, %v856
        %v5078 = vmul.f32 %v5070, %v856
        %v5079 = vadd.f32 %v5071, 1e-05
        %v5080 = vadd.f32 %v5072, 1e-05
        %v5081 = vadd.f32 %v5073, 1e-05
        %v5082 = vadd.f32 %v5074, 1e-05
        %v5083 = vadd.f32 %v5075, 1e-05
        %v5084 = vadd.f32 %v5076, 1e-05
        %v5085 = vadd.f32 %v5077, 1e-05
        %v5086 = vadd.f32 %v5078, 1e-05
        %v5087 = vrsqrt.pop %v5079
        %v5088 = vrsqrt.pop %v5080
        %v5089 = vrsqrt.pop %v5081
        %v5090 = vrsqrt.pop %v5082
        %v5091 = vrsqrt.pop %v5083
        %v5092 = vrsqrt.pop %v5084
        %v5093 = vrsqrt.pop %v5085
        %v5094 = vrsqrt.pop %v5086
        %v5095 = vmul.f32 %v5039, %v5087
        %v5096 = vmul.f32 %v5040, %v5088
        %v5097 = vmul.f32 %v5041, %v5089
        %v5098 = vmul.f32 %v5042, %v5090
        %v5099 = vmul.f32 %v5043, %v5091
        %v5100 = vmul.f32 %v5044, %v5092
        %v5101 = vmul.f32 %v5045, %v5093
        %v5102 = vmul.f32 %v5046, %v5094
        %v5104 = vlaneseq
        %v5105 = vshrl.u32 %v5104, 7
        %v5106 = vsub.s32 0, %v5105
        %v5107 = vrot.slane %v5013, %v5106
        %v5109 = vmul.f32 %v5095, %v5107
        %v5110 = vmul.f32 %v5096, %v5107
        %v5111 = vmul.f32 %v5097, %v5107
        %v5112 = vmul.f32 %v5098, %v5107
        %v5113 = vmul.f32 %v5099, %v5107
        %v5114 = vmul.f32 %v5100, %v5107
        %v5115 = vmul.f32 %v5101, %v5107
        %v5116 = vmul.f32 %v5102, %v5107
        %v5118 = vlaneseq
        %v5119 = vshrl.u32 %v5118, 7
        %v5120 = vsub.s32 0, %v5119
        %v5121 = vrot.slane %v5014, %v5120
        %v5123 = vadd.f32 %v5109, %v5121
        %v5124 = vadd.f32 %v5110, %v5121
        %v5125 = vadd.f32 %v5111, %v5121
        %v5126 = vadd.f32 %v5112, %v5121
        %v5127 = vadd.f32 %v5113, %v5121
        %v5128 = vadd.f32 %v5114, %v5121
        %v5129 = vadd.f32 %v5115, %v5121
        %v5130 = vadd.f32 %v5116, %v5121
        %v5131 = vpack.c.bf16 %v5124, %v5123
        %v5132 = vpack.c.bf16 %v5126, %v5125
        %v5133 = vpack.c.bf16 %v5128, %v5127
        %v5134 = vpack.c.bf16 %v5130, %v5129
        %v5135 = vld [vmem:[%s701] sm:$0xff]
        %v5136 = vld [vmem:[%s701 + $0x8] sm:$0xff]
        %v5137 = vld [vmem:[%s701 + $0x10] sm:$0xff]
        %v5138 = vld [vmem:[%s701 + $0x18] sm:$0xff]
        %v5139 = vld [vmem:[%s701 + $0x20] sm:$0xff]
        %v5140 = vld [vmem:[%s701 + $0x28] sm:$0xff]
        %v5141 = vld [vmem:[%s701 + $0x30] sm:$0xff]
        %v5142 = vld [vmem:[%s701 + $0x38] sm:$0xff]
        %v5143 = vld [vmem:[%s701 + $0x40] sm:$0xff]
        %v5144 = vld [vmem:[%s701 + $0x48] sm:$0xff]
        %v5145 = vld [vmem:[%s701 + $0x50] sm:$0xff]
        %v5146 = vld [vmem:[%s701 + $0x58] sm:$0xff]
        %v5147 = vld [vmem:[%s701 + $0x60] sm:$0xff]
        %v5148 = vld [vmem:[%s701 + $0x68] sm:$0xff]
        %v5149 = vld [vmem:[%s701 + $0x70] sm:$0xff]
        %v5150 = vld [vmem:[%s701 + $0x78] sm:$0xff]
        %v5151 = vld [vmem:[%s710] sm:$0x3]
        %v5153 = vlaneseq
        %v5154 = vshrl.u32 %v5153, 7
        %v5155 = vsub.s32 0, %v5154
        %v5156 = vrot.slane %v5151, %v5155
        %v5157 = vlaneseq
        %v5158 = vshrl.u32 %v5157, 7
        %v5159 = vsub.s32 1, %v5158
        %v5160 = vrot.slane %v5151, %v5159
        %v5179 = vunpack.c.l.b16 %v5135
        %v5180 = vunpack.c.h.b16 %v5135
        %v5181 = vunpack.c.l.b16 %v5136
        %v5182 = vunpack.c.h.b16 %v5136
        %v5183 = vunpack.c.l.b16 %v5137
        %v5184 = vunpack.c.h.b16 %v5137
        %v5185 = vunpack.c.l.b16 %v5138
        %v5186 = vunpack.c.h.b16 %v5138
        %v5187 = vunpack.c.l.b16 %v5139
        %v5188 = vunpack.c.h.b16 %v5139
        %v5189 = vunpack.c.l.b16 %v5140
        %v5190 = vunpack.c.h.b16 %v5140
        %v5191 = vunpack.c.l.b16 %v5141
        %v5192 = vunpack.c.h.b16 %v5141
        %v5193 = vunpack.c.l.b16 %v5142
        %v5194 = vunpack.c.h.b16 %v5142
        %v5195 = vunpack.c.l.b16 %v5143
        %v5196 = vunpack.c.h.b16 %v5143
        %v5197 = vunpack.c.l.b16 %v5144
        %v5198 = vunpack.c.h.b16 %v5144
        %v5199 = vunpack.c.l.b16 %v5145
        %v5200 = vunpack.c.h.b16 %v5145
        %v5201 = vunpack.c.l.b16 %v5146
        %v5202 = vunpack.c.h.b16 %v5146
        %v5203 = vunpack.c.l.b16 %v5147
        %v5204 = vunpack.c.h.b16 %v5147
        %v5205 = vunpack.c.l.b16 %v5148
        %v5206 = vunpack.c.h.b16 %v5148
        %v5207 = vunpack.c.l.b16 %v5149
        %v5208 = vunpack.c.h.b16 %v5149
        %v5209 = vunpack.c.l.b16 %v5150
        %v5210 = vunpack.c.h.b16 %v5150
        %v5211 = vpack.c.b16 %v5181, %v5179
        %v5212 = vpack.c.b16 %v5182, %v5180
        %v5213 = vpack.c.b16 %v5185, %v5183
        %v5214 = vpack.c.b16 %v5186, %v5184
        %v5215 = vpack.c.b16 %v5189, %v5187
        %v5216 = vpack.c.b16 %v5190, %v5188
        %v5217 = vpack.c.b16 %v5193, %v5191
        %v5218 = vpack.c.b16 %v5194, %v5192
        %v5219 = vpack.c.b16 %v5197, %v5195
        %v5220 = vpack.c.b16 %v5198, %v5196
        %v5221 = vpack.c.b16 %v5201, %v5199
        %v5222 = vpack.c.b16 %v5202, %v5200
        %v5223 = vpack.c.b16 %v5205, %v5203
        %v5224 = vpack.c.b16 %v5206, %v5204
        %v5225 = vpack.c.b16 %v5209, %v5207
        %v5226 = vpack.c.b16 %v5210, %v5208
        %5243 = vmatprep.subr.bf16.mxu0 %v5212
        %5244 = vmatpush1.bf16.msra.mxu0 %v5211
        %5245 = vmatprep.subr.bf16.mxu0 %v5214
        %5246 = vmatpush1.bf16.msra.mxu0 %v5213
        %5247 = vmatprep.subr.bf16.mxu0 %v5216
        %5248 = vmatpush1.bf16.msra.mxu0 %v5215
        %5249 = vmatprep.subr.bf16.mxu0 %v5218
        %5250 = vmatpush1.bf16.msra.mxu0 %v5217
        %5251 = vmatprep.subr.bf16.mxu0 %v5220
        %5252 = vmatpush1.bf16.msra.mxu0 %v5219
        %5253 = vmatprep.subr.bf16.mxu0 %v5222
        %5254 = vmatpush1.bf16.msra.mxu0 %v5221
        %5255 = vmatprep.subr.bf16.mxu0 %v5224
        %5256 = vmatpush1.bf16.msra.mxu0 %v5223
        %5257 = vmatprep.subr.bf16.mxu0 %v5226
        %5258 = vmatpush1.bf16.msra.mxu0 %v5225
        %5259 = vmatprep.subr.bf16.mxu0 0
        %5260 = vmatpush1.bf16.msra.mxu0 0
        %5261 = vmatprep.subr.bf16.mxu0 0
        %5262 = vmatpush1.bf16.msra.mxu0 0
        %5263 = vmatprep.subr.bf16.mxu0 0
        %5264 = vmatpush1.bf16.msra.mxu0 0
        %5265 = vmatprep.subr.bf16.mxu0 0
        %5266 = vmatpush1.bf16.msra.mxu0 0
        %5267 = vmatprep.subr.bf16.mxu0 0
        %5268 = vmatpush1.bf16.msra.mxu0 0
        %5269 = vmatprep.subr.bf16.mxu0 0
        %5270 = vmatpush1.bf16.msra.mxu0 0
        %5271 = vmatprep.subr.bf16.mxu0 0
        %5272 = vmatpush1.bf16.msra.mxu0 0
        %5273 = vmatprep.subr.bf16.mxu0 0
        %5274 = vmatpush1.bf16.msra.mxu0 0
        %5275 = vmatprep.mubr.bf16.mxu0 0
        %5276 = vmatmul.mubr.bf16.gmra.mrb[0].mxu0 %v5131
        %v5277 = vpop.f32.mrb[0].mxu0
        %v5278 = vadd.f32 %v5156, %v5277
        %v5279 = vpop.f32.mrb[0].mxu0
        %v5280 = vadd.f32 %v5160, %v5279
        %v5281 = vpop.f32.mrb[0].mxu0
        %v5282 = vadd.f32 %v5156, %v5281
        %v5283 = vpop.f32.mrb[0].mxu0
        %v5284 = vadd.f32 %v5160, %v5283
        %5285 = vmatprep.mubr.bf16.mxu0 0
        %5286 = vmatmul.mubr.bf16.gmra.mrb[0].mxu0 %v5132
        %v5287 = vpop.f32.mrb[0].mxu0
        %v5288 = vadd.f32 %v5156, %v5287
        %v5289 = vpop.f32.mrb[0].mxu0
        %v5290 = vadd.f32 %v5160, %v5289
        %v5291 = vpop.f32.mrb[0].mxu0
        %v5292 = vadd.f32 %v5156, %v5291
        %v5293 = vpop.f32.mrb[0].mxu0
        %v5294 = vadd.f32 %v5160, %v5293
        %5295 = vmatprep.mubr.bf16.mxu0 0
        %5296 = vmatmul.mubr.bf16.gmra.mrb[0].mxu0 %v5133
        %v5297 = vpop.f32.mrb[0].mxu0
        %v5298 = vadd.f32 %v5156, %v5297
        %v5299 = vpop.f32.mrb[0].mxu0
        %v5300 = vadd.f32 %v5160, %v5299
        %v5301 = vpop.f32.mrb[0].mxu0
        %v5302 = vadd.f32 %v5156, %v5301
        %v5303 = vpop.f32.mrb[0].mxu0
        %v5304 = vadd.f32 %v5160, %v5303
        %5305 = vmatprep.mubr.bf16.mxu0 0
        %5306 = vmatmul.mubr.bf16.gmra.mrb[0].mxu0 %v5134
        %v5307 = vpop.f32.mrb[0].mxu0
        %v5308 = vadd.f32 %v5156, %v5307
        %v5309 = vpop.f32.mrb[0].mxu0
        %v5310 = vadd.f32 %v5160, %v5309
        %v5311 = vpop.f32.mrb[0].mxu0
        %v5312 = vadd.f32 %v5156, %v5311
        %v5313 = vpop.f32.mrb[0].mxu0
        %v5314 = vadd.f32 %v5160, %v5313
        %5315 = vdwg.mxu0
        %v5316 = vxor.u32 %v5278, 2147483648
        %v5317 = vxor.u32 %v5280, 2147483648
        %v5318 = vxor.u32 %v5282, 2147483648
        %v5319 = vxor.u32 %v5284, 2147483648
        %v5320 = vxor.u32 %v5288, 2147483648
        %v5321 = vxor.u32 %v5290, 2147483648
        %v5322 = vxor.u32 %v5292, 2147483648
        %v5323 = vxor.u32 %v5294, 2147483648
        %v5324 = vxor.u32 %v5298, 2147483648
        %v5325 = vxor.u32 %v5300, 2147483648
        %v5326 = vxor.u32 %v5302, 2147483648
        %v5327 = vxor.u32 %v5304, 2147483648
        %v5328 = vxor.u32 %v5308, 2147483648
        %v5329 = vxor.u32 %v5310, 2147483648
        %v5330 = vxor.u32 %v5312, 2147483648
        %v5331 = vxor.u32 %v5314, 2147483648
        %v5332 = vmul.f32 %v5316, 1.442695
        %v5333 = vpow.pop %v5332
        %v5334 = vmul.f32 %v5317, 1.442695
        %v5335 = vpow.pop %v5334
        %v5336 = vmul.f32 %v5318, 1.442695
        %v5337 = vpow.pop %v5336
        %v5338 = vmul.f32 %v5319, 1.442695
        %v5339 = vpow.pop %v5338
        %v5340 = vmul.f32 %v5320, 1.442695
        %v5341 = vpow.pop %v5340
        %v5342 = vmul.f32 %v5321, 1.442695
        %v5343 = vpow.pop %v5342
        %v5344 = vmul.f32 %v5322, 1.442695
        %v5345 = vpow.pop %v5344
        %v5346 = vmul.f32 %v5323, 1.442695
        %v5347 = vpow.pop %v5346
        %v5348 = vmul.f32 %v5324, 1.442695
        %v5349 = vpow.pop %v5348
        %v5350 = vmul.f32 %v5325, 1.442695
        %v5351 = vpow.pop %v5350
        %v5352 = vmul.f32 %v5326, 1.442695
        %v5353 = vpow.pop %v5352
        %v5354 = vmul.f32 %v5327, 1.442695
        %v5355 = vpow.pop %v5354
        %v5356 = vmul.f32 %v5328, 1.442695
        %v5357 = vpow.pop %v5356
        %v5358 = vmul.f32 %v5329, 1.442695
        %v5359 = vpow.pop %v5358
        %v5360 = vmul.f32 %v5330, 1.442695
        %v5361 = vpow.pop %v5360
        %v5362 = vmul.f32 %v5331, 1.442695
        %v5363 = vpow.pop %v5362
        %v5364 = vadd.f32 %v5333, 1.0
        %v5365 = vadd.f32 %v5335, 1.0
        %v5366 = vadd.f32 %v5337, 1.0
        %v5367 = vadd.f32 %v5339, 1.0
        %v5368 = vadd.f32 %v5341, 1.0
        %v5369 = vadd.f32 %v5343, 1.0
        %v5370 = vadd.f32 %v5345, 1.0
        %v5371 = vadd.f32 %v5347, 1.0
        %v5372 = vadd.f32 %v5349, 1.0
        %v5373 = vadd.f32 %v5351, 1.0
        %v5374 = vadd.f32 %v5353, 1.0
        %v5375 = vadd.f32 %v5355, 1.0
        %v5376 = vadd.f32 %v5357, 1.0
        %v5377 = vadd.f32 %v5359, 1.0
        %v5378 = vadd.f32 %v5361, 1.0
        %v5379 = vadd.f32 %v5363, 1.0
        %v5380 = vrcp.pop %v5364
        %v5381 = vmul.f32 1.0, %v5380
        %v5382 = vrcp.pop %v5365
        %v5383 = vmul.f32 1.0, %v5382
        %v5384 = vrcp.pop %v5366
        %v5385 = vmul.f32 1.0, %v5384
        %v5386 = vrcp.pop %v5367
        %v5387 = vmul.f32 1.0, %v5386
        %v5388 = vrcp.pop %v5368
        %v5389 = vmul.f32 1.0, %v5388
        %v5390 = vrcp.pop %v5369
        %v5391 = vmul.f32 1.0, %v5390
        %v5392 = vrcp.pop %v5370
        %v5393 = vmul.f32 1.0, %v5392
        %v5394 = vrcp.pop %v5371
        %v5395 = vmul.f32 1.0, %v5394
        %v5396 = vrcp.pop %v5372
        %v5397 = vmul.f32 1.0, %v5396
        %v5398 = vrcp.pop %v5373
        %v5399 = vmul.f32 1.0, %v5398
        %v5400 = vrcp.pop %v5374
        %v5401 = vmul.f32 1.0, %v5400
        %v5402 = vrcp.pop %v5375
        %v5403 = vmul.f32 1.0, %v5402
        %v5404 = vrcp.pop %v5376
        %v5405 = vmul.f32 1.0, %v5404
        %v5406 = vrcp.pop %v5377
        %v5407 = vmul.f32 1.0, %v5406
        %v5408 = vrcp.pop %v5378
        %v5409 = vmul.f32 1.0, %v5408
        %v5410 = vrcp.pop %v5379
        %v5411 = vmul.f32 1.0, %v5410
        %v5412 = vmul.f32 %v5278, %v5381
        %v5413 = vmul.f32 %v5280, %v5383
        %v5414 = vmul.f32 %v5282, %v5385
        %v5415 = vmul.f32 %v5284, %v5387
        %v5416 = vmul.f32 %v5288, %v5389
        %v5417 = vmul.f32 %v5290, %v5391
        %v5418 = vmul.f32 %v5292, %v5393
        %v5419 = vmul.f32 %v5294, %v5395
        %v5420 = vmul.f32 %v5298, %v5397
        %v5421 = vmul.f32 %v5300, %v5399
        %v5422 = vmul.f32 %v5302, %v5401
        %v5423 = vmul.f32 %v5304, %v5403
        %v5424 = vmul.f32 %v5308, %v5405
        %v5425 = vmul.f32 %v5310, %v5407
        %v5426 = vmul.f32 %v5312, %v5409
        %v5427 = vmul.f32 %v5314, %v5411
        %v5428 = vpack.c.bf16 %v5414, %v5412
        %v5429 = vpack.c.bf16 %v5415, %v5413
        %v5430 = vpack.c.bf16 %v5418, %v5416
        %v5431 = vpack.c.bf16 %v5419, %v5417
        %v5432 = vpack.c.bf16 %v5422, %v5420
        %v5433 = vpack.c.bf16 %v5423, %v5421
        %v5434 = vpack.c.bf16 %v5426, %v5424
        %v5435 = vpack.c.bf16 %v5427, %v5425
        %v5436 = vld [vmem:[%s719] sm:$0xf]
        %v5437 = vld [vmem:[%s719 + $0x4] sm:$0xf]
        %v5438 = vld [vmem:[%s719 + $0x8] sm:$0xf]
        %v5439 = vld [vmem:[%s719 + $0xc] sm:$0xf]
        %v5440 = vld [vmem:[%s719 + $0x10] sm:$0xf]
        %v5441 = vld [vmem:[%s719 + $0x14] sm:$0xf]
        %v5442 = vld [vmem:[%s719 + $0x18] sm:$0xf]
        %v5443 = vld [vmem:[%s719 + $0x1c] sm:$0xf]
        %v5444 = vld [vmem:[%s719 + $0x20] sm:$0xf]
        %v5445 = vld [vmem:[%s719 + $0x24] sm:$0xf]
        %v5446 = vld [vmem:[%s719 + $0x28] sm:$0xf]
        %v5447 = vld [vmem:[%s719 + $0x2c] sm:$0xf]
        %v5448 = vld [vmem:[%s719 + $0x30] sm:$0xf]
        %v5449 = vld [vmem:[%s719 + $0x34] sm:$0xf]
        %v5450 = vld [vmem:[%s719 + $0x38] sm:$0xf]
        %v5451 = vld [vmem:[%s719 + $0x3c] sm:$0xf]
        %v5452 = vld [vmem:[%s719 + $0x40] sm:$0xf]
        %v5453 = vld [vmem:[%s719 + $0x44] sm:$0xf]
        %v5454 = vld [vmem:[%s719 + $0x48] sm:$0xf]
        %v5455 = vld [vmem:[%s719 + $0x4c] sm:$0xf]
        %v5456 = vld [vmem:[%s719 + $0x50] sm:$0xf]
        %v5457 = vld [vmem:[%s719 + $0x54] sm:$0xf]
        %v5458 = vld [vmem:[%s719 + $0x58] sm:$0xf]
        %v5459 = vld [vmem:[%s719 + $0x5c] sm:$0xf]
        %v5460 = vld [vmem:[%s719 + $0x60] sm:$0xf]
        %v5461 = vld [vmem:[%s719 + $0x64] sm:$0xf]
        %v5462 = vld [vmem:[%s719 + $0x68] sm:$0xf]
        %v5463 = vld [vmem:[%s719 + $0x6c] sm:$0xf]
        %v5464 = vld [vmem:[%s719 + $0x70] sm:$0xf]
        %v5465 = vld [vmem:[%s719 + $0x74] sm:$0xf]
        %v5466 = vld [vmem:[%s719 + $0x78] sm:$0xf]
        %v5467 = vld [vmem:[%s719 + $0x7c] sm:$0xf]
        %v5468 = vld [vmem:[%s727] sm:$0x1]
        %v5470 = vlaneseq
        %v5471 = vshrl.u32 %v5470, 7
        %v5472 = vsub.s32 0, %v5471
        %v5473 = vrot.slane %v5468, %v5472
        %v5507 = vunpack.c.l.b16 %v5436
        %v5508 = vunpack.c.l.b16 %v5437
        %v5509 = vunpack.c.l.b16 %v5438
        %v5510 = vunpack.c.l.b16 %v5439
        %v5511 = vunpack.c.l.b16 %v5440
        %v5512 = vunpack.c.l.b16 %v5441
        %v5513 = vunpack.c.l.b16 %v5442
        %v5514 = vunpack.c.l.b16 %v5443
        %v5515 = vunpack.c.l.b16 %v5444
        %v5516 = vunpack.c.l.b16 %v5445
        %v5517 = vunpack.c.l.b16 %v5446
        %v5518 = vunpack.c.l.b16 %v5447
        %v5519 = vunpack.c.l.b16 %v5448
        %v5520 = vunpack.c.l.b16 %v5449
        %v5521 = vunpack.c.l.b16 %v5450
        %v5522 = vunpack.c.l.b16 %v5451
        %v5523 = vunpack.c.l.b16 %v5452
        %v5524 = vunpack.c.l.b16 %v5453
        %v5525 = vunpack.c.l.b16 %v5454
        %v5526 = vunpack.c.l.b16 %v5455
        %v5527 = vunpack.c.l.b16 %v5456
        %v5528 = vunpack.c.l.b16 %v5457
        %v5529 = vunpack.c.l.b16 %v5458
        %v5530 = vunpack.c.l.b16 %v5459
        %v5531 = vunpack.c.l.b16 %v5460
        %v5532 = vunpack.c.l.b16 %v5461
        %v5533 = vunpack.c.l.b16 %v5462
        %v5534 = vunpack.c.l.b16 %v5463
        %v5535 = vunpack.c.l.b16 %v5464
        %v5536 = vunpack.c.l.b16 %v5465
        %v5537 = vunpack.c.l.b16 %v5466
        %v5538 = vunpack.c.l.b16 %v5467
        %v5539 = vpack.c.b16 %v5508, %v5507
        %v5540 = vpack.c.b16 %v5510, %v5509
        %v5541 = vpack.c.b16 %v5512, %v5511
        %v5542 = vpack.c.b16 %v5514, %v5513
        %v5543 = vpack.c.b16 %v5516, %v5515
        %v5544 = vpack.c.b16 %v5518, %v5517
        %v5545 = vpack.c.b16 %v5520, %v5519
        %v5546 = vpack.c.b16 %v5522, %v5521
        %v5547 = vpack.c.b16 %v5524, %v5523
        %v5548 = vpack.c.b16 %v5526, %v5525
        %v5549 = vpack.c.b16 %v5528, %v5527
        %v5550 = vpack.c.b16 %v5530, %v5529
        %v5551 = vpack.c.b16 %v5532, %v5531
        %v5552 = vpack.c.b16 %v5534, %v5533
        %v5553 = vpack.c.b16 %v5536, %v5535
        %v5554 = vpack.c.b16 %v5538, %v5537
        %5571 = vmatprep.subr.bf16.mxu0 0
        %5572 = vmatpush1.bf16.msra.mxu0 %v5539
        %5573 = vmatprep.subr.bf16.mxu0 0
        %5574 = vmatpush1.bf16.msra.mxu0 %v5540
        %5575 = vmatprep.subr.bf16.mxu0 0
        %5576 = vmatpush1.bf16.msra.mxu0 %v5541
        %5577 = vmatprep.subr.bf16.mxu0 0
        %5578 = vmatpush1.bf16.msra.mxu0 %v5542
        %5579 = vmatprep.subr.bf16.mxu0 0
        %5580 = vmatpush1.bf16.msra.mxu0 %v5543
        %5581 = vmatprep.subr.bf16.mxu0 0
        %5582 = vmatpush1.bf16.msra.mxu0 %v5544
        %5583 = vmatprep.subr.bf16.mxu0 0
        %5584 = vmatpush1.bf16.msra.mxu0 %v5545
        %5585 = vmatprep.subr.bf16.mxu0 0
        %5586 = vmatpush1.bf16.msra.mxu0 %v5546
        %5587 = vmatprep.subr.bf16.mxu0 0
        %5588 = vmatpush1.bf16.msra.mxu0 %v5547
        %5589 = vmatprep.subr.bf16.mxu0 0
        %5590 = vmatpush1.bf16.msra.mxu0 %v5548
        %5591 = vmatprep.subr.bf16.mxu0 0
        %5592 = vmatpush1.bf16.msra.mxu0 %v5549
        %5593 = vmatprep.subr.bf16.mxu0 0
        %5594 = vmatpush1.bf16.msra.mxu0 %v5550
        %5595 = vmatprep.subr.bf16.mxu0 0
        %5596 = vmatpush1.bf16.msra.mxu0 %v5551
        %5597 = vmatprep.subr.bf16.mxu0 0
        %5598 = vmatpush1.bf16.msra.mxu0 %v5552
        %5599 = vmatprep.subr.bf16.mxu0 0
        %5600 = vmatpush1.bf16.msra.mxu0 %v5553
        %5601 = vmatprep.subr.bf16.mxu0 0
        %5602 = vmatpush1.bf16.msra.mxu0 %v5554
        %5603 = vmatprep.mubr.bf16.mxu0 %v5429
        %5604 = vmatmul.mubr.bf16.gmra.mrb[0].mxu0 %v5428
        %v5605 = vpop.f32.mrb[0].mxu0
        %v5606 = vadd.f32 %v5473, %v5605
        %v5607 = vpop.f32.mrb[0].mxu0
        %v5608 = vpop.f32.mrb[0].mxu0
        %v5609 = vadd.f32 %v5473, %v5608
        %v5610 = vpop.f32.mrb[0].mxu0
        %5611 = vmatprep.mubr.bf16.mxu0 %v5431
        %5612 = vmatmul.mubr.bf16.gmra.mrb[0].mxu0 %v5430
        %v5613 = vpop.f32.mrb[0].mxu0
        %v5614 = vadd.f32 %v5473, %v5613
        %v5615 = vpop.f32.mrb[0].mxu0
        %v5616 = vpop.f32.mrb[0].mxu0
        %v5617 = vadd.f32 %v5473, %v5616
        %v5618 = vpop.f32.mrb[0].mxu0
        %5619 = vmatprep.mubr.bf16.mxu0 %v5433
        %5620 = vmatmul.mubr.bf16.gmra.mrb[0].mxu0 %v5432
        %v5621 = vpop.f32.mrb[0].mxu0
        %v5622 = vadd.f32 %v5473, %v5621
        %v5623 = vpop.f32.mrb[0].mxu0
        %v5624 = vpop.f32.mrb[0].mxu0
        %v5625 = vadd.f32 %v5473, %v5624
        %v5626 = vpop.f32.mrb[0].mxu0
        %5627 = vmatprep.mubr.bf16.mxu0 %v5435
        %5628 = vmatmul.mubr.bf16.gmra.mrb[0].mxu0 %v5434
        %v5629 = vpop.f32.mrb[0].mxu0
        %v5630 = vadd.f32 %v5473, %v5629
        %v5631 = vpop.f32.mrb[0].mxu0
        %v5632 = vpop.f32.mrb[0].mxu0
        %v5633 = vadd.f32 %v5473, %v5632
        %v5634 = vpop.f32.mrb[0].mxu0
        %5635 = vdwg.mxu0
        %v5636 = vadd.f32 %v5005, %v5606
        %v5637 = vadd.f32 %v5006, %v5609
        %v5638 = vadd.f32 %v5007, %v5614
        %v5639 = vadd.f32 %v5008, %v5617
        %v5640 = vadd.f32 %v5009, %v5622
        %v5641 = vadd.f32 %v5010, %v5625
        %v5642 = vadd.f32 %v5011, %v5630
        %v5643 = vadd.f32 %v5012, %v5633
        %5644 = vst [vmem:[#allocation23] sm:$0xff] %v5636
        %5645 = vst [vmem:[#allocation23 + $0x8] sm:$0xff] %v5637
        %5646 = vst [vmem:[#allocation23 + $0x10] sm:$0xff] %v5638
        %5647 = vst [vmem:[#allocation23 + $0x18] sm:$0xff] %v5639
        %5648 = vst [vmem:[#allocation23 + $0x20] sm:$0xff] %v5640
        %5649 = vst [vmem:[#allocation23 + $0x28] sm:$0xff] %v5641
        %5650 = vst [vmem:[#allocation23 + $0x30] sm:$0xff] %v5642
        %5651 = vst [vmem:[#allocation23 + $0x38] sm:$0xff] %v5643
        // Predicated region
        $region121: #{tpu_custom_call.1} parent=67 // pred_check
          %p5652 = pneg %p385
        $region122: #{tpu_custom_call.1} parent=67 // pred_check_branch
          %5654 = sbr.rel (%p5652) target = $region124
        $region123: #{tpu_custom_call.1} parent=67 // pred_region
          %s5655 = smul.u32 8, %s47
          %s5657 = ssub.s32 1024, 1024
          %5658 = vsyncadd [#allocation5], %s5657
          %s5659 = smul.addr %s5655, 128
          %s5660 = scalar_lea.hbm %s12, %s5659
          %s5661 = sshll.u32 [#allocation23], 4
          %s5662 = int_to_ptr.vmem [resolvable:$true] %s5661
          %5667 = dma.vmem_to_hbm [thread:$0]  %s5662, 1024, %s5660, [#allocation5], 128, 128, 8
        $region124: #{tpu_custom_call.1} parent=67 // pred_fallthru
          _
        // Predicated region
        $region125: #{tpu_custom_call.1} parent=67 // pred_check
          %p5668 = pneg %p385
        $region126: #{tpu_custom_call.1} parent=67 // pred_check_branch
          %5670 = sbr.rel (%p5668) target = $region128
        $region127: #{tpu_custom_call.1} parent=67 // pred_region
          %5671 = dma.done [#allocation5], 1024
        $region128: #{tpu_custom_call.1} parent=67 // pred_fallthru
          _
      $region68: #{tpu_custom_call.1} parent=5 // pred_fallthru
        _
      %p5672 = scmp.le.s32.totalorder 2, %s38
      // Predicated region
      $region129: #{tpu_custom_call.1} parent=5 // pred_check
        %p5673 = pneg %p5672
      $region130: #{tpu_custom_call.1} parent=5 // pred_check_branch
        %5675 = sbr.rel (%p5673) target = $region132
      $region131: #{tpu_custom_call.1} parent=5 // pred_region
        %s5676 = ssub.s32 %s38, 2
      $region132: #{tpu_custom_call.1} parent=5 // pred_fallthru
        _
    $region6: #{tpu_custom_call.1} parent=1 // loop_footer
      %s42 = sadd.s32 1, %s38
    $region7: #{tpu_custom_call.1} parent=1 // loop_footer_branch
      %37 = sbr.rel target = $region3
    $region8: #{tpu_custom_call.1} parent=1 // loop_exit
      _
    %5677 = vsyncpa [#allocation4], 1
    %s5678 = scalar_lea.sflag [#allocation4], 1
    %5679 = vsyncpa %s5678, 1
    %5680 = vsyncpa [#allocation7], 1
    %s5681 = scalar_lea.sflag [#allocation7], 1
    %5682 = vsyncpa %s5681, 1
    %5683 = vsyncpa [#allocation10], 1
    %s5684 = scalar_lea.sflag [#allocation10], 1
    %5685 = vsyncpa %s5684, 1
    %5686 = vsyncpa [#allocation13], 1
    %s5687 = scalar_lea.sflag [#allocation13], 1
    %5688 = vsyncpa %s5687, 1
    %5689 = vsyncpa [#allocation16], 1
    %s5690 = scalar_lea.sflag [#allocation16], 1
    %5691 = vsyncpa %s5690, 1
    %5692 = vsyncpa [#allocation19], 1
    %s5693 = scalar_lea.sflag [#allocation19], 1
    %5694 = vsyncpa %s5693, 1
    %5695 = vsyncpa [#allocation22], 1
    %s5696 = scalar_lea.sflag [#allocation22], 1
    %5697 = vsyncpa %s5696, 1
    %5698 = vsyncpa [#allocation5], 1
    %s5699 = scalar_lea.sflag [#allocation5], 1
    %5700 = vsyncpa %s5699, 1

</llo_original>
